<compile_context>
chip_gen: v7x
topology: tpu7x:2x2x1
jax: 0.10.0
libtpu: 0.0.40
codegen_flags: <defaults>
</compile_context>

<pallas_src>
import functools
import math

import jax
import jax.numpy as jnp
from jax import lax
from jax.experimental import pallas as pl
from jax.experimental.pallas import tpu as pltpu

_EPS = 1e-5  # torch.nn.LayerNorm default


def _sigmoid(v):
    return 1.0 / (1.0 + jnp.exp(-v))


def _softplus(v):
    safe = jnp.minimum(v, 20.0)
    return jnp.where(v > 20.0, v, jnp.log(1.0 + jnp.exp(safe)))


def _layernorm(v, w, b):
    mu = jnp.mean(v, axis=-1, keepdims=True)
    var = jnp.mean((v - mu) ** 2, axis=-1, keepdims=True)
    return (v - mu) * lax.rsqrt(var + _EPS) * w + b


# --------------------------------------------------------------------------
# Pallas kernel: one batch element per grid step.
# --------------------------------------------------------------------------
def mamba_kernel(x_ref, ln1w_ref, ln1b_ref, win_ref, bin_ref,
                 wssm_ref, bssm_ref, dbias_ref, a_ref, ds_ref, gamma_ref,
                 ln2w_ref, ln2b_ref, wo_ref, bo_ref,
                 out_ref,
                 delta_s, du_s, b_s, c_s, acc_s,
                 *, chunk):
    x = x_ref[0]                                 # (L, C)
    L, C = x.shape
    A = a_ref[...]                               # (Dst, C) == (-exp(As_log)).T
    Dst = A.shape[0]
    R = gamma_ref.shape[0]
    U = chunk
    n_chunks = L // U

    # ---- in_norm + fused in_proj (x-branch | z-gate) + SiLU ----------------
    xn = _layernorm(x, ln1w_ref[...], ln1b_ref[...])
    xz = jnp.dot(xn, win_ref[...], preferred_element_type=jnp.float32) + bin_ref[...]
    xs = xz[:, :C]
    xs = xs * _sigmoid(xs)
    z = xz[:, C:]
    z = z * _sigmoid(z)

    # ---- fused ssm_proj -> delta | B | C -----------------------------------
    ssm = jnp.dot(xs, wssm_ref[...], preferred_element_type=jnp.float32) + bssm_ref[...]
    delta = _softplus(ssm[:, :C] + dbias_ref[...])          # (L, C)

    # Small per-step sources only (no (L, Dst, C) tables).
    delta_s[...] = delta                                     # (L, C)
    du_s[...] = delta * xs                                   # (L, C)
    b_s[...] = ssm[:, C:C + Dst]                             # (L, Dst)
    c_s[...] = ssm[:, C + Dst:C + 2 * Dst]                   # (L, Dst)

    gam = gamma_ref[...]                                     # (R, C)
    gsum = jnp.sum(gam, axis=0, keepdims=True)               # (1, C)
    # D*u skip term is r-independent -> fold (weighted by sum_r gamma) into init.
    acc_s[...] = gsum * ds_ref[...] * xs                     # (L, C)

    # ---- selective scan over the R-times repeated sequence -----------------
    h = jnp.zeros((Dst, C), jnp.float32)                     # state stays in vregs
    for r in range(R):                                       # static unroll (extend_ratio)
        g = gam[r:r + 1, :]                                  # (1, C)

        def chunk_body(ci, h_carry, g=g):
            base = pl.multiple_of(ci * U, U)
            d_ch = delta_s[pl.ds(base, U), :]                # (U, C)
            du_ch = du_s[pl.ds(base, U), :]                  # (U, C)
            b_ch = b_s[pl.ds(base, U), :]                    # (U, Dst)
            c_ch = c_s[pl.ds(base, U), :]                    # (U, Dst)

            # Per-chunk operands (values, not scratch): EUP exp + VPU broadcasts.
            dA = jnp.exp(d_ch[:, None, :] * A[None, :, :])   # (U, Dst, C)
            dBu = du_ch[:, None, :] * b_ch[:, :, None]       # (U, Dst, C)

            hh = h_carry
            ys = []
            for j in range(U):                               # static 8-step unroll
                hh = dA[j] * hh + dBu[j]                     # (Dst, C)
                # C-weighted reduce over the state dim as a tiny MXU matmul.
                ys.append(jnp.dot(c_ch[j:j + 1, :], hh,
                                  preferred_element_type=jnp.float32))  # (1, C)
            y_ch = jnp.concatenate(ys, axis=0)               # (U, C) dense tile
            acc_s[pl.ds(base, U), :] = acc_s[pl.ds(base, U), :] + g * y_ch
            return hh

        h = lax.fori_loop(0, n_chunks, chunk_body, h)

    # ---- out_norm, gate with z, out_proj, residual --------------------------
    yn = _layernorm(acc_s[...], ln2w_ref[...], ln2b_ref[...])
    o = jnp.dot(z * yn, wo_ref[...], preferred_element_type=jnp.float32) + bo_ref[...]
    out_ref[0] = x_ref[0] + o


# --------------------------------------------------------------------------
# Wrapper
# --------------------------------------------------------------------------
_PARAM_ORDER = ['ln1_w', 'ln1_b', 'W_in', 'b_in', 'W_ssm', 'b_ssm',
                'dbias', 'A_T', 'Ds', 'gamma', 'ln2_w', 'ln2_b', 'W_out', 'b_out']


def mamba_forward(x_flat, batch_size, params):
    """x_flat: (B*L, C) float32 -> (B*L, C) float32 (no `split` path)."""
    BL, C = x_flat.shape
    B = batch_size
    L = BL // B
    Dst = params['A_T'].shape[0]
    x = x_flat.reshape(B, L, C).astype(jnp.float32)

    # scan chunk size: largest of {8,4,2,1} dividing L
    U = max(u for u in (8, 4, 2, 1) if L % u == 0)

    p_args = [params[k] for k in _PARAM_ORDER]

    def full_spec(arr):
        nd = arr.ndim
        return pl.BlockSpec(tuple(arr.shape), lambda b, _nd=nd: (0,) * _nd)

    in_specs = [pl.BlockSpec((1, L, C), lambda b: (b, 0, 0))] + [full_spec(a) for a in p_args]
    out_spec = pl.BlockSpec((1, L, C), lambda b: (b, 0, 0))

    kernel = functools.partial(mamba_kernel, chunk=U)

    # TODO(synk): for long L, tile the L axis on the grid (carry h/acc across
    #             chunks) to bound VMEM independent of sequence length.
    out = pl.pallas_call(
        kernel,
        out_shape=jax.ShapeDtypeStruct((B, L, C), jnp.float32),
        grid_spec=pltpu.PrefetchScalarGridSpec(
            num_scalar_prefetch=0,
            grid=(B,),
            in_specs=in_specs,
            out_specs=out_spec,
            scratch_shapes=[
                pltpu.VMEM((L, C), jnp.float32),     # delta
                pltpu.VMEM((L, C), jnp.float32),     # delta * u
                pltpu.VMEM((L, Dst), jnp.float32),   # B sequence
                pltpu.VMEM((L, Dst), jnp.float32),   # C sequence
                pltpu.VMEM((L, C), jnp.float32),     # gamma-weighted accumulator
            ]),
        compiler_params=pltpu.CompilerParams(
            dimension_semantics=("parallel",)),      # batch elems independent (megacore)
    )(x, *p_args)
    return out.reshape(BL, C)


# --------------------------------------------------------------------------
# Deterministic parameter init (shapes follow Mamba.__init__, fused weights)
# --------------------------------------------------------------------------
def init_params(key, C, Dst, R, dt_min=0.001, dt_max=0.1, dt_init_floor=1e-4):
    ks = jax.random.split(key, 9)
    dt_init_std = C ** (-0.5)

    # in_proj: Linear(C, 2C) kept fused; first half -> x-branch, second -> z.
    W_in = jax.random.normal(ks[0], (C, 2 * C), jnp.float32) * 0.05
    b_in = jax.random.normal(ks[1], (1, 2 * C), jnp.float32) * 0.01

    # ssm_proj: Linear(C, C + 2*Dst) kept fused (dt | B | C). bias zero-init.
    W_dt = jax.random.uniform(ks[2], (C, C), jnp.float32, -dt_init_std, dt_init_std)
    W_B = jax.random.normal(ks[3], (C, Dst), jnp.float32) * 0.1
    W_C = jax.random.normal(ks[4], (C, Dst), jnp.float32) * 0.1
    W_ssm = jnp.concatenate([W_dt, W_B, W_C], axis=1)
    b_ssm = jnp.zeros((1, C + 2 * Dst), jnp.float32)

    # ssm_proj_bias = inv_dt (same formula as the PyTorch init)
    dt = jnp.exp(jax.random.uniform(ks[5], (C,), jnp.float32)
                 * (math.log(dt_max) - math.log(dt_min)) + math.log(dt_min))
    dt = jnp.maximum(dt, dt_init_floor)
    dbias = (dt + jnp.log(-jnp.expm1(-dt))).reshape(1, C)

    # A = -exp(As_log), As_log = log(arange(1..Dst)) broadcast over channels
    As_log = jnp.log(jnp.broadcast_to(jnp.arange(1, Dst + 1, dtype=jnp.float32), (C, Dst)))
    A_T = (-jnp.exp(As_log)).T                               # (Dst, C)

    Ds = (jnp.ones((C,), jnp.float32)
          + 0.1 * jax.random.normal(ks[6], (C,), jnp.float32)).reshape(1, C)
    gamma_cr1 = jnp.ones((C, R, 1), jnp.float32) + 0.1 * jax.random.normal(ks[7], (C, R, 1), jnp.float32)
    gamma = jnp.transpose(gamma_cr1[:, :, 0], (1, 0))        # (R, C)

    W_out = jax.random.normal(ks[8], (C, C), jnp.float32) * 0.05
    b_out = jnp.zeros((1, C), jnp.float32)

    params = dict(
        ln1_w=jnp.ones((1, C), jnp.float32), ln1_b=jnp.zeros((1, C), jnp.float32),
        W_in=W_in, b_in=b_in, W_ssm=W_ssm, b_ssm=b_ssm,
        dbias=dbias, A_T=A_T, Ds=Ds, gamma=gamma,
        ln2_w=jnp.ones((1, C), jnp.float32), ln2_b=jnp.zeros((1, C), jnp.float32),
        W_out=W_out, b_out=b_out,
    )
    return {k: jnp.asarray(v, jnp.float32) for k, v in params.items()}


# --------------------------------------------------------------------------
# Pure-JAX reference (for validation)
# --------------------------------------------------------------------------
def mamba_reference(x_flat, B, p):
    hp = functools.partial(jnp.dot, precision=lax.Precision.HIGHEST)
    BL, C = x_flat.shape
    L = BL // B
    Dst = p['A_T'].shape[0]
    R = p['gamma'].shape[0]
    x = x_flat.astype(jnp.float32)

    xn = _layernorm(x, p['ln1_w'][0], p['ln1_b'][0])
    xz = hp(xn, p['W_in']) + p['b_in'][0]
    xs = xz[:, :C]
    xs = xs * _sigmoid(xs)
    z = xz[:, C:]
    z = z * _sigmoid(z)
    ssm = hp(xs, p['W_ssm']) + p['b_ssm'][0]
    dts, bseq, cseq = ssm[:, :C], ssm[:, C:C + Dst], ssm[:, C + Dst:]
    delta = _softplus(dts + p['dbias'][0])
    A = p['A_T'].T                                            # (C, Dst)

    xs_b, d_b = xs.reshape(B, L, C), delta.reshape(B, L, C)
    B_b, C_b = bseq.reshape(B, L, Dst), cseq.reshape(B, L, Dst)

    def per_batch(u, d, Bs, Cs):
        uR, dR = jnp.tile(u, (R, 1)), jnp.tile(d, (R, 1))
        BR, CR = jnp.tile(Bs, (R, 1)), jnp.tile(Cs, (R, 1))

        def step(h, inp):
            u_t, d_t, B_t, C_t = inp
            h = jnp.exp(d_t[:, None] * A) * h + (d_t * u_t)[:, None] * B_t[None, :]
            y = jnp.sum(h * C_t[None, :], axis=-1) + p['Ds'][0] * u_t
            return h, y

        _, ys = lax.scan(step, jnp.zeros((C, Dst), jnp.float32), (uR, dR, BR, CR))
        ys = ys.reshape(R, L, C)
        return jnp.sum(p['gamma'][:, None, :] * ys, axis=0)   # (L, C)

    y = jax.vmap(per_batch)(xs_b, d_b, B_b, C_b).reshape(BL, C)
    yn = _layernorm(y, p['ln2_w'][0], p['ln2_b'][0])
    return x + hp(z * yn, p['W_out']) + p['b_out'][0]


if __name__ == "__main__":
    # batch, seq, embed_dim, state_dim, extend_ratio — small but layout-aligned
    B, L, C, Dst, R = 2, 16, 128, 8, 2
    key = jax.random.PRNGKey(0)
    kp, kx = jax.random.split(key)
    params = init_params(kp, C, Dst, R)
    x = jax.random.normal(kx, (B * L, C), jnp.float32)        # module input: (B*L, C)

    out = jax.block_until_ready(mamba_forward(x, B, params))
    assert out.shape == (B * L, C)

    ref = mamba_reference(x, B, params)
    max_err = float(jnp.max(jnp.abs(out - ref)))
    if not jnp.allclose(out, ref, rtol=2e-2, atol=2e-2):
        raise AssertionError(f"Pallas kernel mismatch vs reference, max abs err = {max_err}")
    print("KERNEL_OK")
</pallas_src>

<mosaic_0001>
module attributes {stable_mosaic.version = 11 : i64} {
  func.func @mamba_kernel(%arg0: i32, %arg1: memref<1x16x128xf32, #tpu.memory_space<vmem>>, %arg2: memref<1x128xf32, #tpu.memory_space<vmem>>, %arg3: memref<1x128xf32, #tpu.memory_space<vmem>>, %arg4: memref<128x256xf32, #tpu.memory_space<vmem>>, %arg5: memref<1x256xf32, #tpu.memory_space<vmem>>, %arg6: memref<128x144xf32, #tpu.memory_space<vmem>>, %arg7: memref<1x144xf32, #tpu.memory_space<vmem>>, %arg8: memref<1x128xf32, #tpu.memory_space<vmem>>, %arg9: memref<8x128xf32, #tpu.memory_space<vmem>>, %arg10: memref<1x128xf32, #tpu.memory_space<vmem>>, %arg11: memref<2x128xf32, #tpu.memory_space<vmem>>, %arg12: memref<1x128xf32, #tpu.memory_space<vmem>>, %arg13: memref<1x128xf32, #tpu.memory_space<vmem>>, %arg14: memref<128x128xf32, #tpu.memory_space<vmem>>, %arg15: memref<1x128xf32, #tpu.memory_space<vmem>>, %arg16: memref<1x16x128xf32, #tpu.memory_space<vmem>>, %arg17: memref<16x128xf32, #tpu.memory_space<vmem>>, %arg18: memref<16x128xf32, #tpu.memory_space<vmem>>, %arg19: memref<16x8xf32, #tpu.memory_space<vmem>>, %arg20: memref<16x8xf32, #tpu.memory_space<vmem>>, %arg21: memref<16x128xf32, #tpu.memory_space<vmem>>) attributes {dimension_semantics = [#tpu.dimension_semantics<parallel>], iteration_bounds = array<i64: 2>, scalar_prefetch = 0 : i64, scratch_operands = 5 : i64, tpu.core_type = #tpu.core_type<tc>, window_params = [{transform_indices = @transform_0, window_bounds = array<i64: 1, 16, 128>}, {pipeline_mode = #tpu.pipeline_mode<synchronous>, transform_indices = @transform_1, window_bounds = array<i64: 1, 128>}, {pipeline_mode = #tpu.pipeline_mode<synchronous>, transform_indices = @transform_2, window_bounds = array<i64: 1, 128>}, {pipeline_mode = #tpu.pipeline_mode<synchronous>, transform_indices = @transform_3, window_bounds = array<i64: 128, 256>}, {pipeline_mode = #tpu.pipeline_mode<synchronous>, transform_indices = @transform_4, window_bounds = array<i64: 1, 256>}, {pipeline_mode = #tpu.pipeline_mode<synchronous>, transform_indices = @transform_5, window_bounds = array<i64: 128, 144>}, {pipeline_mode = #tpu.pipeline_mode<synchronous>, transform_indices = @transform_6, window_bounds = array<i64: 1, 144>}, {pipeline_mode = #tpu.pipeline_mode<synchronous>, transform_indices = @transform_7, window_bounds = array<i64: 1, 128>}, {pipeline_mode = #tpu.pipeline_mode<synchronous>, transform_indices = @transform_8, window_bounds = array<i64: 8, 128>}, {pipeline_mode = #tpu.pipeline_mode<synchronous>, transform_indices = @transform_9, window_bounds = array<i64: 1, 128>}, {pipeline_mode = #tpu.pipeline_mode<synchronous>, transform_indices = @transform_10, window_bounds = array<i64: 2, 128>}, {pipeline_mode = #tpu.pipeline_mode<synchronous>, transform_indices = @transform_11, window_bounds = array<i64: 1, 128>}, {pipeline_mode = #tpu.pipeline_mode<synchronous>, transform_indices = @transform_12, window_bounds = array<i64: 1, 128>}, {pipeline_mode = #tpu.pipeline_mode<synchronous>, transform_indices = @transform_13, window_bounds = array<i64: 128, 128>}, {pipeline_mode = #tpu.pipeline_mode<synchronous>, transform_indices = @transform_14, window_bounds = array<i64: 1, 128>}, {transform_indices = @transform_15, window_bounds = array<i64: 1, 16, 128>}]} {
    %c0 = arith.constant 0 : index
    %c0_0 = arith.constant 0 : index
    %c0_1 = arith.constant 0 : index
    %0 = vector.load %arg1[%c0, %c0_0, %c0_1] : memref<1x16x128xf32, #tpu.memory_space<vmem>>, vector<1x16x128xf32>
    %1 = vector.shape_cast %0 : vector<1x16x128xf32> to vector<16x128xf32>
    %c0_2 = arith.constant 0 : index
    %c0_3 = arith.constant 0 : index
    %2 = vector.load %arg9[%c0_2, %c0_3] : memref<8x128xf32, #tpu.memory_space<vmem>>, vector<8x128xf32>
    %c0_4 = arith.constant 0 : index
    %c0_5 = arith.constant 0 : index
    %3 = vector.load %arg2[%c0_4, %c0_5] : memref<1x128xf32, #tpu.memory_space<vmem>>, vector<1x128xf32>
    %c0_6 = arith.constant 0 : index
    %c0_7 = arith.constant 0 : index
    %4 = vector.load %arg3[%c0_6, %c0_7] : memref<1x128xf32, #tpu.memory_space<vmem>>, vector<1x128xf32>
    %cst = arith.constant dense<0.000000e+00> : vector<16xf32>
    %5 = vector.multi_reduction <add>, %1, %cst [1] : vector<16x128xf32> to vector<16xf32>
    %6 = vector.shape_cast %5 : vector<16xf32> to vector<16x1xf32>
    %cst_8 = arith.constant 1.280000e+02 : f32
    %7 = vector.broadcast %cst_8 : f32 to vector<16x1xf32>
    %8 = arith.divf %6, %7 : vector<16x1xf32>
    %9 = vector.broadcast %8 : vector<16x1xf32> to vector<16x128xf32>
    %10 = arith.subf %1, %9 : vector<16x128xf32>
    %11 = arith.mulf %10, %10 : vector<16x128xf32>
    %cst_9 = arith.constant dense<0.000000e+00> : vector<16xf32>
    %12 = vector.multi_reduction <add>, %11, %cst_9 [1] : vector<16x128xf32> to vector<16xf32>
    %13 = vector.shape_cast %12 : vector<16xf32> to vector<16x1xf32>
    %cst_10 = arith.constant 1.280000e+02 : f32
    %14 = vector.broadcast %cst_10 : f32 to vector<16x1xf32>
    %15 = arith.divf %13, %14 : vector<16x1xf32>
    %16 = vector.broadcast %8 : vector<16x1xf32> to vector<16x128xf32>
    %17 = arith.subf %1, %16 : vector<16x128xf32>
    %cst_11 = arith.constant 9.99999974E-6 : f32
    %18 = vector.broadcast %cst_11 : f32 to vector<16x1xf32>
    %19 = arith.addf %15, %18 : vector<16x1xf32>
    %20 = math.rsqrt %19 : vector<16x1xf32>
    %21 = vector.broadcast %20 : vector<16x1xf32> to vector<16x128xf32>
    %22 = arith.mulf %17, %21 : vector<16x128xf32>
    %23 = vector.broadcast %3 : vector<1x128xf32> to vector<16x128xf32>
    %24 = arith.mulf %22, %23 : vector<16x128xf32>
    %25 = vector.broadcast %4 : vector<1x128xf32> to vector<16x128xf32>
    %26 = arith.addf %24, %25 : vector<16x128xf32>
    %c0_12 = arith.constant 0 : index
    %c0_13 = arith.constant 0 : index
    %27 = vector.load %arg4[%c0_12, %c0_13] : memref<128x256xf32, #tpu.memory_space<vmem>>, vector<128x256xf32>
    %cst_14 = arith.constant dense<0.000000e+00> : vector<16x256xf32>
    %28 = tpu.matmul %26, %27, %cst_14 {dimension_numbers = #tpu.dot_dimension_numbers<[1], [0], [0], [1], [0, 0, 1, 1], [], []>} : vector<16x128xf32>, vector<128x256xf32>, vector<16x256xf32> -> vector<16x256xf32>
    %c0_15 = arith.constant 0 : index
    %c0_16 = arith.constant 0 : index
    %29 = vector.load %arg5[%c0_15, %c0_16] : memref<1x256xf32, #tpu.memory_space<vmem>>, vector<1x256xf32>
    %30 = vector.broadcast %29 : vector<1x256xf32> to vector<16x256xf32>
    %31 = arith.addf %28, %30 : vector<16x256xf32>
    %32 = vector.extract_strided_slice %31 {offsets = [0, 0], sizes = [16, 128], strides = [1, 1]} : vector<16x256xf32> to vector<16x128xf32>
    %cst_17 = arith.constant 0.000000e+00 : f32
    %33 = vector.broadcast %cst_17 : f32 to vector<16x128xf32>
    %34 = arith.subf %33, %32 : vector<16x128xf32>
    %35 = math.exp %34 : vector<16x128xf32>
    %cst_18 = arith.constant 1.000000e+00 : f32
    %36 = vector.broadcast %cst_18 : f32 to vector<16x128xf32>
    %37 = arith.addf %36, %35 : vector<16x128xf32>
    %cst_19 = arith.constant 1.000000e+00 : f32
    %38 = vector.broadcast %cst_19 : f32 to vector<16x128xf32>
    %39 = arith.divf %38, %37 : vector<16x128xf32>
    %40 = arith.mulf %32, %39 : vector<16x128xf32>
    %41 = vector.extract_strided_slice %31 {offsets = [0, 128], sizes = [16, 128], strides = [1, 1]} : vector<16x256xf32> to vector<16x128xf32>
    %cst_20 = arith.constant 0.000000e+00 : f32
    %42 = vector.broadcast %cst_20 : f32 to vector<16x128xf32>
    %43 = arith.subf %42, %41 : vector<16x128xf32>
    %44 = math.exp %43 : vector<16x128xf32>
    %cst_21 = arith.constant 1.000000e+00 : f32
    %45 = vector.broadcast %cst_21 : f32 to vector<16x128xf32>
    %46 = arith.addf %45, %44 : vector<16x128xf32>
    %cst_22 = arith.constant 1.000000e+00 : f32
    %47 = vector.broadcast %cst_22 : f32 to vector<16x128xf32>
    %48 = arith.divf %47, %46 : vector<16x128xf32>
    %49 = arith.mulf %41, %48 : vector<16x128xf32>
    %c0_23 = arith.constant 0 : index
    %c0_24 = arith.constant 0 : index
    %50 = vector.load %arg6[%c0_23, %c0_24] : memref<128x144xf32, #tpu.memory_space<vmem>>, vector<128x144xf32>
    %cst_25 = arith.constant dense<0.000000e+00> : vector<16x144xf32>
    %51 = tpu.matmul %40, %50, %cst_25 {dimension_numbers = #tpu.dot_dimension_numbers<[1], [0], [0], [1], [0, 0, 1, 1], [], []>} : vector<16x128xf32>, vector<128x144xf32>, vector<16x144xf32> -> vector<16x144xf32>
    %c0_26 = arith.constant 0 : index
    %c0_27 = arith.constant 0 : index
    %52 = vector.load %arg7[%c0_26, %c0_27] : memref<1x144xf32, #tpu.memory_space<vmem>>, vector<1x144xf32>
    %53 = vector.broadcast %52 : vector<1x144xf32> to vector<16x144xf32>
    %54 = arith.addf %51, %53 : vector<16x144xf32>
    %55 = vector.extract_strided_slice %54 {offsets = [0, 0], sizes = [16, 128], strides = [1, 1]} : vector<16x144xf32> to vector<16x128xf32>
    %c0_28 = arith.constant 0 : index
    %c0_29 = arith.constant 0 : index
    %56 = vector.load %arg8[%c0_28, %c0_29] : memref<1x128xf32, #tpu.memory_space<vmem>>, vector<1x128xf32>
    %57 = vector.broadcast %56 : vector<1x128xf32> to vector<16x128xf32>
    %58 = arith.addf %55, %57 : vector<16x128xf32>
    %cst_30 = arith.constant 2.000000e+01 : f32
    %59 = vector.broadcast %cst_30 : f32 to vector<16x128xf32>
    %60 = arith.minimumf %58, %59 : vector<16x128xf32>
    %cst_31 = arith.constant 2.000000e+01 : f32
    %61 = vector.broadcast %cst_31 : f32 to vector<16x128xf32>
    %62 = arith.cmpf ogt, %58, %61 : vector<16x128xf32>
    %63 = math.exp %60 : vector<16x128xf32>
    %cst_32 = arith.constant 1.000000e+00 : f32
    %64 = vector.broadcast %cst_32 : f32 to vector<16x128xf32>
    %65 = arith.addf %64, %63 : vector<16x128xf32>
    %66 = math.log %65 : vector<16x128xf32>
    %67 = arith.select %62, %58, %66 : vector<16x128xi1>, vector<16x128xf32>
    %c0_33 = arith.constant 0 : index
    %c0_34 = arith.constant 0 : index
    %68 = vector.load %arg17[%c0_33, %c0_34] : memref<16x128xf32, #tpu.memory_space<vmem>>, vector<16x128xf32>
    tpu.vector_store %arg17[%c0_33, %c0_34], %67 {strides = array<i32>} : memref<16x128xf32, #tpu.memory_space<vmem>>, vector<16x128xf32>,
    %69 = arith.mulf %67, %40 : vector<16x128xf32>
    %c0_35 = arith.constant 0 : index
    %c0_36 = arith.constant 0 : index
    %70 = vector.load %arg18[%c0_35, %c0_36] : memref<16x128xf32, #tpu.memory_space<vmem>>, vector<16x128xf32>
    tpu.vector_store %arg18[%c0_35, %c0_36], %69 {strides = array<i32>} : memref<16x128xf32, #tpu.memory_space<vmem>>, vector<16x128xf32>,
    %71 = vector.extract_strided_slice %54 {offsets = [0, 128], sizes = [16, 8], strides = [1, 1]} : vector<16x144xf32> to vector<16x8xf32>
    %c0_37 = arith.constant 0 : index
    %c0_38 = arith.constant 0 : index
    %72 = vector.load %arg19[%c0_37, %c0_38] : memref<16x8xf32, #tpu.memory_space<vmem>>, vector<16x8xf32>
    tpu.vector_store %arg19[%c0_37, %c0_38], %71 {strides = array<i32>} : memref<16x8xf32, #tpu.memory_space<vmem>>, vector<16x8xf32>,
    %73 = vector.extract_strided_slice %54 {offsets = [0, 136], sizes = [16, 8], strides = [1, 1]} : vector<16x144xf32> to vector<16x8xf32>
    %c0_39 = arith.constant 0 : index
    %c0_40 = arith.constant 0 : index
    %74 = vector.load %arg20[%c0_39, %c0_40] : memref<16x8xf32, #tpu.memory_space<vmem>>, vector<16x8xf32>
    tpu.vector_store %arg20[%c0_39, %c0_40], %73 {strides = array<i32>} : memref<16x8xf32, #tpu.memory_space<vmem>>, vector<16x8xf32>,
    %c0_41 = arith.constant 0 : index
    %c0_42 = arith.constant 0 : index
    %75 = vector.load %arg11[%c0_41, %c0_42] : memref<2x128xf32, #tpu.memory_space<vmem>>, vector<2x128xf32>
    %cst_43 = arith.constant dense<0.000000e+00> : vector<128xf32>
    %76 = vector.multi_reduction <add>, %75, %cst_43 [0] : vector<2x128xf32> to vector<128xf32>
    %77 = vector.shape_cast %76 : vector<128xf32> to vector<1x128xf32>
    %c0_44 = arith.constant 0 : index
    %c0_45 = arith.constant 0 : index
    %78 = vector.load %arg10[%c0_44, %c0_45] : memref<1x128xf32, #tpu.memory_space<vmem>>, vector<1x128xf32>
    %79 = arith.mulf %77, %78 : vector<1x128xf32>
    %80 = vector.broadcast %79 : vector<1x128xf32> to vector<16x128xf32>
    %81 = arith.mulf %80, %40 : vector<16x128xf32>
    %c0_46 = arith.constant 0 : index
    %c0_47 = arith.constant 0 : index
    %82 = vector.load %arg21[%c0_46, %c0_47] : memref<16x128xf32, #tpu.memory_space<vmem>>, vector<16x128xf32>
    tpu.vector_store %arg21[%c0_46, %c0_47], %81 {strides = array<i32>} : memref<16x128xf32, #tpu.memory_space<vmem>>, vector<16x128xf32>,
    %cst_48 = arith.constant 0.000000e+00 : f32
    %83 = vector.broadcast %cst_48 : f32 to vector<8x128xf32>
    %84 = vector.extract_strided_slice %75 {offsets = [0, 0], sizes = [1, 128], strides = [1, 1]} : vector<2x128xf32> to vector<1x128xf32>
    %c0_i32 = arith.constant 0 : i32
    %c2_i32 = arith.constant 2 : i32
    %85 = arith.addi %c0_i32, %c2_i32 : i32
    %c1_i32 = arith.constant 1 : i32
    %86 = scf.for %arg22 = %c0_i32 to %85 step %c1_i32 iter_args(%arg23 = %83) -> (vector<8x128xf32>)  : i32 {
      %c8_i32 = arith.constant 8 : i32
      %127 = arith.muli %arg22, %c8_i32 : i32
      %128 = tpu.assume_multiple %127, 8 : i32
      %129 = arith.index_cast %128 : i32 to index
      %c0_76 = arith.constant 0 : index
      %130 = vector.load %arg17[%129, %c0_76] : memref<16x128xf32, #tpu.memory_space<vmem>>, vector<8x128xf32>
      %131 = arith.index_cast %128 : i32 to index
      %c0_77 = arith.constant 0 : index
      %132 = vector.load %arg18[%131, %c0_77] : memref<16x128xf32, #tpu.memory_space<vmem>>, vector<8x128xf32>
      %133 = arith.index_cast %128 : i32 to index
      %c0_78 = arith.constant 0 : index
      %134 = vector.load %arg19[%133, %c0_78] : memref<16x8xf32, #tpu.memory_space<vmem>>, vector<8x8xf32>
      %135 = arith.index_cast %128 : i32 to index
      %c0_79 = arith.constant 0 : index
      %136 = vector.load %arg20[%135, %c0_79] : memref<16x8xf32, #tpu.memory_space<vmem>>, vector<8x8xf32>
      %137 = vector.shape_cast %130 : vector<8x128xf32> to vector<8x1x128xf32>
      %138 = vector.shape_cast %2 : vector<8x128xf32> to vector<1x8x128xf32>
      %139 = vector.broadcast %137 : vector<8x1x128xf32> to vector<8x8x128xf32>
      %140 = vector.broadcast %138 : vector<1x8x128xf32> to vector<8x8x128xf32>
      %141 = arith.mulf %139, %140 : vector<8x8x128xf32>
      %142 = math.exp %141 : vector<8x8x128xf32>
      %143 = vector.shape_cast %132 : vector<8x128xf32> to vector<8x1x128xf32>
      %144 = vector.shape_cast %134 : vector<8x8xf32> to vector<8x8x1xf32>
      %145 = vector.broadcast %143 : vector<8x1x128xf32> to vector<8x8x128xf32>
      %146 = vector.broadcast %144 : vector<8x8x1xf32> to vector<8x8x128xf32>
      %147 = arith.mulf %145, %146 : vector<8x8x128xf32>
      %148 = vector.extract_strided_slice %142 {offsets = [0, 0, 0], sizes = [1, 8, 128], strides = [1, 1, 1]} : vector<8x8x128xf32> to vector<1x8x128xf32>
      %149 = vector.shape_cast %148 : vector<1x8x128xf32> to vector<8x128xf32>
      %150 = arith.mulf %149, %arg23 : vector<8x128xf32>
      %151 = vector.extract_strided_slice %147 {offsets = [0, 0, 0], sizes = [1, 8, 128], strides = [1, 1, 1]} : vector<8x8x128xf32> to vector<1x8x128xf32>
      %152 = vector.shape_cast %151 : vector<1x8x128xf32> to vector<8x128xf32>
      %153 = arith.addf %150, %152 : vector<8x128xf32>
      %154 = vector.extract_strided_slice %136 {offsets = [0, 0], sizes = [1, 8], strides = [1, 1]} : vector<8x8xf32> to vector<1x8xf32>
      %cst_80 = arith.constant dense<0.000000e+00> : vector<1x128xf32>
      %155 = tpu.matmul %154, %153, %cst_80 {dimension_numbers = #tpu.dot_dimension_numbers<[1], [0], [0], [1], [0, 0, 1, 1], [], []>} : vector<1x8xf32>, vector<8x128xf32>, vector<1x128xf32> -> vector<1x128xf32>
      %156 = vector.extract_strided_slice %142 {offsets = [1, 0, 0], sizes = [1, 8, 128], strides = [1, 1, 1]} : vector<8x8x128xf32> to vector<1x8x128xf32>
      %157 = vector.shape_cast %156 : vector<1x8x128xf32> to vector<8x128xf32>
      %158 = arith.mulf %157, %153 : vector<8x128xf32>
      %159 = vector.extract_strided_slice %147 {offsets = [1, 0, 0], sizes = [1, 8, 128], strides = [1, 1, 1]} : vector<8x8x128xf32> to vector<1x8x128xf32>
      %160 = vector.shape_cast %159 : vector<1x8x128xf32> to vector<8x128xf32>
      %161 = arith.addf %158, %160 : vector<8x128xf32>
      %162 = vector.extract_strided_slice %136 {offsets = [1, 0], sizes = [1, 8], strides = [1, 1]} : vector<8x8xf32> to vector<1x8xf32>
      %cst_81 = arith.constant dense<0.000000e+00> : vector<1x128xf32>
      %163 = tpu.matmul %162, %161, %cst_81 {dimension_numbers = #tpu.dot_dimension_numbers<[1], [0], [0], [1], [0, 0, 1, 1], [], []>} : vector<1x8xf32>, vector<8x128xf32>, vector<1x128xf32> -> vector<1x128xf32>
      %164 = vector.extract_strided_slice %142 {offsets = [2, 0, 0], sizes = [1, 8, 128], strides = [1, 1, 1]} : vector<8x8x128xf32> to vector<1x8x128xf32>
      %165 = vector.shape_cast %164 : vector<1x8x128xf32> to vector<8x128xf32>
      %166 = arith.mulf %165, %161 : vector<8x128xf32>
      %167 = vector.extract_strided_slice %147 {offsets = [2, 0, 0], sizes = [1, 8, 128], strides = [1, 1, 1]} : vector<8x8x128xf32> to vector<1x8x128xf32>
      %168 = vector.shape_cast %167 : vector<1x8x128xf32> to vector<8x128xf32>
      %169 = arith.addf %166, %168 : vector<8x128xf32>
      %170 = vector.extract_strided_slice %136 {offsets = [2, 0], sizes = [1, 8], strides = [1, 1]} : vector<8x8xf32> to vector<1x8xf32>
      %cst_82 = arith.constant dense<0.000000e+00> : vector<1x128xf32>
      %171 = tpu.matmul %170, %169, %cst_82 {dimension_numbers = #tpu.dot_dimension_numbers<[1], [0], [0], [1], [0, 0, 1, 1], [], []>} : vector<1x8xf32>, vector<8x128xf32>, vector<1x128xf32> -> vector<1x128xf32>
      %172 = vector.extract_strided_slice %142 {offsets = [3, 0, 0], sizes = [1, 8, 128], strides = [1, 1, 1]} : vector<8x8x128xf32> to vector<1x8x128xf32>
      %173 = vector.shape_cast %172 : vector<1x8x128xf32> to vector<8x128xf32>
      %174 = arith.mulf %173, %169 : vector<8x128xf32>
      %175 = vector.extract_strided_slice %147 {offsets = [3, 0, 0], sizes = [1, 8, 128], strides = [1, 1, 1]} : vector<8x8x128xf32> to vector<1x8x128xf32>
      %176 = vector.shape_cast %175 : vector<1x8x128xf32> to vector<8x128xf32>
      %177 = arith.addf %174, %176 : vector<8x128xf32>
      %178 = vector.extract_strided_slice %136 {offsets = [3, 0], sizes = [1, 8], strides = [1, 1]} : vector<8x8xf32> to vector<1x8xf32>
      %cst_83 = arith.constant dense<0.000000e+00> : vector<1x128xf32>
      %179 = tpu.matmul %178, %177, %cst_83 {dimension_numbers = #tpu.dot_dimension_numbers<[1], [0], [0], [1], [0, 0, 1, 1], [], []>} : vector<1x8xf32>, vector<8x128xf32>, vector<1x128xf32> -> vector<1x128xf32>
      %180 = vector.extract_strided_slice %142 {offsets = [4, 0, 0], sizes = [1, 8, 128], strides = [1, 1, 1]} : vector<8x8x128xf32> to vector<1x8x128xf32>
      %181 = vector.shape_cast %180 : vector<1x8x128xf32> to vector<8x128xf32>
      %182 = arith.mulf %181, %177 : vector<8x128xf32>
      %183 = vector.extract_strided_slice %147 {offsets = [4, 0, 0], sizes = [1, 8, 128], strides = [1, 1, 1]} : vector<8x8x128xf32> to vector<1x8x128xf32>
      %184 = vector.shape_cast %183 : vector<1x8x128xf32> to vector<8x128xf32>
      %185 = arith.addf %182, %184 : vector<8x128xf32>
      %186 = vector.extract_strided_slice %136 {offsets = [4, 0], sizes = [1, 8], strides = [1, 1]} : vector<8x8xf32> to vector<1x8xf32>
      %cst_84 = arith.constant dense<0.000000e+00> : vector<1x128xf32>
      %187 = tpu.matmul %186, %185, %cst_84 {dimension_numbers = #tpu.dot_dimension_numbers<[1], [0], [0], [1], [0, 0, 1, 1], [], []>} : vector<1x8xf32>, vector<8x128xf32>, vector<1x128xf32> -> vector<1x128xf32>
      %188 = vector.extract_strided_slice %142 {offsets = [5, 0, 0], sizes = [1, 8, 128], strides = [1, 1, 1]} : vector<8x8x128xf32> to vector<1x8x128xf32>
      %189 = vector.shape_cast %188 : vector<1x8x128xf32> to vector<8x128xf32>
      %190 = arith.mulf %189, %185 : vector<8x128xf32>
      %191 = vector.extract_strided_slice %147 {offsets = [5, 0, 0], sizes = [1, 8, 128], strides = [1, 1, 1]} : vector<8x8x128xf32> to vector<1x8x128xf32>
      %192 = vector.shape_cast %191 : vector<1x8x128xf32> to vector<8x128xf32>
      %193 = arith.addf %190, %192 : vector<8x128xf32>
      %194 = vector.extract_strided_slice %136 {offsets = [5, 0], sizes = [1, 8], strides = [1, 1]} : vector<8x8xf32> to vector<1x8xf32>
      %cst_85 = arith.constant dense<0.000000e+00> : vector<1x128xf32>
      %195 = tpu.matmul %194, %193, %cst_85 {dimension_numbers = #tpu.dot_dimension_numbers<[1], [0], [0], [1], [0, 0, 1, 1], [], []>} : vector<1x8xf32>, vector<8x128xf32>, vector<1x128xf32> -> vector<1x128xf32>
      %196 = vector.extract_strided_slice %142 {offsets = [6, 0, 0], sizes = [1, 8, 128], strides = [1, 1, 1]} : vector<8x8x128xf32> to vector<1x8x128xf32>
      %197 = vector.shape_cast %196 : vector<1x8x128xf32> to vector<8x128xf32>
      %198 = arith.mulf %197, %193 : vector<8x128xf32>
      %199 = vector.extract_strided_slice %147 {offsets = [6, 0, 0], sizes = [1, 8, 128], strides = [1, 1, 1]} : vector<8x8x128xf32> to vector<1x8x128xf32>
      %200 = vector.shape_cast %199 : vector<1x8x128xf32> to vector<8x128xf32>
      %201 = arith.addf %198, %200 : vector<8x128xf32>
      %202 = vector.extract_strided_slice %136 {offsets = [6, 0], sizes = [1, 8], strides = [1, 1]} : vector<8x8xf32> to vector<1x8xf32>
      %cst_86 = arith.constant dense<0.000000e+00> : vector<1x128xf32>
      %203 = tpu.matmul %202, %201, %cst_86 {dimension_numbers = #tpu.dot_dimension_numbers<[1], [0], [0], [1], [0, 0, 1, 1], [], []>} : vector<1x8xf32>, vector<8x128xf32>, vector<1x128xf32> -> vector<1x128xf32>
      %204 = vector.extract_strided_slice %142 {offsets = [7, 0, 0], sizes = [1, 8, 128], strides = [1, 1, 1]} : vector<8x8x128xf32> to vector<1x8x128xf32>
      %205 = vector.shape_cast %204 : vector<1x8x128xf32> to vector<8x128xf32>
      %206 = arith.mulf %205, %201 : vector<8x128xf32>
      %207 = vector.extract_strided_slice %147 {offsets = [7, 0, 0], sizes = [1, 8, 128], strides = [1, 1, 1]} : vector<8x8x128xf32> to vector<1x8x128xf32>
      %208 = vector.shape_cast %207 : vector<1x8x128xf32> to vector<8x128xf32>
      %209 = arith.addf %206, %208 : vector<8x128xf32>
      %210 = vector.extract_strided_slice %136 {offsets = [7, 0], sizes = [1, 8], strides = [1, 1]} : vector<8x8xf32> to vector<1x8xf32>
      %cst_87 = arith.constant dense<0.000000e+00> : vector<1x128xf32>
      %211 = tpu.matmul %210, %209, %cst_87 {dimension_numbers = #tpu.dot_dimension_numbers<[1], [0], [0], [1], [0, 0, 1, 1], [], []>} : vector<1x8xf32>, vector<8x128xf32>, vector<1x128xf32> -> vector<1x128xf32>
      %212 = tpu.concatenate %155, %163, %171, %179, %187, %195, %203, %211 in 0 : vector<1x128xf32>, vector<1x128xf32>, vector<1x128xf32>, vector<1x128xf32>, vector<1x128xf32>, vector<1x128xf32>, vector<1x128xf32>, vector<1x128xf32> -> vector<8x128xf32>
      %213 = arith.index_cast %128 : i32 to index
      %c0_88 = arith.constant 0 : index
      %214 = vector.load %arg21[%213, %c0_88] : memref<16x128xf32, #tpu.memory_space<vmem>>, vector<8x128xf32>
      %215 = vector.broadcast %84 : vector<1x128xf32> to vector<8x128xf32>
      %216 = arith.mulf %215, %212 : vector<8x128xf32>
      %217 = arith.addf %214, %216 : vector<8x128xf32>
      %218 = arith.index_cast %128 : i32 to index
      %c0_89 = arith.constant 0 : index
      %219 = vector.load %arg21[%218, %c0_89] : memref<16x128xf32, #tpu.memory_space<vmem>>, vector<8x128xf32>
      tpu.vector_store %arg21[%218, %c0_89], %217 {strides = array<i32>} : memref<16x128xf32, #tpu.memory_space<vmem>>, vector<8x128xf32>,
      scf.yield %209 : vector<8x128xf32>
    }
    %c2_i32_49 = arith.constant 2 : i32
    %87 = vector.extract_strided_slice %75 {offsets = [1, 0], sizes = [1, 128], strides = [1, 1]} : vector<2x128xf32> to vector<1x128xf32>
    %c0_i32_50 = arith.constant 0 : i32
    %c2_i32_51 = arith.constant 2 : i32
    %88 = arith.addi %c0_i32_50, %c2_i32_51 : i32
    %c1_i32_52 = arith.constant 1 : i32
    %89 = scf.for %arg22 = %c0_i32_50 to %88 step %c1_i32_52 iter_args(%arg23 = %86) -> (vector<8x128xf32>)  : i32 {
      %c8_i32 = arith.constant 8 : i32
      %127 = arith.muli %arg22, %c8_i32 : i32
      %128 = tpu.assume_multiple %127, 8 : i32
      %129 = arith.index_cast %128 : i32 to index
      %c0_76 = arith.constant 0 : index
      %130 = vector.load %arg17[%129, %c0_76] : memref<16x128xf32, #tpu.memory_space<vmem>>, vector<8x128xf32>
      %131 = arith.index_cast %128 : i32 to index
      %c0_77 = arith.constant 0 : index
      %132 = vector.load %arg18[%131, %c0_77] : memref<16x128xf32, #tpu.memory_space<vmem>>, vector<8x128xf32>
      %133 = arith.index_cast %128 : i32 to index
      %c0_78 = arith.constant 0 : index
      %134 = vector.load %arg19[%133, %c0_78] : memref<16x8xf32, #tpu.memory_space<vmem>>, vector<8x8xf32>
      %135 = arith.index_cast %128 : i32 to index
      %c0_79 = arith.constant 0 : index
      %136 = vector.load %arg20[%135, %c0_79] : memref<16x8xf32, #tpu.memory_space<vmem>>, vector<8x8xf32>
      %137 = vector.shape_cast %130 : vector<8x128xf32> to vector<8x1x128xf32>
      %138 = vector.shape_cast %2 : vector<8x128xf32> to vector<1x8x128xf32>
      %139 = vector.broadcast %137 : vector<8x1x128xf32> to vector<8x8x128xf32>
      %140 = vector.broadcast %138 : vector<1x8x128xf32> to vector<8x8x128xf32>
      %141 = arith.mulf %139, %140 : vector<8x8x128xf32>
      %142 = math.exp %141 : vector<8x8x128xf32>
      %143 = vector.shape_cast %132 : vector<8x128xf32> to vector<8x1x128xf32>
      %144 = vector.shape_cast %134 : vector<8x8xf32> to vector<8x8x1xf32>
      %145 = vector.broadcast %143 : vector<8x1x128xf32> to vector<8x8x128xf32>
      %146 = vector.broadcast %144 : vector<8x8x1xf32> to vector<8x8x128xf32>
      %147 = arith.mulf %145, %146 : vector<8x8x128xf32>
      %148 = vector.extract_strided_slice %142 {offsets = [0, 0, 0], sizes = [1, 8, 128], strides = [1, 1, 1]} : vector<8x8x128xf32> to vector<1x8x128xf32>
      %149 = vector.shape_cast %148 : vector<1x8x128xf32> to vector<8x128xf32>
      %150 = arith.mulf %149, %arg23 : vector<8x128xf32>
      %151 = vector.extract_strided_slice %147 {offsets = [0, 0, 0], sizes = [1, 8, 128], strides = [1, 1, 1]} : vector<8x8x128xf32> to vector<1x8x128xf32>
      %152 = vector.shape_cast %151 : vector<1x8x128xf32> to vector<8x128xf32>
      %153 = arith.addf %150, %152 : vector<8x128xf32>
      %154 = vector.extract_strided_slice %136 {offsets = [0, 0], sizes = [1, 8], strides = [1, 1]} : vector<8x8xf32> to vector<1x8xf32>
      %cst_80 = arith.constant dense<0.000000e+00> : vector<1x128xf32>
      %155 = tpu.matmul %154, %153, %cst_80 {dimension_numbers = #tpu.dot_dimension_numbers<[1], [0], [0], [1], [0, 0, 1, 1], [], []>} : vector<1x8xf32>, vector<8x128xf32>, vector<1x128xf32> -> vector<1x128xf32>
      %156 = vector.extract_strided_slice %142 {offsets = [1, 0, 0], sizes = [1, 8, 128], strides = [1, 1, 1]} : vector<8x8x128xf32> to vector<1x8x128xf32>
      %157 = vector.shape_cast %156 : vector<1x8x128xf32> to vector<8x128xf32>
      %158 = arith.mulf %157, %153 : vector<8x128xf32>
      %159 = vector.extract_strided_slice %147 {offsets = [1, 0, 0], sizes = [1, 8, 128], strides = [1, 1, 1]} : vector<8x8x128xf32> to vector<1x8x128xf32>
      %160 = vector.shape_cast %159 : vector<1x8x128xf32> to vector<8x128xf32>
      %161 = arith.addf %158, %160 : vector<8x128xf32>
      %162 = vector.extract_strided_slice %136 {offsets = [1, 0], sizes = [1, 8], strides = [1, 1]} : vector<8x8xf32> to vector<1x8xf32>
      %cst_81 = arith.constant dense<0.000000e+00> : vector<1x128xf32>
      %163 = tpu.matmul %162, %161, %cst_81 {dimension_numbers = #tpu.dot_dimension_numbers<[1], [0], [0], [1], [0, 0, 1, 1], [], []>} : vector<1x8xf32>, vector<8x128xf32>, vector<1x128xf32> -> vector<1x128xf32>
      %164 = vector.extract_strided_slice %142 {offsets = [2, 0, 0], sizes = [1, 8, 128], strides = [1, 1, 1]} : vector<8x8x128xf32> to vector<1x8x128xf32>
      %165 = vector.shape_cast %164 : vector<1x8x128xf32> to vector<8x128xf32>
      %166 = arith.mulf %165, %161 : vector<8x128xf32>
      %167 = vector.extract_strided_slice %147 {offsets = [2, 0, 0], sizes = [1, 8, 128], strides = [1, 1, 1]} : vector<8x8x128xf32> to vector<1x8x128xf32>
      %168 = vector.shape_cast %167 : vector<1x8x128xf32> to vector<8x128xf32>
      %169 = arith.addf %166, %168 : vector<8x128xf32>
      %170 = vector.extract_strided_slice %136 {offsets = [2, 0], sizes = [1, 8], strides = [1, 1]} : vector<8x8xf32> to vector<1x8xf32>
      %cst_82 = arith.constant dense<0.000000e+00> : vector<1x128xf32>
      %171 = tpu.matmul %170, %169, %cst_82 {dimension_numbers = #tpu.dot_dimension_numbers<[1], [0], [0], [1], [0, 0, 1, 1], [], []>} : vector<1x8xf32>, vector<8x128xf32>, vector<1x128xf32> -> vector<1x128xf32>
      %172 = vector.extract_strided_slice %142 {offsets = [3, 0, 0], sizes = [1, 8, 128], strides = [1, 1, 1]} : vector<8x8x128xf32> to vector<1x8x128xf32>
      %173 = vector.shape_cast %172 : vector<1x8x128xf32> to vector<8x128xf32>
      %174 = arith.mulf %173, %169 : vector<8x128xf32>
      %175 = vector.extract_strided_slice %147 {offsets = [3, 0, 0], sizes = [1, 8, 128], strides = [1, 1, 1]} : vector<8x8x128xf32> to vector<1x8x128xf32>
      %176 = vector.shape_cast %175 : vector<1x8x128xf32> to vector<8x128xf32>
      %177 = arith.addf %174, %176 : vector<8x128xf32>
      %178 = vector.extract_strided_slice %136 {offsets = [3, 0], sizes = [1, 8], strides = [1, 1]} : vector<8x8xf32> to vector<1x8xf32>
      %cst_83 = arith.constant dense<0.000000e+00> : vector<1x128xf32>
      %179 = tpu.matmul %178, %177, %cst_83 {dimension_numbers = #tpu.dot_dimension_numbers<[1], [0], [0], [1], [0, 0, 1, 1], [], []>} : vector<1x8xf32>, vector<8x128xf32>, vector<1x128xf32> -> vector<1x128xf32>
      %180 = vector.extract_strided_slice %142 {offsets = [4, 0, 0], sizes = [1, 8, 128], strides = [1, 1, 1]} : vector<8x8x128xf32> to vector<1x8x128xf32>
      %181 = vector.shape_cast %180 : vector<1x8x128xf32> to vector<8x128xf32>
      %182 = arith.mulf %181, %177 : vector<8x128xf32>
      %183 = vector.extract_strided_slice %147 {offsets = [4, 0, 0], sizes = [1, 8, 128], strides = [1, 1, 1]} : vector<8x8x128xf32> to vector<1x8x128xf32>
      %184 = vector.shape_cast %183 : vector<1x8x128xf32> to vector<8x128xf32>
      %185 = arith.addf %182, %184 : vector<8x128xf32>
      %186 = vector.extract_strided_slice %136 {offsets = [4, 0], sizes = [1, 8], strides = [1, 1]} : vector<8x8xf32> to vector<1x8xf32>
      %cst_84 = arith.constant dense<0.000000e+00> : vector<1x128xf32>
      %187 = tpu.matmul %186, %185, %cst_84 {dimension_numbers = #tpu.dot_dimension_numbers<[1], [0], [0], [1], [0, 0, 1, 1], [], []>} : vector<1x8xf32>, vector<8x128xf32>, vector<1x128xf32> -> vector<1x128xf32>
      %188 = vector.extract_strided_slice %142 {offsets = [5, 0, 0], sizes = [1, 8, 128], strides = [1, 1, 1]} : vector<8x8x128xf32> to vector<1x8x128xf32>
      %189 = vector.shape_cast %188 : vector<1x8x128xf32> to vector<8x128xf32>
      %190 = arith.mulf %189, %185 : vector<8x128xf32>
      %191 = vector.extract_strided_slice %147 {offsets = [5, 0, 0], sizes = [1, 8, 128], strides = [1, 1, 1]} : vector<8x8x128xf32> to vector<1x8x128xf32>
      %192 = vector.shape_cast %191 : vector<1x8x128xf32> to vector<8x128xf32>
      %193 = arith.addf %190, %192 : vector<8x128xf32>
      %194 = vector.extract_strided_slice %136 {offsets = [5, 0], sizes = [1, 8], strides = [1, 1]} : vector<8x8xf32> to vector<1x8xf32>
      %cst_85 = arith.constant dense<0.000000e+00> : vector<1x128xf32>
      %195 = tpu.matmul %194, %193, %cst_85 {dimension_numbers = #tpu.dot_dimension_numbers<[1], [0], [0], [1], [0, 0, 1, 1], [], []>} : vector<1x8xf32>, vector<8x128xf32>, vector<1x128xf32> -> vector<1x128xf32>
      %196 = vector.extract_strided_slice %142 {offsets = [6, 0, 0], sizes = [1, 8, 128], strides = [1, 1, 1]} : vector<8x8x128xf32> to vector<1x8x128xf32>
      %197 = vector.shape_cast %196 : vector<1x8x128xf32> to vector<8x128xf32>
      %198 = arith.mulf %197, %193 : vector<8x128xf32>
      %199 = vector.extract_strided_slice %147 {offsets = [6, 0, 0], sizes = [1, 8, 128], strides = [1, 1, 1]} : vector<8x8x128xf32> to vector<1x8x128xf32>
      %200 = vector.shape_cast %199 : vector<1x8x128xf32> to vector<8x128xf32>
      %201 = arith.addf %198, %200 : vector<8x128xf32>
      %202 = vector.extract_strided_slice %136 {offsets = [6, 0], sizes = [1, 8], strides = [1, 1]} : vector<8x8xf32> to vector<1x8xf32>
      %cst_86 = arith.constant dense<0.000000e+00> : vector<1x128xf32>
      %203 = tpu.matmul %202, %201, %cst_86 {dimension_numbers = #tpu.dot_dimension_numbers<[1], [0], [0], [1], [0, 0, 1, 1], [], []>} : vector<1x8xf32>, vector<8x128xf32>, vector<1x128xf32> -> vector<1x128xf32>
      %204 = vector.extract_strided_slice %142 {offsets = [7, 0, 0], sizes = [1, 8, 128], strides = [1, 1, 1]} : vector<8x8x128xf32> to vector<1x8x128xf32>
      %205 = vector.shape_cast %204 : vector<1x8x128xf32> to vector<8x128xf32>
      %206 = arith.mulf %205, %201 : vector<8x128xf32>
      %207 = vector.extract_strided_slice %147 {offsets = [7, 0, 0], sizes = [1, 8, 128], strides = [1, 1, 1]} : vector<8x8x128xf32> to vector<1x8x128xf32>
      %208 = vector.shape_cast %207 : vector<1x8x128xf32> to vector<8x128xf32>
      %209 = arith.addf %206, %208 : vector<8x128xf32>
      %210 = vector.extract_strided_slice %136 {offsets = [7, 0], sizes = [1, 8], strides = [1, 1]} : vector<8x8xf32> to vector<1x8xf32>
      %cst_87 = arith.constant dense<0.000000e+00> : vector<1x128xf32>
      %211 = tpu.matmul %210, %209, %cst_87 {dimension_numbers = #tpu.dot_dimension_numbers<[1], [0], [0], [1], [0, 0, 1, 1], [], []>} : vector<1x8xf32>, vector<8x128xf32>, vector<1x128xf32> -> vector<1x128xf32>
      %212 = tpu.concatenate %155, %163, %171, %179, %187, %195, %203, %211 in 0 : vector<1x128xf32>, vector<1x128xf32>, vector<1x128xf32>, vector<1x128xf32>, vector<1x128xf32>, vector<1x128xf32>, vector<1x128xf32>, vector<1x128xf32> -> vector<8x128xf32>
      %213 = arith.index_cast %128 : i32 to index
      %c0_88 = arith.constant 0 : index
      %214 = vector.load %arg21[%213, %c0_88] : memref<16x128xf32, #tpu.memory_space<vmem>>, vector<8x128xf32>
      %215 = vector.broadcast %87 : vector<1x128xf32> to vector<8x128xf32>
      %216 = arith.mulf %215, %212 : vector<8x128xf32>
      %217 = arith.addf %214, %216 : vector<8x128xf32>
      %218 = arith.index_cast %128 : i32 to index
      %c0_89 = arith.constant 0 : index
      %219 = vector.load %arg21[%218, %c0_89] : memref<16x128xf32, #tpu.memory_space<vmem>>, vector<8x128xf32>
      tpu.vector_store %arg21[%218, %c0_89], %217 {strides = array<i32>} : memref<16x128xf32, #tpu.memory_space<vmem>>, vector<8x128xf32>,
      scf.yield %209 : vector<8x128xf32>
    }
    %c2_i32_53 = arith.constant 2 : i32
    %c0_54 = arith.constant 0 : index
    %c0_55 = arith.constant 0 : index
    %90 = vector.load %arg21[%c0_54, %c0_55] : memref<16x128xf32, #tpu.memory_space<vmem>>, vector<16x128xf32>
    %c0_56 = arith.constant 0 : index
    %c0_57 = arith.constant 0 : index
    %91 = vector.load %arg12[%c0_56, %c0_57] : memref<1x128xf32, #tpu.memory_space<vmem>>, vector<1x128xf32>
    %c0_58 = arith.constant 0 : index
    %c0_59 = arith.constant 0 : index
    %92 = vector.load %arg13[%c0_58, %c0_59] : memref<1x128xf32, #tpu.memory_space<vmem>>, vector<1x128xf32>
    %cst_60 = arith.constant dense<0.000000e+00> : vector<16xf32>
    %93 = vector.multi_reduction <add>, %90, %cst_60 [1] : vector<16x128xf32> to vector<16xf32>
    %94 = vector.shape_cast %93 : vector<16xf32> to vector<16x1xf32>
    %cst_61 = arith.constant 1.280000e+02 : f32
    %95 = vector.broadcast %cst_61 : f32 to vector<16x1xf32>
    %96 = arith.divf %94, %95 : vector<16x1xf32>
    %97 = vector.broadcast %96 : vector<16x1xf32> to vector<16x128xf32>
    %98 = arith.subf %90, %97 : vector<16x128xf32>
    %99 = arith.mulf %98, %98 : vector<16x128xf32>
    %cst_62 = arith.constant dense<0.000000e+00> : vector<16xf32>
    %100 = vector.multi_reduction <add>, %99, %cst_62 [1] : vector<16x128xf32> to vector<16xf32>
    %101 = vector.shape_cast %100 : vector<16xf32> to vector<16x1xf32>
    %cst_63 = arith.constant 1.280000e+02 : f32
    %102 = vector.broadcast %cst_63 : f32 to vector<16x1xf32>
    %103 = arith.divf %101, %102 : vector<16x1xf32>
    %104 = vector.broadcast %96 : vector<16x1xf32> to vector<16x128xf32>
    %105 = arith.subf %90, %104 : vector<16x128xf32>
    %cst_64 = arith.constant 9.99999974E-6 : f32
    %106 = vector.broadcast %cst_64 : f32 to vector<16x1xf32>
    %107 = arith.addf %103, %106 : vector<16x1xf32>
    %108 = math.rsqrt %107 : vector<16x1xf32>
    %109 = vector.broadcast %108 : vector<16x1xf32> to vector<16x128xf32>
    %110 = arith.mulf %105, %109 : vector<16x128xf32>
    %111 = vector.broadcast %91 : vector<1x128xf32> to vector<16x128xf32>
    %112 = arith.mulf %110, %111 : vector<16x128xf32>
    %113 = vector.broadcast %92 : vector<1x128xf32> to vector<16x128xf32>
    %114 = arith.addf %112, %113 : vector<16x128xf32>
    %115 = arith.mulf %49, %114 : vector<16x128xf32>
    %c0_65 = arith.constant 0 : index
    %c0_66 = arith.constant 0 : index
    %116 = vector.load %arg14[%c0_65, %c0_66] : memref<128x128xf32, #tpu.memory_space<vmem>>, vector<128x128xf32>
    %cst_67 = arith.constant dense<0.000000e+00> : vector<16x128xf32>
    %117 = tpu.matmul %115, %116, %cst_67 {dimension_numbers = #tpu.dot_dimension_numbers<[1], [0], [0], [1], [0, 0, 1, 1], [], []>} : vector<16x128xf32>, vector<128x128xf32>, vector<16x128xf32> -> vector<16x128xf32>
    %c0_68 = arith.constant 0 : index
    %c0_69 = arith.constant 0 : index
    %118 = vector.load %arg15[%c0_68, %c0_69] : memref<1x128xf32, #tpu.memory_space<vmem>>, vector<1x128xf32>
    %119 = vector.broadcast %118 : vector<1x128xf32> to vector<16x128xf32>
    %120 = arith.addf %117, %119 : vector<16x128xf32>
    %c0_70 = arith.constant 0 : index
    %c0_71 = arith.constant 0 : index
    %c0_72 = arith.constant 0 : index
    %121 = vector.load %arg1[%c0_70, %c0_71, %c0_72] : memref<1x16x128xf32, #tpu.memory_space<vmem>>, vector<1x16x128xf32>
    %122 = vector.shape_cast %121 : vector<1x16x128xf32> to vector<16x128xf32>
    %123 = arith.addf %122, %120 : vector<16x128xf32>
    %c0_73 = arith.constant 0 : index
    %c0_74 = arith.constant 0 : index
    %c0_75 = arith.constant 0 : index
    %124 = vector.load %arg16[%c0_73, %c0_74, %c0_75] : memref<1x16x128xf32, #tpu.memory_space<vmem>>, vector<1x16x128xf32>
    %125 = vector.shape_cast %124 : vector<1x16x128xf32> to vector<16x128xf32>
    %126 = vector.shape_cast %123 : vector<16x128xf32> to vector<1x16x128xf32>
    tpu.vector_store %arg16[%c0_73, %c0_74, %c0_75], %126 {strides = array<i32>} : memref<1x16x128xf32, #tpu.memory_space<vmem>>, vector<1x16x128xf32>,
    return
  }
  func.func @transform_0(%arg0: i32) -> (i32, i32, i32) {
    %c0_i32 = arith.constant 0 : i32
    %c0_i32_0 = arith.constant 0 : i32
    %c0_i32_1 = arith.constant 0 : i32
    return %arg0, %c0_i32, %c0_i32_0 : i32, i32, i32
  }
  func.func @transform_1(%arg0: i32) -> (i32, i32) {
    %c0_i32 = arith.constant 0 : i32
    %c0_i32_0 = arith.constant 0 : i32
    %c0_i32_1 = arith.constant 0 : i32
    return %c0_i32, %c0_i32_0 : i32, i32
  }
  func.func @transform_2(%arg0: i32) -> (i32, i32) {
    %c0_i32 = arith.constant 0 : i32
    %c0_i32_0 = arith.constant 0 : i32
    %c0_i32_1 = arith.constant 0 : i32
    return %c0_i32, %c0_i32_0 : i32, i32
  }
  func.func @transform_3(%arg0: i32) -> (i32, i32) {
    %c0_i32 = arith.constant 0 : i32
    %c0_i32_0 = arith.constant 0 : i32
    %c0_i32_1 = arith.constant 0 : i32
    return %c0_i32, %c0_i32_0 : i32, i32
  }
  func.func @transform_4(%arg0: i32) -> (i32, i32) {
    %c0_i32 = arith.constant 0 : i32
    %c0_i32_0 = arith.constant 0 : i32
    %c0_i32_1 = arith.constant 0 : i32
    return %c0_i32, %c0_i32_0 : i32, i32
  }
  func.func @transform_5(%arg0: i32) -> (i32, i32) {
    %c0_i32 = arith.constant 0 : i32
    %c0_i32_0 = arith.constant 0 : i32
    %c0_i32_1 = arith.constant 0 : i32
    return %c0_i32, %c0_i32_0 : i32, i32
  }
  func.func @transform_6(%arg0: i32) -> (i32, i32) {
    %c0_i32 = arith.constant 0 : i32
    %c0_i32_0 = arith.constant 0 : i32
    %c0_i32_1 = arith.constant 0 : i32
    return %c0_i32, %c0_i32_0 : i32, i32
  }
  func.func @transform_7(%arg0: i32) -> (i32, i32) {
    %c0_i32 = arith.constant 0 : i32
    %c0_i32_0 = arith.constant 0 : i32
    %c0_i32_1 = arith.constant 0 : i32
    return %c0_i32, %c0_i32_0 : i32, i32
  }
  func.func @transform_8(%arg0: i32) -> (i32, i32) {
    %c0_i32 = arith.constant 0 : i32
    %c0_i32_0 = arith.constant 0 : i32
    %c0_i32_1 = arith.constant 0 : i32
    return %c0_i32, %c0_i32_0 : i32, i32
  }
  func.func @transform_9(%arg0: i32) -> (i32, i32) {
    %c0_i32 = arith.constant 0 : i32
    %c0_i32_0 = arith.constant 0 : i32
    %c0_i32_1 = arith.constant 0 : i32
    return %c0_i32, %c0_i32_0 : i32, i32
  }
  func.func @transform_10(%arg0: i32) -> (i32, i32) {
    %c0_i32 = arith.constant 0 : i32
    %c0_i32_0 = arith.constant 0 : i32
    %c0_i32_1 = arith.constant 0 : i32
    return %c0_i32, %c0_i32_0 : i32, i32
  }
  func.func @transform_11(%arg0: i32) -> (i32, i32) {
    %c0_i32 = arith.constant 0 : i32
    %c0_i32_0 = arith.constant 0 : i32
    %c0_i32_1 = arith.constant 0 : i32
    return %c0_i32, %c0_i32_0 : i32, i32
  }
  func.func @transform_12(%arg0: i32) -> (i32, i32) {
    %c0_i32 = arith.constant 0 : i32
    %c0_i32_0 = arith.constant 0 : i32
    %c0_i32_1 = arith.constant 0 : i32
    return %c0_i32, %c0_i32_0 : i32, i32
  }
  func.func @transform_13(%arg0: i32) -> (i32, i32) {
    %c0_i32 = arith.constant 0 : i32
    %c0_i32_0 = arith.constant 0 : i32
    %c0_i32_1 = arith.constant 0 : i32
    return %c0_i32, %c0_i32_0 : i32, i32
  }
  func.func @transform_14(%arg0: i32) -> (i32, i32) {
    %c0_i32 = arith.constant 0 : i32
    %c0_i32_0 = arith.constant 0 : i32
    %c0_i32_1 = arith.constant 0 : i32
    return %c0_i32, %c0_i32_0 : i32, i32
  }
  func.func @transform_15(%arg0: i32) -> (i32, i32, i32) {
    %c0_i32 = arith.constant 0 : i32
    %c0_i32_0 = arith.constant 0 : i32
    %c0_i32_1 = arith.constant 0 : i32
    return %arg0, %c0_i32, %c0_i32_0 : i32, i32, i32
  }
}

</mosaic_0001>

<llo_original>
// kernel: tpu_custom_call.1
$region0: #{tpu_custom_call.1}
  #allocation0 [shape = 'u32[]', space=smem, size = 0x4, offset = 0x4, fixed_abs, tag = 'smem constant byte address 0x4 - core index']
  #allocation1 [shape = 'u32[144,128]{1,0:T(1,128)}', space=vmem, size = 0x12000, scoped, tag = 'internal scratch']
  #allocation2 [shape = 'f32[16,128]{1,0:T(8,128)}', space=vmem, size = 0x2000, scoped, tag = 'scratch operand']
  #allocation3 [shape = 'f32[16,128]{1,0:T(8,128)}', space=vmem, size = 0x2000, scoped, tag = 'scratch operand']
  #allocation4 [shape = 'f32[16,8]{1,0:T(8,128)}', space=vmem, size = 0x2000, scoped, tag = 'scratch operand']
  #allocation5 [shape = 'f32[16,8]{1,0:T(8,128)}', space=vmem, size = 0x2000, scoped, tag = 'scratch operand']
  #allocation6 [shape = 'f32[16,128]{1,0:T(8,128)}', space=vmem, size = 0x2000, scoped, tag = 'scratch operand']
  %s0 = inlined_call_operand.hbm [shape: f32[2,16,128], index: 0, kind: input, shape index: {}]
  %s1 = inlined_call_operand.vmem [shape: f32[1,128], index: 1, kind: input, shape index: {}]
  %s2 = inlined_call_operand.vmem [shape: f32[1,128], index: 2, kind: input, shape index: {}]
  %s3 = inlined_call_operand.vmem [shape: f32[128,256], index: 3, kind: input, shape index: {}]
  %s4 = inlined_call_operand.vmem [shape: f32[1,256], index: 4, kind: input, shape index: {}]
  %s5 = inlined_call_operand.vmem [shape: f32[128,144], index: 5, kind: input, shape index: {}]
  %s6 = inlined_call_operand.vmem [shape: f32[1,144], index: 6, kind: input, shape index: {}]
  %s7 = inlined_call_operand.vmem [shape: f32[1,128], index: 7, kind: input, shape index: {}]
  %s8 = inlined_call_operand.vmem [shape: f32[8,128], index: 8, kind: input, shape index: {}]
  %s9 = inlined_call_operand.vmem [shape: f32[1,128], index: 9, kind: input, shape index: {}]
  %s10 = inlined_call_operand.vmem [shape: f32[2,128], index: 10, kind: input, shape index: {}]
  %s11 = inlined_call_operand.vmem [shape: f32[1,128], index: 11, kind: input, shape index: {}]
  %s12 = inlined_call_operand.vmem [shape: f32[1,128], index: 12, kind: input, shape index: {}]
  %s13 = inlined_call_operand.vmem [shape: f32[128,128], index: 13, kind: input, shape index: {}]
  %s14 = inlined_call_operand.vmem [shape: f32[1,128], index: 14, kind: input, shape index: {}]
  %s15 = inlined_call_operand.hbm [shape: f32[2,16,128], index: 15, kind: output, shape index: {}]
  %s16 = sld [smem:[#allocation0]]
  $region111: #{tpu_custom_call.1} parent=0
    _
  %s18 = ssub.s32 1, %s16
  %s19 = scalar_select 0, %s18, %s16
  $region1: #{tpu_custom_call.1} parent=0
    #allocation7 [shape = 'u8[16384]{0}', space=vmem, size = 0x4000, scoped, tag = 'input window, operand 0']
    #allocation8 [shape = 's32[2]{0}', space=sflag, size = 0x8, scoped, tag = 'scoped memory for tpu_custom_call.1']
    #allocation9 [shape = 's32[2]{0}', space=sflag, size = 0x8, scoped, tag = 'scoped memory for tpu_custom_call.1']
    #allocation10 [shape = 'u8[16384]{0}', space=vmem, size = 0x4000, scoped, tag = 'output window, operand 0']
    %20 = vsyncpa [#allocation8], 0
    %s21 = scalar_lea.sflag [#allocation8], 1
    %22 = vsyncpa %s21, 0
    %23 = vsyncpa [#allocation9], 0
    %s24 = scalar_lea.sflag [#allocation9], 1
    %25 = vsyncpa %s24, 0
    loop: start=0, step=1, limit=4
    $region2: #{tpu_custom_call.1} parent=1 // loop_pre_header
      _
    $region3: #{tpu_custom_call.1} parent=1 // loop_header
      %s27 = sphi 0, %s31
      %p28 = scmp.ge.s32.totalorder %s27, 4
      %s37 = sphi 0, %s39
      %s40 = sphi 0, %s37
      %s41 = sphi 0, %s40
      %s57 = sphi 0, %s41
      %s61 = sphi 0, %s61
      %s63 = sphi 0, %s61
      %s64 = sphi 0, %s63
      %s78 = sphi 0, %s64
      %s82 = sphi 0, %s82
      %s84 = sphi 0, %s82
      %s85 = sphi 0, %s84
      %s99 = sphi 0, %s85
      %s103 = sphi 0, %s103
      %s105 = sphi 0, %s103
      %s106 = sphi 0, %s105
      %s120 = sphi 0, %s106
      %s124 = sphi 0, %s124
      %s126 = sphi 0, %s124
      %s127 = sphi 0, %s126
      %s141 = sphi 0, %s127
      %s145 = sphi 0, %s145
      %s147 = sphi 0, %s145
      %s148 = sphi 0, %s147
      %s162 = sphi 0, %s148
      %s166 = sphi 0, %s166
      %s168 = sphi 0, %s166
      %s169 = sphi 0, %s168
      %s183 = sphi 0, %s169
      %s187 = sphi 0, %s187
      %s189 = sphi 0, %s187
      %s190 = sphi 0, %s189
      %s204 = sphi 0, %s190
      %s208 = sphi 0, %s208
      %s210 = sphi 0, %s208
      %s211 = sphi 0, %s210
      %s225 = sphi 0, %s211
      %s229 = sphi 0, %s229
      %s231 = sphi 0, %s229
      %s232 = sphi 0, %s231
      %s246 = sphi 0, %s232
      %s250 = sphi 0, %s250
      %s252 = sphi 0, %s250
      %s253 = sphi 0, %s252
      %s267 = sphi 0, %s253
      %s271 = sphi 0, %s271
      %s273 = sphi 0, %s271
      %s274 = sphi 0, %s273
      %s288 = sphi 0, %s274
      %s292 = sphi 0, %s292
      %s294 = sphi 0, %s292
      %s295 = sphi 0, %s294
      %s309 = sphi 0, %s295
      %s313 = sphi 0, %s313
      %s315 = sphi 0, %s313
      %s316 = sphi 0, %s315
      %s330 = sphi 0, %s316
      %s334 = sphi 0, %s334
      %s336 = sphi 0, %s334
      %s337 = sphi 0, %s336
      %s351 = sphi 0, %s337
      %s357 = sphi 0, %s359
      %s360 = sphi 0, %s357
      %s361 = sphi 0, %s360
      %s377 = sphi 0, %s361
    $region4: #{tpu_custom_call.1} parent=1 // loop_header_branch
      %30 = sbr.rel (%p28) target = $region8
    $region5: #{tpu_custom_call.1} parent=1 // loop_body
      %s32 = ssub.s32 %s27, 1
      %s33 = ssub.s32 %s27, 2
      %s34 = sadd.s32 %s27, 1
      %s35 = ssub.s32 %s27, %s34
      %p36 = scmp.eq.s32.totalorder %s35, 0
      %s38 = sadd.s32 %s37, 1
      %s39 = scalar_select %p36, %s37, %s38
      %p42 = pneg %p36
      %p43 = scmp.eq.s32.totalorder %s27, 1
      %p44 = por %p42, %p43
      %p45 = scmp.ne.s32.totalorder %s37, %s40
      %p46 = scmp.eq.s32.totalorder %s27, 0
      %p47 = por %p45, %p46
      %p48 = scmp.ne.s32.totalorder %s37, %s40
      %p49 = scmp.eq.s32.totalorder %s32, 1
      %p50 = por %p48, %p49
      %p51 = scmp.ne.s32.totalorder %s40, %s41
      %p52 = scmp.eq.s32.totalorder %s32, 0
      %p53 = por %p51, %p52
      %p54 = scmp.ne.s32.totalorder %s40, %s41
      %p55 = scmp.eq.s32.totalorder %s33, 1
      %p56 = por %p54, %p55
      %p58 = scmp.ne.s32.totalorder %s41, %s57
      %p59 = scmp.eq.s32.totalorder %s33, 0
      %p60 = por %p58, %p59
      %s62 = sadd.s32 %s61, 1
      %p65 = scmp.eq.s32.totalorder %s27, 1
      %p66 = scmp.ne.s32.totalorder %s61, %s63
      %p67 = scmp.eq.s32.totalorder %s27, 0
      %p68 = por %p66, %p67
      %p69 = scmp.ne.s32.totalorder %s61, %s63
      %p70 = scmp.eq.s32.totalorder %s32, 1
      %p71 = por %p69, %p70
      %p72 = scmp.ne.s32.totalorder %s63, %s64
      %p73 = scmp.eq.s32.totalorder %s32, 0
      %p74 = por %p72, %p73
      %p75 = scmp.ne.s32.totalorder %s63, %s64
      %p76 = scmp.eq.s32.totalorder %s33, 1
      %p77 = por %p75, %p76
      %p79 = scmp.ne.s32.totalorder %s64, %s78
      %p80 = scmp.eq.s32.totalorder %s33, 0
      %p81 = por %p79, %p80
      %s83 = sadd.s32 %s82, 1
      %p86 = scmp.eq.s32.totalorder %s27, 1
      %p87 = scmp.ne.s32.totalorder %s82, %s84
      %p88 = scmp.eq.s32.totalorder %s27, 0
      %p89 = por %p87, %p88
      %p90 = scmp.ne.s32.totalorder %s82, %s84
      %p91 = scmp.eq.s32.totalorder %s32, 1
      %p92 = por %p90, %p91
      %p93 = scmp.ne.s32.totalorder %s84, %s85
      %p94 = scmp.eq.s32.totalorder %s32, 0
      %p95 = por %p93, %p94
      %p96 = scmp.ne.s32.totalorder %s84, %s85
      %p97 = scmp.eq.s32.totalorder %s33, 1
      %p98 = por %p96, %p97
      %p100 = scmp.ne.s32.totalorder %s85, %s99
      %p101 = scmp.eq.s32.totalorder %s33, 0
      %p102 = por %p100, %p101
      %s104 = sadd.s32 %s103, 1
      %p107 = scmp.eq.s32.totalorder %s27, 1
      %p108 = scmp.ne.s32.totalorder %s103, %s105
      %p109 = scmp.eq.s32.totalorder %s27, 0
      %p110 = por %p108, %p109
      %p111 = scmp.ne.s32.totalorder %s103, %s105
      %p112 = scmp.eq.s32.totalorder %s32, 1
      %p113 = por %p111, %p112
      %p114 = scmp.ne.s32.totalorder %s105, %s106
      %p115 = scmp.eq.s32.totalorder %s32, 0
      %p116 = por %p114, %p115
      %p117 = scmp.ne.s32.totalorder %s105, %s106
      %p118 = scmp.eq.s32.totalorder %s33, 1
      %p119 = por %p117, %p118
      %p121 = scmp.ne.s32.totalorder %s106, %s120
      %p122 = scmp.eq.s32.totalorder %s33, 0
      %p123 = por %p121, %p122
      %s125 = sadd.s32 %s124, 1
      %p128 = scmp.eq.s32.totalorder %s27, 1
      %p129 = scmp.ne.s32.totalorder %s124, %s126
      %p130 = scmp.eq.s32.totalorder %s27, 0
      %p131 = por %p129, %p130
      %p132 = scmp.ne.s32.totalorder %s124, %s126
      %p133 = scmp.eq.s32.totalorder %s32, 1
      %p134 = por %p132, %p133
      %p135 = scmp.ne.s32.totalorder %s126, %s127
      %p136 = scmp.eq.s32.totalorder %s32, 0
      %p137 = por %p135, %p136
      %p138 = scmp.ne.s32.totalorder %s126, %s127
      %p139 = scmp.eq.s32.totalorder %s33, 1
      %p140 = por %p138, %p139
      %p142 = scmp.ne.s32.totalorder %s127, %s141
      %p143 = scmp.eq.s32.totalorder %s33, 0
      %p144 = por %p142, %p143
      %s146 = sadd.s32 %s145, 1
      %p149 = scmp.eq.s32.totalorder %s27, 1
      %p150 = scmp.ne.s32.totalorder %s145, %s147
      %p151 = scmp.eq.s32.totalorder %s27, 0
      %p152 = por %p150, %p151
      %p153 = scmp.ne.s32.totalorder %s145, %s147
      %p154 = scmp.eq.s32.totalorder %s32, 1
      %p155 = por %p153, %p154
      %p156 = scmp.ne.s32.totalorder %s147, %s148
      %p157 = scmp.eq.s32.totalorder %s32, 0
      %p158 = por %p156, %p157
      %p159 = scmp.ne.s32.totalorder %s147, %s148
      %p160 = scmp.eq.s32.totalorder %s33, 1
      %p161 = por %p159, %p160
      %p163 = scmp.ne.s32.totalorder %s148, %s162
      %p164 = scmp.eq.s32.totalorder %s33, 0
      %p165 = por %p163, %p164
      %s167 = sadd.s32 %s166, 1
      %p170 = scmp.eq.s32.totalorder %s27, 1
      %p171 = scmp.ne.s32.totalorder %s166, %s168
      %p172 = scmp.eq.s32.totalorder %s27, 0
      %p173 = por %p171, %p172
      %p174 = scmp.ne.s32.totalorder %s166, %s168
      %p175 = scmp.eq.s32.totalorder %s32, 1
      %p176 = por %p174, %p175
      %p177 = scmp.ne.s32.totalorder %s168, %s169
      %p178 = scmp.eq.s32.totalorder %s32, 0
      %p179 = por %p177, %p178
      %p180 = scmp.ne.s32.totalorder %s168, %s169
      %p181 = scmp.eq.s32.totalorder %s33, 1
      %p182 = por %p180, %p181
      %p184 = scmp.ne.s32.totalorder %s169, %s183
      %p185 = scmp.eq.s32.totalorder %s33, 0
      %p186 = por %p184, %p185
      %s188 = sadd.s32 %s187, 1
      %p191 = scmp.eq.s32.totalorder %s27, 1
      %p192 = scmp.ne.s32.totalorder %s187, %s189
      %p193 = scmp.eq.s32.totalorder %s27, 0
      %p194 = por %p192, %p193
      %p195 = scmp.ne.s32.totalorder %s187, %s189
      %p196 = scmp.eq.s32.totalorder %s32, 1
      %p197 = por %p195, %p196
      %p198 = scmp.ne.s32.totalorder %s189, %s190
      %p199 = scmp.eq.s32.totalorder %s32, 0
      %p200 = por %p198, %p199
      %p201 = scmp.ne.s32.totalorder %s189, %s190
      %p202 = scmp.eq.s32.totalorder %s33, 1
      %p203 = por %p201, %p202
      %p205 = scmp.ne.s32.totalorder %s190, %s204
      %p206 = scmp.eq.s32.totalorder %s33, 0
      %p207 = por %p205, %p206
      %s209 = sadd.s32 %s208, 1
      %p212 = scmp.eq.s32.totalorder %s27, 1
      %p213 = scmp.ne.s32.totalorder %s208, %s210
      %p214 = scmp.eq.s32.totalorder %s27, 0
      %p215 = por %p213, %p214
      %p216 = scmp.ne.s32.totalorder %s208, %s210
      %p217 = scmp.eq.s32.totalorder %s32, 1
      %p218 = por %p216, %p217
      %p219 = scmp.ne.s32.totalorder %s210, %s211
      %p220 = scmp.eq.s32.totalorder %s32, 0
      %p221 = por %p219, %p220
      %p222 = scmp.ne.s32.totalorder %s210, %s211
      %p223 = scmp.eq.s32.totalorder %s33, 1
      %p224 = por %p222, %p223
      %p226 = scmp.ne.s32.totalorder %s211, %s225
      %p227 = scmp.eq.s32.totalorder %s33, 0
      %p228 = por %p226, %p227
      %s230 = sadd.s32 %s229, 1
      %p233 = scmp.eq.s32.totalorder %s27, 1
      %p234 = scmp.ne.s32.totalorder %s229, %s231
      %p235 = scmp.eq.s32.totalorder %s27, 0
      %p236 = por %p234, %p235
      %p237 = scmp.ne.s32.totalorder %s229, %s231
      %p238 = scmp.eq.s32.totalorder %s32, 1
      %p239 = por %p237, %p238
      %p240 = scmp.ne.s32.totalorder %s231, %s232
      %p241 = scmp.eq.s32.totalorder %s32, 0
      %p242 = por %p240, %p241
      %p243 = scmp.ne.s32.totalorder %s231, %s232
      %p244 = scmp.eq.s32.totalorder %s33, 1
      %p245 = por %p243, %p244
      %p247 = scmp.ne.s32.totalorder %s232, %s246
      %p248 = scmp.eq.s32.totalorder %s33, 0
      %p249 = por %p247, %p248
      %s251 = sadd.s32 %s250, 1
      %p254 = scmp.eq.s32.totalorder %s27, 1
      %p255 = scmp.ne.s32.totalorder %s250, %s252
      %p256 = scmp.eq.s32.totalorder %s27, 0
      %p257 = por %p255, %p256
      %p258 = scmp.ne.s32.totalorder %s250, %s252
      %p259 = scmp.eq.s32.totalorder %s32, 1
      %p260 = por %p258, %p259
      %p261 = scmp.ne.s32.totalorder %s252, %s253
      %p262 = scmp.eq.s32.totalorder %s32, 0
      %p263 = por %p261, %p262
      %p264 = scmp.ne.s32.totalorder %s252, %s253
      %p265 = scmp.eq.s32.totalorder %s33, 1
      %p266 = por %p264, %p265
      %p268 = scmp.ne.s32.totalorder %s253, %s267
      %p269 = scmp.eq.s32.totalorder %s33, 0
      %p270 = por %p268, %p269
      %s272 = sadd.s32 %s271, 1
      %p275 = scmp.eq.s32.totalorder %s27, 1
      %p276 = scmp.ne.s32.totalorder %s271, %s273
      %p277 = scmp.eq.s32.totalorder %s27, 0
      %p278 = por %p276, %p277
      %p279 = scmp.ne.s32.totalorder %s271, %s273
      %p280 = scmp.eq.s32.totalorder %s32, 1
      %p281 = por %p279, %p280
      %p282 = scmp.ne.s32.totalorder %s273, %s274
      %p283 = scmp.eq.s32.totalorder %s32, 0
      %p284 = por %p282, %p283
      %p285 = scmp.ne.s32.totalorder %s273, %s274
      %p286 = scmp.eq.s32.totalorder %s33, 1
      %p287 = por %p285, %p286
      %p289 = scmp.ne.s32.totalorder %s274, %s288
      %p290 = scmp.eq.s32.totalorder %s33, 0
      %p291 = por %p289, %p290
      %s293 = sadd.s32 %s292, 1
      %p296 = scmp.eq.s32.totalorder %s27, 1
      %p297 = scmp.ne.s32.totalorder %s292, %s294
      %p298 = scmp.eq.s32.totalorder %s27, 0
      %p299 = por %p297, %p298
      %p300 = scmp.ne.s32.totalorder %s292, %s294
      %p301 = scmp.eq.s32.totalorder %s32, 1
      %p302 = por %p300, %p301
      %p303 = scmp.ne.s32.totalorder %s294, %s295
      %p304 = scmp.eq.s32.totalorder %s32, 0
      %p305 = por %p303, %p304
      %p306 = scmp.ne.s32.totalorder %s294, %s295
      %p307 = scmp.eq.s32.totalorder %s33, 1
      %p308 = por %p306, %p307
      %p310 = scmp.ne.s32.totalorder %s295, %s309
      %p311 = scmp.eq.s32.totalorder %s33, 0
      %p312 = por %p310, %p311
      %s314 = sadd.s32 %s313, 1
      %p317 = scmp.eq.s32.totalorder %s27, 1
      %p318 = scmp.ne.s32.totalorder %s313, %s315
      %p319 = scmp.eq.s32.totalorder %s27, 0
      %p320 = por %p318, %p319
      %p321 = scmp.ne.s32.totalorder %s313, %s315
      %p322 = scmp.eq.s32.totalorder %s32, 1
      %p323 = por %p321, %p322
      %p324 = scmp.ne.s32.totalorder %s315, %s316
      %p325 = scmp.eq.s32.totalorder %s32, 0
      %p326 = por %p324, %p325
      %p327 = scmp.ne.s32.totalorder %s315, %s316
      %p328 = scmp.eq.s32.totalorder %s33, 1
      %p329 = por %p327, %p328
      %p331 = scmp.ne.s32.totalorder %s316, %s330
      %p332 = scmp.eq.s32.totalorder %s33, 0
      %p333 = por %p331, %p332
      %s335 = sadd.s32 %s334, 1
      %p338 = scmp.eq.s32.totalorder %s27, 1
      %p339 = scmp.ne.s32.totalorder %s334, %s336
      %p340 = scmp.eq.s32.totalorder %s27, 0
      %p341 = por %p339, %p340
      %p342 = scmp.ne.s32.totalorder %s334, %s336
      %p343 = scmp.eq.s32.totalorder %s32, 1
      %p344 = por %p342, %p343
      %p345 = scmp.ne.s32.totalorder %s336, %s337
      %p346 = scmp.eq.s32.totalorder %s32, 0
      %p347 = por %p345, %p346
      %p348 = scmp.ne.s32.totalorder %s336, %s337
      %p349 = scmp.eq.s32.totalorder %s33, 1
      %p350 = por %p348, %p349
      %p352 = scmp.ne.s32.totalorder %s337, %s351
      %p353 = scmp.eq.s32.totalorder %s33, 0
      %p354 = por %p352, %p353
      %s355 = ssub.s32 %s27, %s34
      %p356 = scmp.eq.s32.totalorder %s355, 0
      %s358 = sadd.s32 %s357, 1
      %s359 = scalar_select %p356, %s357, %s358
      %p362 = pneg %p356
      %p363 = scmp.eq.s32.totalorder %s27, 1
      %p364 = por %p362, %p363
      %p365 = scmp.ne.s32.totalorder %s357, %s360
      %p366 = scmp.eq.s32.totalorder %s27, 0
      %p367 = por %p365, %p366
      %p368 = scmp.ne.s32.totalorder %s357, %s360
      %p369 = scmp.eq.s32.totalorder %s32, 1
      %p370 = por %p368, %p369
      %p371 = scmp.ne.s32.totalorder %s360, %s361
      %p372 = scmp.eq.s32.totalorder %s32, 0
      %p373 = por %p371, %p372
      %p374 = scmp.ne.s32.totalorder %s360, %s361
      %p375 = scmp.eq.s32.totalorder %s33, 1
      %p376 = por %p374, %p375
      %p378 = scmp.ne.s32.totalorder %s361, %s377
      %p379 = scmp.eq.s32.totalorder %s33, 0
      %p380 = por %p378, %p379
      %p381 = scmp.le.s32.totalorder 1, %s27
      %p382 = scmp.lt.s32.totalorder %s27, 3
      %p383 = pnand %p381, %p382
      %p384 = pneg %p383
      // Predicated region
      $region9: #{tpu_custom_call.1} parent=5 // pred_check
        _
      $region10: #{tpu_custom_call.1} parent=5 // pred_check_branch
        %386 = sbr.rel (%p383) target = $region12
      $region11: #{tpu_custom_call.1} parent=5 // pred_region
        %s387 = ssub.s32 %s27, 1
        // Predicated region
        $region13: #{tpu_custom_call.1} parent=11 // pred_check
          %p388 = pneg %p74
        $region14: #{tpu_custom_call.1} parent=11 // pred_check_branch
          %390 = sbr.rel (%p388) target = $region16
        $region15: #{tpu_custom_call.1} parent=11 // pred_region
          _
        $region16: #{tpu_custom_call.1} parent=11 // pred_fallthru
          _
        // Predicated region
        $region17: #{tpu_custom_call.1} parent=11 // pred_check
          %p391 = pneg %p95
        $region18: #{tpu_custom_call.1} parent=11 // pred_check_branch
          %393 = sbr.rel (%p391) target = $region20
        $region19: #{tpu_custom_call.1} parent=11 // pred_region
          _
        $region20: #{tpu_custom_call.1} parent=11 // pred_fallthru
          _
        // Predicated region
        $region21: #{tpu_custom_call.1} parent=11 // pred_check
          %p394 = pneg %p116
        $region22: #{tpu_custom_call.1} parent=11 // pred_check_branch
          %396 = sbr.rel (%p394) target = $region24
        $region23: #{tpu_custom_call.1} parent=11 // pred_region
          _
        $region24: #{tpu_custom_call.1} parent=11 // pred_fallthru
          _
        // Predicated region
        $region25: #{tpu_custom_call.1} parent=11 // pred_check
          %p397 = pneg %p137
        $region26: #{tpu_custom_call.1} parent=11 // pred_check_branch
          %399 = sbr.rel (%p397) target = $region28
        $region27: #{tpu_custom_call.1} parent=11 // pred_region
          _
        $region28: #{tpu_custom_call.1} parent=11 // pred_fallthru
          _
        // Predicated region
        $region29: #{tpu_custom_call.1} parent=11 // pred_check
          %p400 = pneg %p158
        $region30: #{tpu_custom_call.1} parent=11 // pred_check_branch
          %402 = sbr.rel (%p400) target = $region32
        $region31: #{tpu_custom_call.1} parent=11 // pred_region
          _
        $region32: #{tpu_custom_call.1} parent=11 // pred_fallthru
          _
        // Predicated region
        $region33: #{tpu_custom_call.1} parent=11 // pred_check
          %p403 = pneg %p179
        $region34: #{tpu_custom_call.1} parent=11 // pred_check_branch
          %405 = sbr.rel (%p403) target = $region36
        $region35: #{tpu_custom_call.1} parent=11 // pred_region
          _
        $region36: #{tpu_custom_call.1} parent=11 // pred_fallthru
          _
        // Predicated region
        $region37: #{tpu_custom_call.1} parent=11 // pred_check
          %p406 = pneg %p200
        $region38: #{tpu_custom_call.1} parent=11 // pred_check_branch
          %408 = sbr.rel (%p406) target = $region40
        $region39: #{tpu_custom_call.1} parent=11 // pred_region
          _
        $region40: #{tpu_custom_call.1} parent=11 // pred_fallthru
          _
        // Predicated region
        $region41: #{tpu_custom_call.1} parent=11 // pred_check
          %p409 = pneg %p221
        $region42: #{tpu_custom_call.1} parent=11 // pred_check_branch
          %411 = sbr.rel (%p409) target = $region44
        $region43: #{tpu_custom_call.1} parent=11 // pred_region
          _
        $region44: #{tpu_custom_call.1} parent=11 // pred_fallthru
          _
        // Predicated region
        $region45: #{tpu_custom_call.1} parent=11 // pred_check
          %p412 = pneg %p242
        $region46: #{tpu_custom_call.1} parent=11 // pred_check_branch
          %414 = sbr.rel (%p412) target = $region48
        $region47: #{tpu_custom_call.1} parent=11 // pred_region
          _
        $region48: #{tpu_custom_call.1} parent=11 // pred_fallthru
          _
        // Predicated region
        $region49: #{tpu_custom_call.1} parent=11 // pred_check
          %p415 = pneg %p263
        $region50: #{tpu_custom_call.1} parent=11 // pred_check_branch
          %417 = sbr.rel (%p415) target = $region52
        $region51: #{tpu_custom_call.1} parent=11 // pred_region
          _
        $region52: #{tpu_custom_call.1} parent=11 // pred_fallthru
          _
        // Predicated region
        $region53: #{tpu_custom_call.1} parent=11 // pred_check
          %p418 = pneg %p284
        $region54: #{tpu_custom_call.1} parent=11 // pred_check_branch
          %420 = sbr.rel (%p418) target = $region56
        $region55: #{tpu_custom_call.1} parent=11 // pred_region
          _
        $region56: #{tpu_custom_call.1} parent=11 // pred_fallthru
          _
        // Predicated region
        $region57: #{tpu_custom_call.1} parent=11 // pred_check
          %p421 = pneg %p305
        $region58: #{tpu_custom_call.1} parent=11 // pred_check_branch
          %423 = sbr.rel (%p421) target = $region60
        $region59: #{tpu_custom_call.1} parent=11 // pred_region
          _
        $region60: #{tpu_custom_call.1} parent=11 // pred_fallthru
          _
        // Predicated region
        $region61: #{tpu_custom_call.1} parent=11 // pred_check
          %p424 = pneg %p326
        $region62: #{tpu_custom_call.1} parent=11 // pred_check_branch
          %426 = sbr.rel (%p424) target = $region64
        $region63: #{tpu_custom_call.1} parent=11 // pred_region
          _
        $region64: #{tpu_custom_call.1} parent=11 // pred_fallthru
          _
        // Predicated region
        $region65: #{tpu_custom_call.1} parent=11 // pred_check
          %p427 = pneg %p347
        $region66: #{tpu_custom_call.1} parent=11 // pred_check_branch
          %429 = sbr.rel (%p427) target = $region68
        $region67: #{tpu_custom_call.1} parent=11 // pred_region
          _
        $region68: #{tpu_custom_call.1} parent=11 // pred_fallthru
          _
      $region12: #{tpu_custom_call.1} parent=5 // pred_fallthru
        _
      %p430 = scmp.lt.s32.totalorder %s27, 2
      // Predicated region
      $region69: #{tpu_custom_call.1} parent=5 // pred_check
        %p431 = pneg %p430
      $region70: #{tpu_custom_call.1} parent=5 // pred_check_branch
        %433 = sbr.rel (%p431) target = $region72
      $region71: #{tpu_custom_call.1} parent=5 // pred_region
        // Predicated region
        $region73: #{tpu_custom_call.1} parent=71 // pred_check
          %p434 = pneg %p47
        $region74: #{tpu_custom_call.1} parent=71 // pred_check_branch
          %436 = sbr.rel (%p434) target = $region76
        $region75: #{tpu_custom_call.1} parent=71 // pred_region
          %s437 = sand.u32 %s37, 1
          %s438 = scalar_lea.sflag [#allocation8], %s437
          %s439 = sand.u32 %s37, 1
          %s440 = smul.addr %s439, 16
          %s441 = scalar_lea.vmem [#allocation7], %s440
          %s443 = ssub.s32 256, 256
          %444 = vsyncadd %s438, %s443
          %s445 = smul.addr %s27, 2
          %s446 = smul.addr %s445, 128
          %s447 = scalar_lea.hbm %s0, %s446
          %s448 = sshll.u32 %s441, 4
          %s449 = int_to_ptr.vmem [resolvable:$true] %s448
          %454 = dma.hbm_to_vmem [thread:$0]  %s447, 256, %s449, %s438, 128, 128, 8
        $region76: #{tpu_custom_call.1} parent=71 // pred_fallthru
          _
      $region72: #{tpu_custom_call.1} parent=5 // pred_fallthru
        _
      %p455 = scmp.le.s32.totalorder 1, %s27
      %p456 = scmp.lt.s32.totalorder %s27, 3
      %p457 = pnand %p455, %p456
      %p458 = pneg %p457
      // Predicated region
      $region77: #{tpu_custom_call.1} parent=5 // pred_check
        _
      $region78: #{tpu_custom_call.1} parent=5 // pred_check_branch
        %460 = sbr.rel (%p457) target = $region80
      $region79: #{tpu_custom_call.1} parent=5 // pred_region
        %s461 = ssub.s32 %s27, 1
        %s462 = sand.u32 %s40, 1
        %s463 = scalar_lea.sflag [#allocation8], %s462
        %s464 = sand.u32 %s40, 1
        %s465 = smul.addr %s464, 16
        %s466 = scalar_lea.vmem [#allocation7], %s465
        // Predicated region
        $region81: #{tpu_custom_call.1} parent=79 // pred_check
          %p467 = pneg %p53
        $region82: #{tpu_custom_call.1} parent=79 // pred_check_branch
          %469 = sbr.rel (%p467) target = $region84
        $region83: #{tpu_custom_call.1} parent=79 // pred_region
          %470 = dma.done %s463, 256
        $region84: #{tpu_custom_call.1} parent=79 // pred_fallthru
          _
        %s471 = sand.u32 %s40, 1
        %s472 = scalar_lea.sflag [#allocation8], %s471
        %s473 = sand.u32 %s40, 1
        %s474 = smul.addr %s473, 16
        %s475 = scalar_lea.vmem [#allocation7], %s474
        %p476 = pneg %p53
        %p477 = pneg %p50
        %p478 = pneg %p74
        %p479 = pneg %p71
        %p480 = pneg %p95
        %p481 = pneg %p92
        %p482 = pneg %p116
        %p483 = pneg %p113
        %p484 = pneg %p137
        %p485 = pneg %p134
        %p486 = pneg %p158
        %p487 = pneg %p155
        %p488 = pneg %p179
        %p489 = pneg %p176
        %p490 = pneg %p200
        %p491 = pneg %p197
        %p492 = pneg %p221
        %p493 = pneg %p218
        %p494 = pneg %p242
        %p495 = pneg %p239
        %p496 = pneg %p263
        %p497 = pneg %p260
        %p498 = pneg %p284
        %p499 = pneg %p281
        %p500 = pneg %p305
        %p501 = pneg %p302
        %p502 = pneg %p326
        %p503 = pneg %p323
        %p504 = pneg %p347
        %p505 = pneg %p344
        %p506 = pneg %p373
        %p507 = pneg %p370
        %s508 = sand.u32 %s360, 1
        %s509 = scalar_lea.sflag [#allocation9], %s508
        %s510 = sand.u32 %s360, 1
        %s511 = smul.addr %s510, 16
        %s512 = scalar_lea.vmem [#allocation10], %s511
        %v513 = vld [vmem:[%s466] sm:$0xff]
        %v514 = vld [vmem:[%s466 + $0x8] sm:$0xff]
        %v515 = vld [vmem:[%s8] sm:$0xff]
        %v516 = vld [vmem:[%s1] sm:$0x1]
        %v517 = vld [vmem:[%s2] sm:$0x1]
        %518 = vadd.xlane.f32.xlu0 %v513
        %v519 = vpop.xlane.xlu0 %518
        %520 = vadd.xlane.f32.xlu0 %v514
        %v521 = vpop.xlane.xlu0 %520
        %v522 = vrcp.pop 128.0
        %v523 = vmul.f32 %v519, %v522
        %v524 = vmul.f32 %v521, %v522
        %v525 = vsub.f32 %v513, %v523
        %v526 = vsub.f32 %v514, %v524
        %v527 = vmul.f32 %v525, %v525
        %v528 = vmul.f32 %v526, %v526
        %529 = vadd.xlane.f32.xlu0 %v527
        %v530 = vpop.xlane.xlu0 %529
        %531 = vadd.xlane.f32.xlu0 %v528
        %v532 = vpop.xlane.xlu0 %531
        %v533 = vmul.f32 %v530, %v522
        %v534 = vmul.f32 %v532, %v522
        %v535 = vadd.f32 %v533, 1e-05
        %v536 = vadd.f32 %v534, 1e-05
        %v537 = vrsqrt.pop %v535
        %v538 = vrsqrt.pop %v536
        %v539 = vmul.f32 %v525, %v537
        %v540 = vmul.f32 %v526, %v538
        %v542 = vlaneseq
        %v543 = vshrl.u32 %v542, 7
        %v544 = vsub.s32 0, %v543
        %v545 = vrot.slane %v516, %v544
        %v547 = vmul.f32 %v539, %v545
        %v548 = vmul.f32 %v540, %v545
        %v550 = vlaneseq
        %v551 = vshrl.u32 %v550, 7
        %v552 = vsub.s32 0, %v551
        %v553 = vrot.slane %v517, %v552
        %v555 = vadd.f32 %v547, %v553
        %v556 = vadd.f32 %v548, %v553
        %v557 = vld [vmem:[%s3] sm:$0xff]
        %v558 = vld [vmem:[%s3 + $0x8] sm:$0xff]
        %v559 = vld [vmem:[%s3 + $0x10] sm:$0xff]
        %v560 = vld [vmem:[%s3 + $0x18] sm:$0xff]
        %v561 = vld [vmem:[%s3 + $0x20] sm:$0xff]
        %v562 = vld [vmem:[%s3 + $0x28] sm:$0xff]
        %v563 = vld [vmem:[%s3 + $0x30] sm:$0xff]
        %v564 = vld [vmem:[%s3 + $0x38] sm:$0xff]
        %v565 = vld [vmem:[%s3 + $0x40] sm:$0xff]
        %v566 = vld [vmem:[%s3 + $0x48] sm:$0xff]
        %v567 = vld [vmem:[%s3 + $0x50] sm:$0xff]
        %v568 = vld [vmem:[%s3 + $0x58] sm:$0xff]
        %v569 = vld [vmem:[%s3 + $0x60] sm:$0xff]
        %v570 = vld [vmem:[%s3 + $0x68] sm:$0xff]
        %v571 = vld [vmem:[%s3 + $0x70] sm:$0xff]
        %v572 = vld [vmem:[%s3 + $0x78] sm:$0xff]
        %v573 = vld [vmem:[%s3 + $0x80] sm:$0xff]
        %v574 = vld [vmem:[%s3 + $0x88] sm:$0xff]
        %v575 = vld [vmem:[%s3 + $0x90] sm:$0xff]
        %v576 = vld [vmem:[%s3 + $0x98] sm:$0xff]
        %v577 = vld [vmem:[%s3 + $0xa0] sm:$0xff]
        %v578 = vld [vmem:[%s3 + $0xa8] sm:$0xff]
        %v579 = vld [vmem:[%s3 + $0xb0] sm:$0xff]
        %v580 = vld [vmem:[%s3 + $0xb8] sm:$0xff]
        %v581 = vld [vmem:[%s3 + $0xc0] sm:$0xff]
        %v582 = vld [vmem:[%s3 + $0xc8] sm:$0xff]
        %v583 = vld [vmem:[%s3 + $0xd0] sm:$0xff]
        %v584 = vld [vmem:[%s3 + $0xd8] sm:$0xff]
        %v585 = vld [vmem:[%s3 + $0xe0] sm:$0xff]
        %v586 = vld [vmem:[%s3 + $0xe8] sm:$0xff]
        %v587 = vld [vmem:[%s3 + $0xf0] sm:$0xff]
        %v588 = vld [vmem:[%s3 + $0xf8] sm:$0xff]
        %v589 = vld [vmem:[%s4] sm:$0x3]
        %v591 = vlaneseq
        %v592 = vshrl.u32 %v591, 7
        %v593 = vsub.s32 0, %v592
        %v594 = vrot.slane %v589, %v593
        %v595 = vlaneseq
        %v596 = vshrl.u32 %v595, 7
        %v597 = vsub.s32 1, %v596
        %v598 = vrot.slane %v589, %v597
        %601 = vmatprep.subr.mxu0 %v558
        %602 = vmatpush1.msra.mxu0 %v557
        %603 = vmatprep.subr.mxu0 %v560
        %604 = vmatpush1.msra.mxu0 %v559
        %605 = vmatprep.subr.mxu0 %v562
        %606 = vmatpush1.msra.mxu0 %v561
        %607 = vmatprep.subr.mxu0 %v564
        %608 = vmatpush1.msra.mxu0 %v563
        %609 = vmatprep.subr.mxu0 %v566
        %610 = vmatpush1.msra.mxu0 %v565
        %611 = vmatprep.subr.mxu0 %v568
        %612 = vmatpush1.msra.mxu0 %v567
        %613 = vmatprep.subr.mxu0 %v570
        %614 = vmatpush1.msra.mxu0 %v569
        %615 = vmatprep.subr.mxu0 %v572
        %616 = vmatpush1.msra.mxu0 %v571
        %617 = vmatprep.subr.mxu0 %v574
        %618 = vmatpush1.msra.mxu0 %v573
        %619 = vmatprep.subr.mxu0 %v576
        %620 = vmatpush1.msra.mxu0 %v575
        %621 = vmatprep.subr.mxu0 %v578
        %622 = vmatpush1.msra.mxu0 %v577
        %623 = vmatprep.subr.mxu0 %v580
        %624 = vmatpush1.msra.mxu0 %v579
        %625 = vmatprep.subr.mxu0 %v582
        %626 = vmatpush1.msra.mxu0 %v581
        %627 = vmatprep.subr.mxu0 %v584
        %628 = vmatpush1.msra.mxu0 %v583
        %629 = vmatprep.subr.mxu0 %v586
        %630 = vmatpush1.msra.mxu0 %v585
        %631 = vmatprep.subr.mxu0 %v588
        %632 = vmatpush1.msra.mxu0 %v587
        %633 = vmatprep.subr.mxu0 0.0
        %634 = vmatpush1.msra.mxu0 0.0
        %635 = vmatprep.subr.mxu0 0.0
        %636 = vmatpush1.msra.mxu0 0.0
        %637 = vmatprep.subr.mxu0 0.0
        %638 = vmatpush1.msra.mxu0 0.0
        %639 = vmatprep.subr.mxu0 0.0
        %640 = vmatpush1.msra.mxu0 0.0
        %641 = vmatprep.subr.mxu0 0.0
        %642 = vmatpush1.msra.mxu0 0.0
        %643 = vmatprep.subr.mxu0 0.0
        %644 = vmatpush1.msra.mxu0 0.0
        %645 = vmatprep.subr.mxu0 0.0
        %646 = vmatpush1.msra.mxu0 0.0
        %647 = vmatprep.subr.mxu0 0.0
        %648 = vmatpush1.msra.mxu0 0.0
        %649 = vmatprep.subr.mxu0 0.0
        %650 = vmatpush1.msra.mxu0 0.0
        %651 = vmatprep.subr.mxu0 0.0
        %652 = vmatpush1.msra.mxu0 0.0
        %653 = vmatprep.subr.mxu0 0.0
        %654 = vmatpush1.msra.mxu0 0.0
        %655 = vmatprep.subr.mxu0 0.0
        %656 = vmatpush1.msra.mxu0 0.0
        %657 = vmatprep.subr.mxu0 0.0
        %658 = vmatpush1.msra.mxu0 0.0
        %659 = vmatprep.subr.mxu0 0.0
        %660 = vmatpush1.msra.mxu0 0.0
        %661 = vmatprep.subr.mxu0 0.0
        %662 = vmatpush1.msra.mxu0 0.0
        %663 = vmatprep.subr.mxu0 0.0
        %664 = vmatpush1.msra.mxu0 0.0
        %665 = vmatprep.mubr.f32.mxu0 0.0
        %666 = vmatmul.mubr.f32.gmra.mrb[0].mxu0 %v555
        %v667 = vpop.f32.mrb[0].mxu0
        %v668 = vadd.f32 %v594, %v667
        %v669 = vpop.f32.mrb[0].mxu0
        %v670 = vadd.f32 %v598, %v669
        %671 = vmatprep.mubr.f32.mxu0 0.0
        %672 = vmatmul.mubr.f32.gmra.mrb[0].mxu0 %v556
        %v673 = vpop.f32.mrb[0].mxu0
        %v674 = vadd.f32 %v594, %v673
        %v675 = vpop.f32.mrb[0].mxu0
        %v676 = vadd.f32 %v598, %v675
        %677 = vdwg.mxu0
        %v678 = vsub.f32 0.0, %v668
        %v679 = vsub.f32 0.0, %v674
        %v680 = vmul.f32 %v678, 1.442695
        %v681 = vpow.pop %v680
        %v682 = vmul.f32 %v679, 1.442695
        %v683 = vpow.pop %v682
        %v684 = vadd.f32 %v681, 1.0
        %v685 = vadd.f32 %v683, 1.0
        %v686 = vrcp.pop %v684
        %v687 = vmul.f32 1.0, %v686
        %v688 = vrcp.pop %v685
        %v689 = vmul.f32 1.0, %v688
        %v690 = vmul.f32 %v668, %v687
        %v691 = vmul.f32 %v674, %v689
        %v692 = vsub.f32 0.0, %v670
        %v693 = vsub.f32 0.0, %v676
        %v694 = vmul.f32 %v692, 1.442695
        %v695 = vpow.pop %v694
        %v696 = vmul.f32 %v693, 1.442695
        %v697 = vpow.pop %v696
        %v698 = vadd.f32 %v695, 1.0
        %v699 = vadd.f32 %v697, 1.0
        %v700 = vrcp.pop %v698
        %v701 = vmul.f32 1.0, %v700
        %v702 = vrcp.pop %v699
        %v703 = vmul.f32 1.0, %v702
        %v704 = vmul.f32 %v670, %v701
        %v705 = vmul.f32 %v676, %v703
        %v706 = vld [vmem:[%s5] sm:$0xff]
        %v707 = vld [vmem:[%s5 + $0x8] sm:$0xff]
        %v708 = vld [vmem:[%s5 + $0x10] sm:$0xff]
        %v709 = vld [vmem:[%s5 + $0x18] sm:$0xff]
        %v710 = vld [vmem:[%s5 + $0x20] sm:$0xff]
        %v711 = vld [vmem:[%s5 + $0x28] sm:$0xff]
        %v712 = vld [vmem:[%s5 + $0x30] sm:$0xff]
        %v713 = vld [vmem:[%s5 + $0x38] sm:$0xff]
        %v714 = vld [vmem:[%s5 + $0x40] sm:$0xff]
        %v715 = vld [vmem:[%s5 + $0x48] sm:$0xff]
        %v716 = vld [vmem:[%s5 + $0x50] sm:$0xff]
        %v717 = vld [vmem:[%s5 + $0x58] sm:$0xff]
        %v718 = vld [vmem:[%s5 + $0x60] sm:$0xff]
        %v719 = vld [vmem:[%s5 + $0x68] sm:$0xff]
        %v720 = vld [vmem:[%s5 + $0x70] sm:$0xff]
        %v721 = vld [vmem:[%s5 + $0x78] sm:$0xff]
        %v722 = vld [vmem:[%s5 + $0x80] sm:$0xff]
        %v723 = vld [vmem:[%s5 + $0x88] sm:$0xff]
        %v724 = vld [vmem:[%s5 + $0x90] sm:$0xff]
        %v725 = vld [vmem:[%s5 + $0x98] sm:$0xff]
        %v726 = vld [vmem:[%s5 + $0xa0] sm:$0xff]
        %v727 = vld [vmem:[%s5 + $0xa8] sm:$0xff]
        %v728 = vld [vmem:[%s5 + $0xb0] sm:$0xff]
        %v729 = vld [vmem:[%s5 + $0xb8] sm:$0xff]
        %v730 = vld [vmem:[%s5 + $0xc0] sm:$0xff]
        %v731 = vld [vmem:[%s5 + $0xc8] sm:$0xff]
        %v732 = vld [vmem:[%s5 + $0xd0] sm:$0xff]
        %v733 = vld [vmem:[%s5 + $0xd8] sm:$0xff]
        %v734 = vld [vmem:[%s5 + $0xe0] sm:$0xff]
        %v735 = vld [vmem:[%s5 + $0xe8] sm:$0xff]
        %v736 = vld [vmem:[%s5 + $0xf0] sm:$0xff]
        %v737 = vld [vmem:[%s5 + $0xf8] sm:$0xff]
        %v738 = vld [vmem:[%s6] sm:$0x3]
        %v740 = vlaneseq
        %v741 = vshrl.u32 %v740, 7
        %v742 = vsub.s32 0, %v741
        %v743 = vrot.slane %v738, %v742
        %v744 = vlaneseq
        %v745 = vshrl.u32 %v744, 7
        %v746 = vsub.s32 1, %v745
        %v747 = vrot.slane %v738, %v746
        %750 = vmatprep.subr.mxu0 %v707
        %751 = vmatpush1.msra.mxu0 %v706
        %752 = vmatprep.subr.mxu0 %v709
        %753 = vmatpush1.msra.mxu0 %v708
        %754 = vmatprep.subr.mxu0 %v711
        %755 = vmatpush1.msra.mxu0 %v710
        %756 = vmatprep.subr.mxu0 %v713
        %757 = vmatpush1.msra.mxu0 %v712
        %758 = vmatprep.subr.mxu0 %v715
        %759 = vmatpush1.msra.mxu0 %v714
        %760 = vmatprep.subr.mxu0 %v717
        %761 = vmatpush1.msra.mxu0 %v716
        %762 = vmatprep.subr.mxu0 %v719
        %763 = vmatpush1.msra.mxu0 %v718
        %764 = vmatprep.subr.mxu0 %v721
        %765 = vmatpush1.msra.mxu0 %v720
        %766 = vmatprep.subr.mxu0 %v723
        %767 = vmatpush1.msra.mxu0 %v722
        %768 = vmatprep.subr.mxu0 %v725
        %769 = vmatpush1.msra.mxu0 %v724
        %770 = vmatprep.subr.mxu0 %v727
        %771 = vmatpush1.msra.mxu0 %v726
        %772 = vmatprep.subr.mxu0 %v729
        %773 = vmatpush1.msra.mxu0 %v728
        %774 = vmatprep.subr.mxu0 %v731
        %775 = vmatpush1.msra.mxu0 %v730
        %776 = vmatprep.subr.mxu0 %v733
        %777 = vmatpush1.msra.mxu0 %v732
        %778 = vmatprep.subr.mxu0 %v735
        %779 = vmatpush1.msra.mxu0 %v734
        %780 = vmatprep.subr.mxu0 %v737
        %781 = vmatpush1.msra.mxu0 %v736
        %782 = vmatprep.subr.mxu0 0.0
        %783 = vmatpush1.msra.mxu0 0.0
        %784 = vmatprep.subr.mxu0 0.0
        %785 = vmatpush1.msra.mxu0 0.0
        %786 = vmatprep.subr.mxu0 0.0
        %787 = vmatpush1.msra.mxu0 0.0
        %788 = vmatprep.subr.mxu0 0.0
        %789 = vmatpush1.msra.mxu0 0.0
        %790 = vmatprep.subr.mxu0 0.0
        %791 = vmatpush1.msra.mxu0 0.0
        %792 = vmatprep.subr.mxu0 0.0
        %793 = vmatpush1.msra.mxu0 0.0
        %794 = vmatprep.subr.mxu0 0.0
        %795 = vmatpush1.msra.mxu0 0.0
        %796 = vmatprep.subr.mxu0 0.0
        %797 = vmatpush1.msra.mxu0 0.0
        %798 = vmatprep.subr.mxu0 0.0
        %799 = vmatpush1.msra.mxu0 0.0
        %800 = vmatprep.subr.mxu0 0.0
        %801 = vmatpush1.msra.mxu0 0.0
        %802 = vmatprep.subr.mxu0 0.0
        %803 = vmatpush1.msra.mxu0 0.0
        %804 = vmatprep.subr.mxu0 0.0
        %805 = vmatpush1.msra.mxu0 0.0
        %806 = vmatprep.subr.mxu0 0.0
        %807 = vmatpush1.msra.mxu0 0.0
        %808 = vmatprep.subr.mxu0 0.0
        %809 = vmatpush1.msra.mxu0 0.0
        %810 = vmatprep.subr.mxu0 0.0
        %811 = vmatpush1.msra.mxu0 0.0
        %812 = vmatprep.subr.mxu0 0.0
        %813 = vmatpush1.msra.mxu0 0.0
        %814 = vmatprep.mubr.f32.mxu0 0.0
        %815 = vmatmul.mubr.f32.gmra.mrb[0].mxu0 %v690
        %v816 = vpop.f32.mrb[0].mxu0
        %v817 = vadd.f32 %v743, %v816
        %v818 = vpop.f32.mrb[0].mxu0
        %v819 = vadd.f32 %v747, %v818
        %820 = vmatprep.mubr.f32.mxu0 0.0
        %821 = vmatmul.mubr.f32.gmra.mrb[0].mxu0 %v691
        %v822 = vpop.f32.mrb[0].mxu0
        %v823 = vadd.f32 %v743, %v822
        %v824 = vpop.f32.mrb[0].mxu0
        %v825 = vadd.f32 %v747, %v824
        %826 = vdwg.mxu0
        %v827 = vld [vmem:[%s7] sm:$0x1]
        %v829 = vlaneseq
        %v830 = vshrl.u32 %v829, 7
        %v831 = vsub.s32 0, %v830
        %v832 = vrot.slane %v827, %v831
        %v834 = vadd.f32 %v817, %v832
        %v835 = vadd.f32 %v823, %v832
        %v836 = vmin.f32 %v834, 20.0
        %v837 = vmin.f32 %v835, 20.0
        %vm838 = vcmp.gt.f32.partialorder %v834, 20.0
        %vm839 = vcmp.gt.f32.partialorder %v835, 20.0
        %v840 = vmul.f32 %v836, 1.442695
        %v841 = vpow.pop %v840
        %v842 = vmul.f32 %v837, 1.442695
        %v843 = vpow.pop %v842
        %v844 = vadd.f32 %v841, 1.0
        %v845 = vadd.f32 %v843, 1.0
        %v846 = vlog2.pop %v844
        %v847 = vmul.f32 %v846, 0.6931472
        %v848 = vlog2.pop %v845
        %v849 = vmul.f32 %v848, 0.6931472
        %v850 = vsel %vm838, %v834, %v847
        %v851 = vsel %vm839, %v835, %v849
        %852 = vst [vmem:[#allocation2] sm:$0xff] %v850
        %853 = vst [vmem:[#allocation2 + $0x8] sm:$0xff] %v851
        %v854 = vmul.f32 %v850, %v690
        %v855 = vmul.f32 %v851, %v691
        %856 = vst [vmem:[#allocation3] sm:$0xff] %v854
        %857 = vst [vmem:[#allocation3 + $0x8] sm:$0xff] %v855
        %vm858 = vcmask 64512
        %859 = vst.msk [vmem:[#allocation4] sm:$0xff] %vm858, %v819
        %860 = vst.msk [vmem:[#allocation4 + $0x8] sm:$0xff] %vm858, %v825
        %863 = vrot.lane.b32.xlu0 %v819, 120
        %v864 = vpop.permute.xlu0 %863
        %865 = vrot.lane.b32.xlu0 %v825, 120
        %v866 = vpop.permute.xlu0 %865
        %869 = vst.msk [vmem:[#allocation5] sm:$0xff] %vm858, %v864
        %870 = vst.msk [vmem:[#allocation5 + $0x8] sm:$0xff] %vm858, %v866
        %v871 = vld [vmem:[%s10] sm:$0x3]
        %vm872 = vcmask 1041408
        %v873 = vsel %vm872, %v871, 0.0
        %v874 = vrot.slane %v873, 4
        %v875 = vadd.f32 %v873, %v874
        %v876 = vrot.slane %v875, 2
        %v877 = vadd.f32 %v875, %v876
        %v878 = vrot.slane %v877, 1
        %v879 = vadd.f32 %v877, %v878
        %v880 = vld [vmem:[%s9] sm:$0x1]
        %v881 = vmul.f32 %v879, %v880
        %v882 = vlaneseq
        %v883 = vshrl.u32 %v882, 7
        %v884 = vsub.s32 0, %v883
        %v885 = vrot.slane %v881, %v884
        %v886 = vmul.f32 %v885, %v690
        %v887 = vmul.f32 %v885, %v691
        %888 = vst [vmem:[#allocation6] sm:$0xff] %v886
        %889 = vst [vmem:[#allocation6 + $0x8] sm:$0xff] %v887
        loop: start=0, step=1, limit=2
        $region85: #{tpu_custom_call.1} parent=79 // loop_pre_header
          _
        $region86: #{tpu_custom_call.1} parent=79 // loop_header
          %s891 = sphi 0, %s895
          %p892 = scmp.ge.s32.totalorder %s891, 2
          %v896 = vphi 0.0, %v1700
        $region87: #{tpu_custom_call.1} parent=79 // loop_header_branch
          %894 = sbr.rel (%p892) target = $region91
        $region88: #{tpu_custom_call.1} parent=79 // loop_body
          %s897 = smul.u32 %s891, 8
          %s898 = scalar_lea.vmem [#allocation2], %s897
          %v899 = vld [vmem:[%s898] sm:$0xff]
          %s900 = scalar_lea.vmem [#allocation3], %s897
          %v901 = vld [vmem:[%s900] sm:$0xff]
          %s902 = scalar_lea.vmem [#allocation4], %s897
          %v903 = vld [vmem:[%s902] sm:$0xff]
          %s904 = scalar_lea.vmem [#allocation5], %s897
          %v905 = vld [vmem:[%s904] sm:$0xff]
          %v907 = vcombine.high %v899, %v899
          %v909 = vunpack.c.l.s4 1966171168
          %v910 = vunpack.c.0.s8 %v909
          %v911 = vlaneseq
          %v912 = vshrl.u32 %v911, 7
          %v913 = vsub.s32 %v910, %v912
          %v914 = vrot.slane %v899, %v913
          %v916 = vunpack.c.l.s4 1966171168
          %v917 = vunpack.c.0.s8 %v916
          %v918 = vlaneseq
          %v919 = vshrl.u32 %v918, 7
          %v920 = vsub.s32 %v917, %v919
          %v921 = vrot.slane %v907, %v920
          %v922 = vcombine.high %v914, %v914
          %v923 = vcombine.high %v921, %v921
          %v925 = vunpack.c.l.s4 1966171168
          %v926 = vunpack.c.0.s8 %v925
          %v927 = vlaneseq
          %v928 = vshrl.u32 %v927, 7
          %v929 = vsub.s32 %v926, %v928
          %v930 = vrot.slane %v914, %v929
          %v932 = vunpack.c.l.s4 1966171168
          %v933 = vunpack.c.0.s8 %v932
          %v934 = vlaneseq
          %v935 = vshrl.u32 %v934, 7
          %v936 = vsub.s32 %v933, %v935
          %v937 = vrot.slane %v921, %v936
          %v939 = vunpack.c.l.s4 1966171168
          %v940 = vunpack.c.0.s8 %v939
          %v941 = vlaneseq
          %v942 = vshrl.u32 %v941, 7
          %v943 = vsub.s32 %v940, %v942
          %v944 = vrot.slane %v922, %v943
          %v946 = vunpack.c.l.s4 1966171168
          %v947 = vunpack.c.0.s8 %v946
          %v948 = vlaneseq
          %v949 = vshrl.u32 %v948, 7
          %v950 = vsub.s32 %v947, %v949
          %v951 = vrot.slane %v923, %v950
          %v952 = vcombine.high %v930, %v930
          %v953 = vcombine.high %v937, %v937
          %v954 = vcombine.high %v944, %v944
          %v955 = vcombine.high %v951, %v951
          %v956 = vlaneseq
          %v957 = vshrl.u32 %v956, 7
          %v958 = vsub.s32 0, %v957
          %v959 = vrot.slane %v930, %v958
          %v960 = vlaneseq
          %v961 = vshrl.u32 %v960, 7
          %v962 = vsub.s32 0, %v961
          %v963 = vrot.slane %v944, %v962
          %v964 = vlaneseq
          %v965 = vshrl.u32 %v964, 7
          %v966 = vsub.s32 0, %v965
          %v967 = vrot.slane %v952, %v966
          %v968 = vlaneseq
          %v969 = vshrl.u32 %v968, 7
          %v970 = vsub.s32 0, %v969
          %v971 = vrot.slane %v954, %v970
          %v972 = vlaneseq
          %v973 = vshrl.u32 %v972, 7
          %v974 = vsub.s32 0, %v973
          %v975 = vrot.slane %v937, %v974
          %v976 = vlaneseq
          %v977 = vshrl.u32 %v976, 7
          %v978 = vsub.s32 0, %v977
          %v979 = vrot.slane %v951, %v978
          %v980 = vlaneseq
          %v981 = vshrl.u32 %v980, 7
          %v982 = vsub.s32 0, %v981
          %v983 = vrot.slane %v953, %v982
          %v984 = vlaneseq
          %v985 = vshrl.u32 %v984, 7
          %v986 = vsub.s32 0, %v985
          %v987 = vrot.slane %v955, %v986
          %v996 = vmul.f32 %v959, %v515
          %v997 = vmul.f32 %v963, %v515
          %v998 = vmul.f32 %v967, %v515
          %v999 = vmul.f32 %v971, %v515
          %v1000 = vmul.f32 %v975, %v515
          %v1001 = vmul.f32 %v979, %v515
          %v1002 = vmul.f32 %v983, %v515
          %v1003 = vmul.f32 %v987, %v515
          %v1004 = vmul.f32 %v996, 1.442695
          %v1005 = vpow.pop %v1004
          %v1006 = vmul.f32 %v997, 1.442695
          %v1007 = vpow.pop %v1006
          %v1008 = vmul.f32 %v998, 1.442695
          %v1009 = vpow.pop %v1008
          %v1010 = vmul.f32 %v999, 1.442695
          %v1011 = vpow.pop %v1010
          %v1012 = vmul.f32 %v1000, 1.442695
          %v1013 = vpow.pop %v1012
          %v1014 = vmul.f32 %v1001, 1.442695
          %v1015 = vpow.pop %v1014
          %v1016 = vmul.f32 %v1002, 1.442695
          %v1017 = vpow.pop %v1016
          %v1018 = vmul.f32 %v1003, 1.442695
          %v1019 = vpow.pop %v1018
          %v1021 = vcombine.high %v901, %v901
          %v1023 = vunpack.c.l.s4 1966171168
          %v1024 = vunpack.c.0.s8 %v1023
          %v1025 = vlaneseq
          %v1026 = vshrl.u32 %v1025, 7
          %v1027 = vsub.s32 %v1024, %v1026
          %v1028 = vrot.slane %v901, %v1027
          %v1030 = vunpack.c.l.s4 1966171168
          %v1031 = vunpack.c.0.s8 %v1030
          %v1032 = vlaneseq
          %v1033 = vshrl.u32 %v1032, 7
          %v1034 = vsub.s32 %v1031, %v1033
          %v1035 = vrot.slane %v1021, %v1034
          %v1036 = vcombine.high %v1028, %v1028
          %v1037 = vcombine.high %v1035, %v1035
          %v1039 = vunpack.c.l.s4 1966171168
          %v1040 = vunpack.c.0.s8 %v1039
          %v1041 = vlaneseq
          %v1042 = vshrl.u32 %v1041, 7
          %v1043 = vsub.s32 %v1040, %v1042
          %v1044 = vrot.slane %v1028, %v1043
          %v1046 = vunpack.c.l.s4 1966171168
          %v1047 = vunpack.c.0.s8 %v1046
          %v1048 = vlaneseq
          %v1049 = vshrl.u32 %v1048, 7
          %v1050 = vsub.s32 %v1047, %v1049
          %v1051 = vrot.slane %v1035, %v1050
          %v1053 = vunpack.c.l.s4 1966171168
          %v1054 = vunpack.c.0.s8 %v1053
          %v1055 = vlaneseq
          %v1056 = vshrl.u32 %v1055, 7
          %v1057 = vsub.s32 %v1054, %v1056
          %v1058 = vrot.slane %v1036, %v1057
          %v1060 = vunpack.c.l.s4 1966171168
          %v1061 = vunpack.c.0.s8 %v1060
          %v1062 = vlaneseq
          %v1063 = vshrl.u32 %v1062, 7
          %v1064 = vsub.s32 %v1061, %v1063
          %v1065 = vrot.slane %v1037, %v1064
          %v1066 = vcombine.high %v1044, %v1044
          %v1067 = vcombine.high %v1051, %v1051
          %v1068 = vcombine.high %v1058, %v1058
          %v1069 = vcombine.high %v1065, %v1065
          %v1070 = vlaneseq
          %v1071 = vshrl.u32 %v1070, 7
          %v1072 = vsub.s32 0, %v1071
          %v1073 = vrot.slane %v903, %v1072
          %1075 = vbcast.lane.b32.xlu0 %v1073, 256
          %v1076 = vpop.permute.xlu0 %1075
          %v1077 = vlaneseq
          %v1078 = vshrl.u32 %v1077, 7
          %v1079 = vsub.s32 1, %v1078
          %v1080 = vrot.slane %v903, %v1079
          %1082 = vbcast.lane.b32.xlu0 %v1080, 256
          %v1083 = vpop.permute.xlu0 %1082
          %v1084 = vlaneseq
          %v1085 = vshrl.u32 %v1084, 7
          %v1086 = vsub.s32 2, %v1085
          %v1087 = vrot.slane %v903, %v1086
          %1089 = vbcast.lane.b32.xlu0 %v1087, 256
          %v1090 = vpop.permute.xlu0 %1089
          %v1091 = vlaneseq
          %v1092 = vshrl.u32 %v1091, 7
          %v1093 = vsub.s32 3, %v1092
          %v1094 = vrot.slane %v903, %v1093
          %1096 = vbcast.lane.b32.xlu0 %v1094, 256
          %v1097 = vpop.permute.xlu0 %1096
          %v1098 = vlaneseq
          %v1099 = vshrl.u32 %v1098, 7
          %v1100 = vsub.s32 4, %v1099
          %v1101 = vrot.slane %v903, %v1100
          %1103 = vbcast.lane.b32.xlu0 %v1101, 256
          %v1104 = vpop.permute.xlu0 %1103
          %v1105 = vlaneseq
          %v1106 = vshrl.u32 %v1105, 7
          %v1107 = vsub.s32 5, %v1106
          %v1108 = vrot.slane %v903, %v1107
          %1110 = vbcast.lane.b32.xlu0 %v1108, 256
          %v1111 = vpop.permute.xlu0 %1110
          %v1112 = vlaneseq
          %v1113 = vshrl.u32 %v1112, 7
          %v1114 = vsub.s32 6, %v1113
          %v1115 = vrot.slane %v903, %v1114
          %1117 = vbcast.lane.b32.xlu0 %v1115, 256
          %v1118 = vpop.permute.xlu0 %1117
          %v1119 = vlaneseq
          %v1120 = vshrl.u32 %v1119, 7
          %v1121 = vsub.s32 7, %v1120
          %v1122 = vrot.slane %v903, %v1121
          %1124 = vbcast.lane.b32.xlu0 %v1122, 256
          %v1125 = vpop.permute.xlu0 %1124
          %v1126 = vlaneseq
          %v1127 = vshrl.u32 %v1126, 7
          %v1128 = vsub.s32 0, %v1127
          %v1129 = vrot.slane %v1044, %v1128
          %v1130 = vlaneseq
          %v1131 = vshrl.u32 %v1130, 7
          %v1132 = vsub.s32 0, %v1131
          %v1133 = vrot.slane %v1058, %v1132
          %v1134 = vlaneseq
          %v1135 = vshrl.u32 %v1134, 7
          %v1136 = vsub.s32 0, %v1135
          %v1137 = vrot.slane %v1066, %v1136
          %v1138 = vlaneseq
          %v1139 = vshrl.u32 %v1138, 7
          %v1140 = vsub.s32 0, %v1139
          %v1141 = vrot.slane %v1068, %v1140
          %v1142 = vlaneseq
          %v1143 = vshrl.u32 %v1142, 7
          %v1144 = vsub.s32 0, %v1143
          %v1145 = vrot.slane %v1051, %v1144
          %v1146 = vlaneseq
          %v1147 = vshrl.u32 %v1146, 7
          %v1148 = vsub.s32 0, %v1147
          %v1149 = vrot.slane %v1065, %v1148
          %v1150 = vlaneseq
          %v1151 = vshrl.u32 %v1150, 7
          %v1152 = vsub.s32 0, %v1151
          %v1153 = vrot.slane %v1067, %v1152
          %v1154 = vlaneseq
          %v1155 = vshrl.u32 %v1154, 7
          %v1156 = vsub.s32 0, %v1155
          %v1157 = vrot.slane %v1069, %v1156
          %v1166 = vmul.f32 %v1129, %v1076
          %v1167 = vmul.f32 %v1133, %v1083
          %v1168 = vmul.f32 %v1137, %v1090
          %v1169 = vmul.f32 %v1141, %v1097
          %v1170 = vmul.f32 %v1145, %v1104
          %v1171 = vmul.f32 %v1149, %v1111
          %v1172 = vmul.f32 %v1153, %v1118
          %v1173 = vmul.f32 %v1157, %v1125
          %v1174 = vmul.f32 %v1005, %v896
          %v1175 = vadd.f32 %v1174, %v1166
          %v1177 = vsel %vm858, %v905, 0
          %1179 = vmatprep.subr.mxu0 0.0
          %1180 = vmatpush1.msra.mxu0 %v1175
          %1181 = vmatprep.subr.mxu0 0.0
          %1182 = vmatpush1.msra.mxu0 0.0
          %1183 = vmatprep.subr.mxu0 0.0
          %1184 = vmatpush1.msra.mxu0 0.0
          %1185 = vmatprep.subr.mxu0 0.0
          %1186 = vmatpush1.msra.mxu0 0.0
          %1187 = vmatprep.subr.mxu0 0.0
          %1188 = vmatpush1.msra.mxu0 0.0
          %1189 = vmatprep.subr.mxu0 0.0
          %1190 = vmatpush1.msra.mxu0 0.0
          %1191 = vmatprep.subr.mxu0 0.0
          %1192 = vmatpush1.msra.mxu0 0.0
          %1193 = vmatprep.subr.mxu0 0.0
          %1194 = vmatpush1.msra.mxu0 0.0
          %1195 = vmatprep.subr.mxu0 0.0
          %1196 = vmatpush1.msra.mxu0 0.0
          %1197 = vmatprep.subr.mxu0 0.0
          %1198 = vmatpush1.msra.mxu0 0.0
          %1199 = vmatprep.subr.mxu0 0.0
          %1200 = vmatpush1.msra.mxu0 0.0
          %1201 = vmatprep.subr.mxu0 0.0
          %1202 = vmatpush1.msra.mxu0 0.0
          %1203 = vmatprep.subr.mxu0 0.0
          %1204 = vmatpush1.msra.mxu0 0.0
          %1205 = vmatprep.subr.mxu0 0.0
          %1206 = vmatpush1.msra.mxu0 0.0
          %1207 = vmatprep.subr.mxu0 0.0
          %1208 = vmatpush1.msra.mxu0 0.0
          %1209 = vmatprep.subr.mxu0 0.0
          %1210 = vmatpush1.msra.mxu0 0.0
          %1211 = vmatprep.subr.mxu0 0.0
          %1212 = vmatpush1.msra.mxu0 0.0
          %1213 = vmatprep.subr.mxu0 0.0
          %1214 = vmatpush1.msra.mxu0 0.0
          %1215 = vmatprep.subr.mxu0 0.0
          %1216 = vmatpush1.msra.mxu0 0.0
          %1217 = vmatprep.subr.mxu0 0.0
          %1218 = vmatpush1.msra.mxu0 0.0
          %1219 = vmatprep.subr.mxu0 0.0
          %1220 = vmatpush1.msra.mxu0 0.0
          %1221 = vmatprep.subr.mxu0 0.0
          %1222 = vmatpush1.msra.mxu0 0.0
          %1223 = vmatprep.subr.mxu0 0.0
          %1224 = vmatpush1.msra.mxu0 0.0
          %1225 = vmatprep.subr.mxu0 0.0
          %1226 = vmatpush1.msra.mxu0 0.0
          %1227 = vmatprep.subr.mxu0 0.0
          %1228 = vmatpush1.msra.mxu0 0.0
          %1229 = vmatprep.subr.mxu0 0.0
          %1230 = vmatpush1.msra.mxu0 0.0
          %1231 = vmatprep.subr.mxu0 0.0
          %1232 = vmatpush1.msra.mxu0 0.0
          %1233 = vmatprep.subr.mxu0 0.0
          %1234 = vmatpush1.msra.mxu0 0.0
          %1235 = vmatprep.subr.mxu0 0.0
          %1236 = vmatpush1.msra.mxu0 0.0
          %1237 = vmatprep.subr.mxu0 0.0
          %1238 = vmatpush1.msra.mxu0 0.0
          %1239 = vmatprep.subr.mxu0 0.0
          %1240 = vmatpush1.msra.mxu0 0.0
          %1241 = vmatprep.subr.mxu0 0.0
          %1242 = vmatpush1.msra.mxu0 0.0
          %1243 = vmatprep.mubr.f32.mxu0 0.0
          %1244 = vmatmul.mubr.f32.gmra.mrb[0].mxu0 %v1177
          %v1245 = vpop.f32.mrb[0].mxu0
          %v1246 = vadd.f32 0.0, %v1245
          %v1247 = vpop.f32.mrb[0].mxu0
          %1248 = vdwg.mxu0
          %v1249 = vmul.f32 %v1007, %v1175
          %v1250 = vadd.f32 %v1249, %v1167
          %v1251 = vrot.slane %v905, 1
          %v1252 = vsel %vm858, %v1251, 0
          %1254 = vmatprep.subr.mxu0 0.0
          %1255 = vmatpush1.msra.mxu0 %v1250
          %1256 = vmatprep.subr.mxu0 0.0
          %1257 = vmatpush1.msra.mxu0 0.0
          %1258 = vmatprep.subr.mxu0 0.0
          %1259 = vmatpush1.msra.mxu0 0.0
          %1260 = vmatprep.subr.mxu0 0.0
          %1261 = vmatpush1.msra.mxu0 0.0
          %1262 = vmatprep.subr.mxu0 0.0
          %1263 = vmatpush1.msra.mxu0 0.0
          %1264 = vmatprep.subr.mxu0 0.0
          %1265 = vmatpush1.msra.mxu0 0.0
          %1266 = vmatprep.subr.mxu0 0.0
          %1267 = vmatpush1.msra.mxu0 0.0
          %1268 = vmatprep.subr.mxu0 0.0
          %1269 = vmatpush1.msra.mxu0 0.0
          %1270 = vmatprep.subr.mxu0 0.0
          %1271 = vmatpush1.msra.mxu0 0.0
          %1272 = vmatprep.subr.mxu0 0.0
          %1273 = vmatpush1.msra.mxu0 0.0
          %1274 = vmatprep.subr.mxu0 0.0
          %1275 = vmatpush1.msra.mxu0 0.0
          %1276 = vmatprep.subr.mxu0 0.0
          %1277 = vmatpush1.msra.mxu0 0.0
          %1278 = vmatprep.subr.mxu0 0.0
          %1279 = vmatpush1.msra.mxu0 0.0
          %1280 = vmatprep.subr.mxu0 0.0
          %1281 = vmatpush1.msra.mxu0 0.0
          %1282 = vmatprep.subr.mxu0 0.0
          %1283 = vmatpush1.msra.mxu0 0.0
          %1284 = vmatprep.subr.mxu0 0.0
          %1285 = vmatpush1.msra.mxu0 0.0
          %1286 = vmatprep.subr.mxu0 0.0
          %1287 = vmatpush1.msra.mxu0 0.0
          %1288 = vmatprep.subr.mxu0 0.0
          %1289 = vmatpush1.msra.mxu0 0.0
          %1290 = vmatprep.subr.mxu0 0.0
          %1291 = vmatpush1.msra.mxu0 0.0
          %1292 = vmatprep.subr.mxu0 0.0
          %1293 = vmatpush1.msra.mxu0 0.0
          %1294 = vmatprep.subr.mxu0 0.0
          %1295 = vmatpush1.msra.mxu0 0.0
          %1296 = vmatprep.subr.mxu0 0.0
          %1297 = vmatpush1.msra.mxu0 0.0
          %1298 = vmatprep.subr.mxu0 0.0
          %1299 = vmatpush1.msra.mxu0 0.0
          %1300 = vmatprep.subr.mxu0 0.0
          %1301 = vmatpush1.msra.mxu0 0.0
          %1302 = vmatprep.subr.mxu0 0.0
          %1303 = vmatpush1.msra.mxu0 0.0
          %1304 = vmatprep.subr.mxu0 0.0
          %1305 = vmatpush1.msra.mxu0 0.0
          %1306 = vmatprep.subr.mxu0 0.0
          %1307 = vmatpush1.msra.mxu0 0.0
          %1308 = vmatprep.subr.mxu0 0.0
          %1309 = vmatpush1.msra.mxu0 0.0
          %1310 = vmatprep.subr.mxu0 0.0
          %1311 = vmatpush1.msra.mxu0 0.0
          %1312 = vmatprep.subr.mxu0 0.0
          %1313 = vmatpush1.msra.mxu0 0.0
          %1314 = vmatprep.subr.mxu0 0.0
          %1315 = vmatpush1.msra.mxu0 0.0
          %1316 = vmatprep.subr.mxu0 0.0
          %1317 = vmatpush1.msra.mxu0 0.0
          %1318 = vmatprep.mubr.f32.mxu0 0.0
          %1319 = vmatmul.mubr.f32.gmra.mrb[0].mxu0 %v1252
          %v1320 = vpop.f32.mrb[0].mxu0
          %v1321 = vadd.f32 0.0, %v1320
          %v1322 = vpop.f32.mrb[0].mxu0
          %1323 = vdwg.mxu0
          %v1324 = vmul.f32 %v1009, %v1250
          %v1325 = vadd.f32 %v1324, %v1168
          %v1326 = vrot.slane %v905, 2
          %v1327 = vsel %vm858, %v1326, 0
          %1329 = vmatprep.subr.mxu0 0.0
          %1330 = vmatpush1.msra.mxu0 %v1325
          %1331 = vmatprep.subr.mxu0 0.0
          %1332 = vmatpush1.msra.mxu0 0.0
          %1333 = vmatprep.subr.mxu0 0.0
          %1334 = vmatpush1.msra.mxu0 0.0
          %1335 = vmatprep.subr.mxu0 0.0
          %1336 = vmatpush1.msra.mxu0 0.0
          %1337 = vmatprep.subr.mxu0 0.0
          %1338 = vmatpush1.msra.mxu0 0.0
          %1339 = vmatprep.subr.mxu0 0.0
          %1340 = vmatpush1.msra.mxu0 0.0
          %1341 = vmatprep.subr.mxu0 0.0
          %1342 = vmatpush1.msra.mxu0 0.0
          %1343 = vmatprep.subr.mxu0 0.0
          %1344 = vmatpush1.msra.mxu0 0.0
          %1345 = vmatprep.subr.mxu0 0.0
          %1346 = vmatpush1.msra.mxu0 0.0
          %1347 = vmatprep.subr.mxu0 0.0
          %1348 = vmatpush1.msra.mxu0 0.0
          %1349 = vmatprep.subr.mxu0 0.0
          %1350 = vmatpush1.msra.mxu0 0.0
          %1351 = vmatprep.subr.mxu0 0.0
          %1352 = vmatpush1.msra.mxu0 0.0
          %1353 = vmatprep.subr.mxu0 0.0
          %1354 = vmatpush1.msra.mxu0 0.0
          %1355 = vmatprep.subr.mxu0 0.0
          %1356 = vmatpush1.msra.mxu0 0.0
          %1357 = vmatprep.subr.mxu0 0.0
          %1358 = vmatpush1.msra.mxu0 0.0
          %1359 = vmatprep.subr.mxu0 0.0
          %1360 = vmatpush1.msra.mxu0 0.0
          %1361 = vmatprep.subr.mxu0 0.0
          %1362 = vmatpush1.msra.mxu0 0.0
          %1363 = vmatprep.subr.mxu0 0.0
          %1364 = vmatpush1.msra.mxu0 0.0
          %1365 = vmatprep.subr.mxu0 0.0
          %1366 = vmatpush1.msra.mxu0 0.0
          %1367 = vmatprep.subr.mxu0 0.0
          %1368 = vmatpush1.msra.mxu0 0.0
          %1369 = vmatprep.subr.mxu0 0.0
          %1370 = vmatpush1.msra.mxu0 0.0
          %1371 = vmatprep.subr.mxu0 0.0
          %1372 = vmatpush1.msra.mxu0 0.0
          %1373 = vmatprep.subr.mxu0 0.0
          %1374 = vmatpush1.msra.mxu0 0.0
          %1375 = vmatprep.subr.mxu0 0.0
          %1376 = vmatpush1.msra.mxu0 0.0
          %1377 = vmatprep.subr.mxu0 0.0
          %1378 = vmatpush1.msra.mxu0 0.0
          %1379 = vmatprep.subr.mxu0 0.0
          %1380 = vmatpush1.msra.mxu0 0.0
          %1381 = vmatprep.subr.mxu0 0.0
          %1382 = vmatpush1.msra.mxu0 0.0
          %1383 = vmatprep.subr.mxu0 0.0
          %1384 = vmatpush1.msra.mxu0 0.0
          %1385 = vmatprep.subr.mxu0 0.0
          %1386 = vmatpush1.msra.mxu0 0.0
          %1387 = vmatprep.subr.mxu0 0.0
          %1388 = vmatpush1.msra.mxu0 0.0
          %1389 = vmatprep.subr.mxu0 0.0
          %1390 = vmatpush1.msra.mxu0 0.0
          %1391 = vmatprep.subr.mxu0 0.0
          %1392 = vmatpush1.msra.mxu0 0.0
          %1393 = vmatprep.mubr.f32.mxu0 0.0
          %1394 = vmatmul.mubr.f32.gmra.mrb[0].mxu0 %v1327
          %v1395 = vpop.f32.mrb[0].mxu0
          %v1396 = vadd.f32 0.0, %v1395
          %v1397 = vpop.f32.mrb[0].mxu0
          %1398 = vdwg.mxu0
          %v1399 = vmul.f32 %v1011, %v1325
          %v1400 = vadd.f32 %v1399, %v1169
          %v1401 = vrot.slane %v905, 3
          %v1402 = vsel %vm858, %v1401, 0
          %1404 = vmatprep.subr.mxu0 0.0
          %1405 = vmatpush1.msra.mxu0 %v1400
          %1406 = vmatprep.subr.mxu0 0.0
          %1407 = vmatpush1.msra.mxu0 0.0
          %1408 = vmatprep.subr.mxu0 0.0
          %1409 = vmatpush1.msra.mxu0 0.0
          %1410 = vmatprep.subr.mxu0 0.0
          %1411 = vmatpush1.msra.mxu0 0.0
          %1412 = vmatprep.subr.mxu0 0.0
          %1413 = vmatpush1.msra.mxu0 0.0
          %1414 = vmatprep.subr.mxu0 0.0
          %1415 = vmatpush1.msra.mxu0 0.0
          %1416 = vmatprep.subr.mxu0 0.0
          %1417 = vmatpush1.msra.mxu0 0.0
          %1418 = vmatprep.subr.mxu0 0.0
          %1419 = vmatpush1.msra.mxu0 0.0
          %1420 = vmatprep.subr.mxu0 0.0
          %1421 = vmatpush1.msra.mxu0 0.0
          %1422 = vmatprep.subr.mxu0 0.0
          %1423 = vmatpush1.msra.mxu0 0.0
          %1424 = vmatprep.subr.mxu0 0.0
          %1425 = vmatpush1.msra.mxu0 0.0
          %1426 = vmatprep.subr.mxu0 0.0
          %1427 = vmatpush1.msra.mxu0 0.0
          %1428 = vmatprep.subr.mxu0 0.0
          %1429 = vmatpush1.msra.mxu0 0.0
          %1430 = vmatprep.subr.mxu0 0.0
          %1431 = vmatpush1.msra.mxu0 0.0
          %1432 = vmatprep.subr.mxu0 0.0
          %1433 = vmatpush1.msra.mxu0 0.0
          %1434 = vmatprep.subr.mxu0 0.0
          %1435 = vmatpush1.msra.mxu0 0.0
          %1436 = vmatprep.subr.mxu0 0.0
          %1437 = vmatpush1.msra.mxu0 0.0
          %1438 = vmatprep.subr.mxu0 0.0
          %1439 = vmatpush1.msra.mxu0 0.0
          %1440 = vmatprep.subr.mxu0 0.0
          %1441 = vmatpush1.msra.mxu0 0.0
          %1442 = vmatprep.subr.mxu0 0.0
          %1443 = vmatpush1.msra.mxu0 0.0
          %1444 = vmatprep.subr.mxu0 0.0
          %1445 = vmatpush1.msra.mxu0 0.0
          %1446 = vmatprep.subr.mxu0 0.0
          %1447 = vmatpush1.msra.mxu0 0.0
          %1448 = vmatprep.subr.mxu0 0.0
          %1449 = vmatpush1.msra.mxu0 0.0
          %1450 = vmatprep.subr.mxu0 0.0
          %1451 = vmatpush1.msra.mxu0 0.0
          %1452 = vmatprep.subr.mxu0 0.0
          %1453 = vmatpush1.msra.mxu0 0.0
          %1454 = vmatprep.subr.mxu0 0.0
          %1455 = vmatpush1.msra.mxu0 0.0
          %1456 = vmatprep.subr.mxu0 0.0
          %1457 = vmatpush1.msra.mxu0 0.0
          %1458 = vmatprep.subr.mxu0 0.0
          %1459 = vmatpush1.msra.mxu0 0.0
          %1460 = vmatprep.subr.mxu0 0.0
          %1461 = vmatpush1.msra.mxu0 0.0
          %1462 = vmatprep.subr.mxu0 0.0
          %1463 = vmatpush1.msra.mxu0 0.0
          %1464 = vmatprep.subr.mxu0 0.0
          %1465 = vmatpush1.msra.mxu0 0.0
          %1466 = vmatprep.subr.mxu0 0.0
          %1467 = vmatpush1.msra.mxu0 0.0
          %1468 = vmatprep.mubr.f32.mxu0 0.0
          %1469 = vmatmul.mubr.f32.gmra.mrb[0].mxu0 %v1402
          %v1470 = vpop.f32.mrb[0].mxu0
          %v1471 = vadd.f32 0.0, %v1470
          %v1472 = vpop.f32.mrb[0].mxu0
          %1473 = vdwg.mxu0
          %v1474 = vmul.f32 %v1013, %v1400
          %v1475 = vadd.f32 %v1474, %v1170
          %v1476 = vrot.slane %v905, 4
          %v1477 = vsel %vm858, %v1476, 0
          %1479 = vmatprep.subr.mxu0 0.0
          %1480 = vmatpush1.msra.mxu0 %v1475
          %1481 = vmatprep.subr.mxu0 0.0
          %1482 = vmatpush1.msra.mxu0 0.0
          %1483 = vmatprep.subr.mxu0 0.0
          %1484 = vmatpush1.msra.mxu0 0.0
          %1485 = vmatprep.subr.mxu0 0.0
          %1486 = vmatpush1.msra.mxu0 0.0
          %1487 = vmatprep.subr.mxu0 0.0
          %1488 = vmatpush1.msra.mxu0 0.0
          %1489 = vmatprep.subr.mxu0 0.0
          %1490 = vmatpush1.msra.mxu0 0.0
          %1491 = vmatprep.subr.mxu0 0.0
          %1492 = vmatpush1.msra.mxu0 0.0
          %1493 = vmatprep.subr.mxu0 0.0
          %1494 = vmatpush1.msra.mxu0 0.0
          %1495 = vmatprep.subr.mxu0 0.0
          %1496 = vmatpush1.msra.mxu0 0.0
          %1497 = vmatprep.subr.mxu0 0.0
          %1498 = vmatpush1.msra.mxu0 0.0
          %1499 = vmatprep.subr.mxu0 0.0
          %1500 = vmatpush1.msra.mxu0 0.0
          %1501 = vmatprep.subr.mxu0 0.0
          %1502 = vmatpush1.msra.mxu0 0.0
          %1503 = vmatprep.subr.mxu0 0.0
          %1504 = vmatpush1.msra.mxu0 0.0
          %1505 = vmatprep.subr.mxu0 0.0
          %1506 = vmatpush1.msra.mxu0 0.0
          %1507 = vmatprep.subr.mxu0 0.0
          %1508 = vmatpush1.msra.mxu0 0.0
          %1509 = vmatprep.subr.mxu0 0.0
          %1510 = vmatpush1.msra.mxu0 0.0
          %1511 = vmatprep.subr.mxu0 0.0
          %1512 = vmatpush1.msra.mxu0 0.0
          %1513 = vmatprep.subr.mxu0 0.0
          %1514 = vmatpush1.msra.mxu0 0.0
          %1515 = vmatprep.subr.mxu0 0.0
          %1516 = vmatpush1.msra.mxu0 0.0
          %1517 = vmatprep.subr.mxu0 0.0
          %1518 = vmatpush1.msra.mxu0 0.0
          %1519 = vmatprep.subr.mxu0 0.0
          %1520 = vmatpush1.msra.mxu0 0.0
          %1521 = vmatprep.subr.mxu0 0.0
          %1522 = vmatpush1.msra.mxu0 0.0
          %1523 = vmatprep.subr.mxu0 0.0
          %1524 = vmatpush1.msra.mxu0 0.0
          %1525 = vmatprep.subr.mxu0 0.0
          %1526 = vmatpush1.msra.mxu0 0.0
          %1527 = vmatprep.subr.mxu0 0.0
          %1528 = vmatpush1.msra.mxu0 0.0
          %1529 = vmatprep.subr.mxu0 0.0
          %1530 = vmatpush1.msra.mxu0 0.0
          %1531 = vmatprep.subr.mxu0 0.0
          %1532 = vmatpush1.msra.mxu0 0.0
          %1533 = vmatprep.subr.mxu0 0.0
          %1534 = vmatpush1.msra.mxu0 0.0
          %1535 = vmatprep.subr.mxu0 0.0
          %1536 = vmatpush1.msra.mxu0 0.0
          %1537 = vmatprep.subr.mxu0 0.0
          %1538 = vmatpush1.msra.mxu0 0.0
          %1539 = vmatprep.subr.mxu0 0.0
          %1540 = vmatpush1.msra.mxu0 0.0
          %1541 = vmatprep.subr.mxu0 0.0
          %1542 = vmatpush1.msra.mxu0 0.0
          %1543 = vmatprep.mubr.f32.mxu0 0.0
          %1544 = vmatmul.mubr.f32.gmra.mrb[0].mxu0 %v1477
          %v1545 = vpop.f32.mrb[0].mxu0
          %v1546 = vadd.f32 0.0, %v1545
          %v1547 = vpop.f32.mrb[0].mxu0
          %1548 = vdwg.mxu0
          %v1549 = vmul.f32 %v1015, %v1475
          %v1550 = vadd.f32 %v1549, %v1171
          %v1551 = vrot.slane %v905, 5
          %v1552 = vsel %vm858, %v1551, 0
          %1554 = vmatprep.subr.mxu0 0.0
          %1555 = vmatpush1.msra.mxu0 %v1550
          %1556 = vmatprep.subr.mxu0 0.0
          %1557 = vmatpush1.msra.mxu0 0.0
          %1558 = vmatprep.subr.mxu0 0.0
          %1559 = vmatpush1.msra.mxu0 0.0
          %1560 = vmatprep.subr.mxu0 0.0
          %1561 = vmatpush1.msra.mxu0 0.0
          %1562 = vmatprep.subr.mxu0 0.0
          %1563 = vmatpush1.msra.mxu0 0.0
          %1564 = vmatprep.subr.mxu0 0.0
          %1565 = vmatpush1.msra.mxu0 0.0
          %1566 = vmatprep.subr.mxu0 0.0
          %1567 = vmatpush1.msra.mxu0 0.0
          %1568 = vmatprep.subr.mxu0 0.0
          %1569 = vmatpush1.msra.mxu0 0.0
          %1570 = vmatprep.subr.mxu0 0.0
          %1571 = vmatpush1.msra.mxu0 0.0
          %1572 = vmatprep.subr.mxu0 0.0
          %1573 = vmatpush1.msra.mxu0 0.0
          %1574 = vmatprep.subr.mxu0 0.0
          %1575 = vmatpush1.msra.mxu0 0.0
          %1576 = vmatprep.subr.mxu0 0.0
          %1577 = vmatpush1.msra.mxu0 0.0
          %1578 = vmatprep.subr.mxu0 0.0
          %1579 = vmatpush1.msra.mxu0 0.0
          %1580 = vmatprep.subr.mxu0 0.0
          %1581 = vmatpush1.msra.mxu0 0.0
          %1582 = vmatprep.subr.mxu0 0.0
          %1583 = vmatpush1.msra.mxu0 0.0
          %1584 = vmatprep.subr.mxu0 0.0
          %1585 = vmatpush1.msra.mxu0 0.0
          %1586 = vmatprep.subr.mxu0 0.0
          %1587 = vmatpush1.msra.mxu0 0.0
          %1588 = vmatprep.subr.mxu0 0.0
          %1589 = vmatpush1.msra.mxu0 0.0
          %1590 = vmatprep.subr.mxu0 0.0
          %1591 = vmatpush1.msra.mxu0 0.0
          %1592 = vmatprep.subr.mxu0 0.0
          %1593 = vmatpush1.msra.mxu0 0.0
          %1594 = vmatprep.subr.mxu0 0.0
          %1595 = vmatpush1.msra.mxu0 0.0
          %1596 = vmatprep.subr.mxu0 0.0
          %1597 = vmatpush1.msra.mxu0 0.0
          %1598 = vmatprep.subr.mxu0 0.0
          %1599 = vmatpush1.msra.mxu0 0.0
          %1600 = vmatprep.subr.mxu0 0.0
          %1601 = vmatpush1.msra.mxu0 0.0
          %1602 = vmatprep.subr.mxu0 0.0
          %1603 = vmatpush1.msra.mxu0 0.0
          %1604 = vmatprep.subr.mxu0 0.0
          %1605 = vmatpush1.msra.mxu0 0.0
          %1606 = vmatprep.subr.mxu0 0.0
          %1607 = vmatpush1.msra.mxu0 0.0
          %1608 = vmatprep.subr.mxu0 0.0
          %1609 = vmatpush1.msra.mxu0 0.0
          %1610 = vmatprep.subr.mxu0 0.0
          %1611 = vmatpush1.msra.mxu0 0.0
          %1612 = vmatprep.subr.mxu0 0.0
          %1613 = vmatpush1.msra.mxu0 0.0
          %1614 = vmatprep.subr.mxu0 0.0
          %1615 = vmatpush1.msra.mxu0 0.0
          %1616 = vmatprep.subr.mxu0 0.0
          %1617 = vmatpush1.msra.mxu0 0.0
          %1618 = vmatprep.mubr.f32.mxu0 0.0
          %1619 = vmatmul.mubr.f32.gmra.mrb[0].mxu0 %v1552
          %v1620 = vpop.f32.mrb[0].mxu0
          %v1621 = vadd.f32 0.0, %v1620
          %v1622 = vpop.f32.mrb[0].mxu0
          %1623 = vdwg.mxu0
          %v1624 = vmul.f32 %v1017, %v1550
          %v1625 = vadd.f32 %v1624, %v1172
          %v1626 = vrot.slane %v905, 6
          %v1627 = vsel %vm858, %v1626, 0
          %1629 = vmatprep.subr.mxu0 0.0
          %1630 = vmatpush1.msra.mxu0 %v1625
          %1631 = vmatprep.subr.mxu0 0.0
          %1632 = vmatpush1.msra.mxu0 0.0
          %1633 = vmatprep.subr.mxu0 0.0
          %1634 = vmatpush1.msra.mxu0 0.0
          %1635 = vmatprep.subr.mxu0 0.0
          %1636 = vmatpush1.msra.mxu0 0.0
          %1637 = vmatprep.subr.mxu0 0.0
          %1638 = vmatpush1.msra.mxu0 0.0
          %1639 = vmatprep.subr.mxu0 0.0
          %1640 = vmatpush1.msra.mxu0 0.0
          %1641 = vmatprep.subr.mxu0 0.0
          %1642 = vmatpush1.msra.mxu0 0.0
          %1643 = vmatprep.subr.mxu0 0.0
          %1644 = vmatpush1.msra.mxu0 0.0
          %1645 = vmatprep.subr.mxu0 0.0
          %1646 = vmatpush1.msra.mxu0 0.0
          %1647 = vmatprep.subr.mxu0 0.0
          %1648 = vmatpush1.msra.mxu0 0.0
          %1649 = vmatprep.subr.mxu0 0.0
          %1650 = vmatpush1.msra.mxu0 0.0
          %1651 = vmatprep.subr.mxu0 0.0
          %1652 = vmatpush1.msra.mxu0 0.0
          %1653 = vmatprep.subr.mxu0 0.0
          %1654 = vmatpush1.msra.mxu0 0.0
          %1655 = vmatprep.subr.mxu0 0.0
          %1656 = vmatpush1.msra.mxu0 0.0
          %1657 = vmatprep.subr.mxu0 0.0
          %1658 = vmatpush1.msra.mxu0 0.0
          %1659 = vmatprep.subr.mxu0 0.0
          %1660 = vmatpush1.msra.mxu0 0.0
          %1661 = vmatprep.subr.mxu0 0.0
          %1662 = vmatpush1.msra.mxu0 0.0
          %1663 = vmatprep.subr.mxu0 0.0
          %1664 = vmatpush1.msra.mxu0 0.0
          %1665 = vmatprep.subr.mxu0 0.0
          %1666 = vmatpush1.msra.mxu0 0.0
          %1667 = vmatprep.subr.mxu0 0.0
          %1668 = vmatpush1.msra.mxu0 0.0
          %1669 = vmatprep.subr.mxu0 0.0
          %1670 = vmatpush1.msra.mxu0 0.0
          %1671 = vmatprep.subr.mxu0 0.0
          %1672 = vmatpush1.msra.mxu0 0.0
          %1673 = vmatprep.subr.mxu0 0.0
          %1674 = vmatpush1.msra.mxu0 0.0
          %1675 = vmatprep.subr.mxu0 0.0
          %1676 = vmatpush1.msra.mxu0 0.0
          %1677 = vmatprep.subr.mxu0 0.0
          %1678 = vmatpush1.msra.mxu0 0.0
          %1679 = vmatprep.subr.mxu0 0.0
          %1680 = vmatpush1.msra.mxu0 0.0
          %1681 = vmatprep.subr.mxu0 0.0
          %1682 = vmatpush1.msra.mxu0 0.0
          %1683 = vmatprep.subr.mxu0 0.0
          %1684 = vmatpush1.msra.mxu0 0.0
          %1685 = vmatprep.subr.mxu0 0.0
          %1686 = vmatpush1.msra.mxu0 0.0
          %1687 = vmatprep.subr.mxu0 0.0
          %1688 = vmatpush1.msra.mxu0 0.0
          %1689 = vmatprep.subr.mxu0 0.0
          %1690 = vmatpush1.msra.mxu0 0.0
          %1691 = vmatprep.subr.mxu0 0.0
          %1692 = vmatpush1.msra.mxu0 0.0
          %1693 = vmatprep.mubr.f32.mxu0 0.0
          %1694 = vmatmul.mubr.f32.gmra.mrb[0].mxu0 %v1627
          %v1695 = vpop.f32.mrb[0].mxu0
          %v1696 = vadd.f32 0.0, %v1695
          %v1697 = vpop.f32.mrb[0].mxu0
          %1698 = vdwg.mxu0
          %v1699 = vmul.f32 %v1019, %v1625
          %v1700 = vadd.f32 %v1699, %v1173
          %v1701 = vrot.slane %v905, 7
          %v1702 = vsel %vm858, %v1701, 0
          %1704 = vmatprep.subr.mxu0 0.0
          %1705 = vmatpush1.msra.mxu0 %v1700
          %1706 = vmatprep.subr.mxu0 0.0
          %1707 = vmatpush1.msra.mxu0 0.0
          %1708 = vmatprep.subr.mxu0 0.0
          %1709 = vmatpush1.msra.mxu0 0.0
          %1710 = vmatprep.subr.mxu0 0.0
          %1711 = vmatpush1.msra.mxu0 0.0
          %1712 = vmatprep.subr.mxu0 0.0
          %1713 = vmatpush1.msra.mxu0 0.0
          %1714 = vmatprep.subr.mxu0 0.0
          %1715 = vmatpush1.msra.mxu0 0.0
          %1716 = vmatprep.subr.mxu0 0.0
          %1717 = vmatpush1.msra.mxu0 0.0
          %1718 = vmatprep.subr.mxu0 0.0
          %1719 = vmatpush1.msra.mxu0 0.0
          %1720 = vmatprep.subr.mxu0 0.0
          %1721 = vmatpush1.msra.mxu0 0.0
          %1722 = vmatprep.subr.mxu0 0.0
          %1723 = vmatpush1.msra.mxu0 0.0
          %1724 = vmatprep.subr.mxu0 0.0
          %1725 = vmatpush1.msra.mxu0 0.0
          %1726 = vmatprep.subr.mxu0 0.0
          %1727 = vmatpush1.msra.mxu0 0.0
          %1728 = vmatprep.subr.mxu0 0.0
          %1729 = vmatpush1.msra.mxu0 0.0
          %1730 = vmatprep.subr.mxu0 0.0
          %1731 = vmatpush1.msra.mxu0 0.0
          %1732 = vmatprep.subr.mxu0 0.0
          %1733 = vmatpush1.msra.mxu0 0.0
          %1734 = vmatprep.subr.mxu0 0.0
          %1735 = vmatpush1.msra.mxu0 0.0
          %1736 = vmatprep.subr.mxu0 0.0
          %1737 = vmatpush1.msra.mxu0 0.0
          %1738 = vmatprep.subr.mxu0 0.0
          %1739 = vmatpush1.msra.mxu0 0.0
          %1740 = vmatprep.subr.mxu0 0.0
          %1741 = vmatpush1.msra.mxu0 0.0
          %1742 = vmatprep.subr.mxu0 0.0
          %1743 = vmatpush1.msra.mxu0 0.0
          %1744 = vmatprep.subr.mxu0 0.0
          %1745 = vmatpush1.msra.mxu0 0.0
          %1746 = vmatprep.subr.mxu0 0.0
          %1747 = vmatpush1.msra.mxu0 0.0
          %1748 = vmatprep.subr.mxu0 0.0
          %1749 = vmatpush1.msra.mxu0 0.0
          %1750 = vmatprep.subr.mxu0 0.0
          %1751 = vmatpush1.msra.mxu0 0.0
          %1752 = vmatprep.subr.mxu0 0.0
          %1753 = vmatpush1.msra.mxu0 0.0
          %1754 = vmatprep.subr.mxu0 0.0
          %1755 = vmatpush1.msra.mxu0 0.0
          %1756 = vmatprep.subr.mxu0 0.0
          %1757 = vmatpush1.msra.mxu0 0.0
          %1758 = vmatprep.subr.mxu0 0.0
          %1759 = vmatpush1.msra.mxu0 0.0
          %1760 = vmatprep.subr.mxu0 0.0
          %1761 = vmatpush1.msra.mxu0 0.0
          %1762 = vmatprep.subr.mxu0 0.0
          %1763 = vmatpush1.msra.mxu0 0.0
          %1764 = vmatprep.subr.mxu0 0.0
          %1765 = vmatpush1.msra.mxu0 0.0
          %1766 = vmatprep.subr.mxu0 0.0
          %1767 = vmatpush1.msra.mxu0 0.0
          %1768 = vmatprep.mubr.f32.mxu0 0.0
          %1769 = vmatmul.mubr.f32.gmra.mrb[0].mxu0 %v1702
          %v1770 = vpop.f32.mrb[0].mxu0
          %v1771 = vadd.f32 0.0, %v1770
          %v1772 = vpop.f32.mrb[0].mxu0
          %1773 = vdwg.mxu0
          %v1775 = vrot.slane %v1321, 7
          %v1778 = vrot.slane %v1396, 6
          %v1781 = vrot.slane %v1471, 5
          %v1784 = vrot.slane %v1546, 4
          %v1787 = vrot.slane %v1621, 3
          %v1790 = vrot.slane %v1696, 2
          %v1793 = vrot.slane %v1771, 1
          %vm1795 = vcmask 1040384
          %v1796 = vsel %vm1795, %v1246, %v1775
          %v1797 = vsel %vm872, %v1796, %v1778
          %vm1798 = vcmask 1042432
          %v1799 = vsel %vm1798, %v1797, %v1781
          %vm1800 = vcmask 1043456
          %v1801 = vsel %vm1800, %v1799, %v1784
          %vm1802 = vcmask 1044480
          %v1803 = vsel %vm1802, %v1801, %v1787
          %vm1804 = vcmask 1045504
          %v1805 = vsel %vm1804, %v1803, %v1790
          %vm1806 = vcmask 1046528
          %v1807 = vsel %vm1806, %v1805, %v1793
          %s1808 = scalar_lea.vmem [#allocation6], %s897
          %v1809 = vld [vmem:[%s1808] sm:$0xff]
          %v1810 = vlaneseq
          %v1811 = vshrl.u32 %v1810, 7
          %v1812 = vsub.s32 0, %v1811
          %v1813 = vrot.slane %v871, %v1812
          %v1814 = vmul.f32 %v1813, %v1807
          %v1815 = vadd.f32 %v1809, %v1814
          %1816 = vst [vmem:[%s1808] sm:$0xff] %v1815
        $region89: #{tpu_custom_call.1} parent=79 // loop_footer
          %s895 = sadd.s32 1, %s891
        $region90: #{tpu_custom_call.1} parent=79 // loop_footer_branch
          %890 = sbr.rel target = $region86
        $region91: #{tpu_custom_call.1} parent=79 // loop_exit
          _
        loop: start=0, step=1, limit=2
        $region92: #{tpu_custom_call.1} parent=79 // loop_pre_header
          _
        $region93: #{tpu_custom_call.1} parent=79 // loop_header
          %s1818 = sphi 0, %s1822
          %p1819 = scmp.ge.s32.totalorder %s1818, 2
          %v1823 = vphi %v896, %v2627
        $region94: #{tpu_custom_call.1} parent=79 // loop_header_branch
          %1821 = sbr.rel (%p1819) target = $region98
        $region95: #{tpu_custom_call.1} parent=79 // loop_body
          %s1824 = smul.u32 %s1818, 8
          %s1825 = scalar_lea.vmem [#allocation2], %s1824
          %v1826 = vld [vmem:[%s1825] sm:$0xff]
          %s1827 = scalar_lea.vmem [#allocation3], %s1824
          %v1828 = vld [vmem:[%s1827] sm:$0xff]
          %s1829 = scalar_lea.vmem [#allocation4], %s1824
          %v1830 = vld [vmem:[%s1829] sm:$0xff]
          %s1831 = scalar_lea.vmem [#allocation5], %s1824
          %v1832 = vld [vmem:[%s1831] sm:$0xff]
          %v1834 = vcombine.high %v1826, %v1826
          %v1836 = vunpack.c.l.s4 1966171168
          %v1837 = vunpack.c.0.s8 %v1836
          %v1838 = vlaneseq
          %v1839 = vshrl.u32 %v1838, 7
          %v1840 = vsub.s32 %v1837, %v1839
          %v1841 = vrot.slane %v1826, %v1840
          %v1843 = vunpack.c.l.s4 1966171168
          %v1844 = vunpack.c.0.s8 %v1843
          %v1845 = vlaneseq
          %v1846 = vshrl.u32 %v1845, 7
          %v1847 = vsub.s32 %v1844, %v1846
          %v1848 = vrot.slane %v1834, %v1847
          %v1849 = vcombine.high %v1841, %v1841
          %v1850 = vcombine.high %v1848, %v1848
          %v1852 = vunpack.c.l.s4 1966171168
          %v1853 = vunpack.c.0.s8 %v1852
          %v1854 = vlaneseq
          %v1855 = vshrl.u32 %v1854, 7
          %v1856 = vsub.s32 %v1853, %v1855
          %v1857 = vrot.slane %v1841, %v1856
          %v1859 = vunpack.c.l.s4 1966171168
          %v1860 = vunpack.c.0.s8 %v1859
          %v1861 = vlaneseq
          %v1862 = vshrl.u32 %v1861, 7
          %v1863 = vsub.s32 %v1860, %v1862
          %v1864 = vrot.slane %v1848, %v1863
          %v1866 = vunpack.c.l.s4 1966171168
          %v1867 = vunpack.c.0.s8 %v1866
          %v1868 = vlaneseq
          %v1869 = vshrl.u32 %v1868, 7
          %v1870 = vsub.s32 %v1867, %v1869
          %v1871 = vrot.slane %v1849, %v1870
          %v1873 = vunpack.c.l.s4 1966171168
          %v1874 = vunpack.c.0.s8 %v1873
          %v1875 = vlaneseq
          %v1876 = vshrl.u32 %v1875, 7
          %v1877 = vsub.s32 %v1874, %v1876
          %v1878 = vrot.slane %v1850, %v1877
          %v1879 = vcombine.high %v1857, %v1857
          %v1880 = vcombine.high %v1864, %v1864
          %v1881 = vcombine.high %v1871, %v1871
          %v1882 = vcombine.high %v1878, %v1878
          %v1883 = vlaneseq
          %v1884 = vshrl.u32 %v1883, 7
          %v1885 = vsub.s32 0, %v1884
          %v1886 = vrot.slane %v1857, %v1885
          %v1887 = vlaneseq
          %v1888 = vshrl.u32 %v1887, 7
          %v1889 = vsub.s32 0, %v1888
          %v1890 = vrot.slane %v1871, %v1889
          %v1891 = vlaneseq
          %v1892 = vshrl.u32 %v1891, 7
          %v1893 = vsub.s32 0, %v1892
          %v1894 = vrot.slane %v1879, %v1893
          %v1895 = vlaneseq
          %v1896 = vshrl.u32 %v1895, 7
          %v1897 = vsub.s32 0, %v1896
          %v1898 = vrot.slane %v1881, %v1897
          %v1899 = vlaneseq
          %v1900 = vshrl.u32 %v1899, 7
          %v1901 = vsub.s32 0, %v1900
          %v1902 = vrot.slane %v1864, %v1901
          %v1903 = vlaneseq
          %v1904 = vshrl.u32 %v1903, 7
          %v1905 = vsub.s32 0, %v1904
          %v1906 = vrot.slane %v1878, %v1905
          %v1907 = vlaneseq
          %v1908 = vshrl.u32 %v1907, 7
          %v1909 = vsub.s32 0, %v1908
          %v1910 = vrot.slane %v1880, %v1909
          %v1911 = vlaneseq
          %v1912 = vshrl.u32 %v1911, 7
          %v1913 = vsub.s32 0, %v1912
          %v1914 = vrot.slane %v1882, %v1913
          %v1923 = vmul.f32 %v1886, %v515
          %v1924 = vmul.f32 %v1890, %v515
          %v1925 = vmul.f32 %v1894, %v515
          %v1926 = vmul.f32 %v1898, %v515
          %v1927 = vmul.f32 %v1902, %v515
          %v1928 = vmul.f32 %v1906, %v515
          %v1929 = vmul.f32 %v1910, %v515
          %v1930 = vmul.f32 %v1914, %v515
          %v1931 = vmul.f32 %v1923, 1.442695
          %v1932 = vpow.pop %v1931
          %v1933 = vmul.f32 %v1924, 1.442695
          %v1934 = vpow.pop %v1933
          %v1935 = vmul.f32 %v1925, 1.442695
          %v1936 = vpow.pop %v1935
          %v1937 = vmul.f32 %v1926, 1.442695
          %v1938 = vpow.pop %v1937
          %v1939 = vmul.f32 %v1927, 1.442695
          %v1940 = vpow.pop %v1939
          %v1941 = vmul.f32 %v1928, 1.442695
          %v1942 = vpow.pop %v1941
          %v1943 = vmul.f32 %v1929, 1.442695
          %v1944 = vpow.pop %v1943
          %v1945 = vmul.f32 %v1930, 1.442695
          %v1946 = vpow.pop %v1945
          %v1948 = vcombine.high %v1828, %v1828
          %v1950 = vunpack.c.l.s4 1966171168
          %v1951 = vunpack.c.0.s8 %v1950
          %v1952 = vlaneseq
          %v1953 = vshrl.u32 %v1952, 7
          %v1954 = vsub.s32 %v1951, %v1953
          %v1955 = vrot.slane %v1828, %v1954
          %v1957 = vunpack.c.l.s4 1966171168
          %v1958 = vunpack.c.0.s8 %v1957
          %v1959 = vlaneseq
          %v1960 = vshrl.u32 %v1959, 7
          %v1961 = vsub.s32 %v1958, %v1960
          %v1962 = vrot.slane %v1948, %v1961
          %v1963 = vcombine.high %v1955, %v1955
          %v1964 = vcombine.high %v1962, %v1962
          %v1966 = vunpack.c.l.s4 1966171168
          %v1967 = vunpack.c.0.s8 %v1966
          %v1968 = vlaneseq
          %v1969 = vshrl.u32 %v1968, 7
          %v1970 = vsub.s32 %v1967, %v1969
          %v1971 = vrot.slane %v1955, %v1970
          %v1973 = vunpack.c.l.s4 1966171168
          %v1974 = vunpack.c.0.s8 %v1973
          %v1975 = vlaneseq
          %v1976 = vshrl.u32 %v1975, 7
          %v1977 = vsub.s32 %v1974, %v1976
          %v1978 = vrot.slane %v1962, %v1977
          %v1980 = vunpack.c.l.s4 1966171168
          %v1981 = vunpack.c.0.s8 %v1980
          %v1982 = vlaneseq
          %v1983 = vshrl.u32 %v1982, 7
          %v1984 = vsub.s32 %v1981, %v1983
          %v1985 = vrot.slane %v1963, %v1984
          %v1987 = vunpack.c.l.s4 1966171168
          %v1988 = vunpack.c.0.s8 %v1987
          %v1989 = vlaneseq
          %v1990 = vshrl.u32 %v1989, 7
          %v1991 = vsub.s32 %v1988, %v1990
          %v1992 = vrot.slane %v1964, %v1991
          %v1993 = vcombine.high %v1971, %v1971
          %v1994 = vcombine.high %v1978, %v1978
          %v1995 = vcombine.high %v1985, %v1985
          %v1996 = vcombine.high %v1992, %v1992
          %v1997 = vlaneseq
          %v1998 = vshrl.u32 %v1997, 7
          %v1999 = vsub.s32 0, %v1998
          %v2000 = vrot.slane %v1830, %v1999
          %2002 = vbcast.lane.b32.xlu0 %v2000, 256
          %v2003 = vpop.permute.xlu0 %2002
          %v2004 = vlaneseq
          %v2005 = vshrl.u32 %v2004, 7
          %v2006 = vsub.s32 1, %v2005
          %v2007 = vrot.slane %v1830, %v2006
          %2009 = vbcast.lane.b32.xlu0 %v2007, 256
          %v2010 = vpop.permute.xlu0 %2009
          %v2011 = vlaneseq
          %v2012 = vshrl.u32 %v2011, 7
          %v2013 = vsub.s32 2, %v2012
          %v2014 = vrot.slane %v1830, %v2013
          %2016 = vbcast.lane.b32.xlu0 %v2014, 256
          %v2017 = vpop.permute.xlu0 %2016
          %v2018 = vlaneseq
          %v2019 = vshrl.u32 %v2018, 7
          %v2020 = vsub.s32 3, %v2019
          %v2021 = vrot.slane %v1830, %v2020
          %2023 = vbcast.lane.b32.xlu0 %v2021, 256
          %v2024 = vpop.permute.xlu0 %2023
          %v2025 = vlaneseq
          %v2026 = vshrl.u32 %v2025, 7
          %v2027 = vsub.s32 4, %v2026
          %v2028 = vrot.slane %v1830, %v2027
          %2030 = vbcast.lane.b32.xlu0 %v2028, 256
          %v2031 = vpop.permute.xlu0 %2030
          %v2032 = vlaneseq
          %v2033 = vshrl.u32 %v2032, 7
          %v2034 = vsub.s32 5, %v2033
          %v2035 = vrot.slane %v1830, %v2034
          %2037 = vbcast.lane.b32.xlu0 %v2035, 256
          %v2038 = vpop.permute.xlu0 %2037
          %v2039 = vlaneseq
          %v2040 = vshrl.u32 %v2039, 7
          %v2041 = vsub.s32 6, %v2040
          %v2042 = vrot.slane %v1830, %v2041
          %2044 = vbcast.lane.b32.xlu0 %v2042, 256
          %v2045 = vpop.permute.xlu0 %2044
          %v2046 = vlaneseq
          %v2047 = vshrl.u32 %v2046, 7
          %v2048 = vsub.s32 7, %v2047
          %v2049 = vrot.slane %v1830, %v2048
          %2051 = vbcast.lane.b32.xlu0 %v2049, 256
          %v2052 = vpop.permute.xlu0 %2051
          %v2053 = vlaneseq
          %v2054 = vshrl.u32 %v2053, 7
          %v2055 = vsub.s32 0, %v2054
          %v2056 = vrot.slane %v1971, %v2055
          %v2057 = vlaneseq
          %v2058 = vshrl.u32 %v2057, 7
          %v2059 = vsub.s32 0, %v2058
          %v2060 = vrot.slane %v1985, %v2059
          %v2061 = vlaneseq
          %v2062 = vshrl.u32 %v2061, 7
          %v2063 = vsub.s32 0, %v2062
          %v2064 = vrot.slane %v1993, %v2063
          %v2065 = vlaneseq
          %v2066 = vshrl.u32 %v2065, 7
          %v2067 = vsub.s32 0, %v2066
          %v2068 = vrot.slane %v1995, %v2067
          %v2069 = vlaneseq
          %v2070 = vshrl.u32 %v2069, 7
          %v2071 = vsub.s32 0, %v2070
          %v2072 = vrot.slane %v1978, %v2071
          %v2073 = vlaneseq
          %v2074 = vshrl.u32 %v2073, 7
          %v2075 = vsub.s32 0, %v2074
          %v2076 = vrot.slane %v1992, %v2075
          %v2077 = vlaneseq
          %v2078 = vshrl.u32 %v2077, 7
          %v2079 = vsub.s32 0, %v2078
          %v2080 = vrot.slane %v1994, %v2079
          %v2081 = vlaneseq
          %v2082 = vshrl.u32 %v2081, 7
          %v2083 = vsub.s32 0, %v2082
          %v2084 = vrot.slane %v1996, %v2083
          %v2093 = vmul.f32 %v2056, %v2003
          %v2094 = vmul.f32 %v2060, %v2010
          %v2095 = vmul.f32 %v2064, %v2017
          %v2096 = vmul.f32 %v2068, %v2024
          %v2097 = vmul.f32 %v2072, %v2031
          %v2098 = vmul.f32 %v2076, %v2038
          %v2099 = vmul.f32 %v2080, %v2045
          %v2100 = vmul.f32 %v2084, %v2052
          %v2101 = vmul.f32 %v1932, %v1823
          %v2102 = vadd.f32 %v2101, %v2093
          %v2104 = vsel %vm858, %v1832, 0
          %2106 = vmatprep.subr.mxu0 0.0
          %2107 = vmatpush1.msra.mxu0 %v2102
          %2108 = vmatprep.subr.mxu0 0.0
          %2109 = vmatpush1.msra.mxu0 0.0
          %2110 = vmatprep.subr.mxu0 0.0
          %2111 = vmatpush1.msra.mxu0 0.0
          %2112 = vmatprep.subr.mxu0 0.0
          %2113 = vmatpush1.msra.mxu0 0.0
          %2114 = vmatprep.subr.mxu0 0.0
          %2115 = vmatpush1.msra.mxu0 0.0
          %2116 = vmatprep.subr.mxu0 0.0
          %2117 = vmatpush1.msra.mxu0 0.0
          %2118 = vmatprep.subr.mxu0 0.0
          %2119 = vmatpush1.msra.mxu0 0.0
          %2120 = vmatprep.subr.mxu0 0.0
          %2121 = vmatpush1.msra.mxu0 0.0
          %2122 = vmatprep.subr.mxu0 0.0
          %2123 = vmatpush1.msra.mxu0 0.0
          %2124 = vmatprep.subr.mxu0 0.0
          %2125 = vmatpush1.msra.mxu0 0.0
          %2126 = vmatprep.subr.mxu0 0.0
          %2127 = vmatpush1.msra.mxu0 0.0
          %2128 = vmatprep.subr.mxu0 0.0
          %2129 = vmatpush1.msra.mxu0 0.0
          %2130 = vmatprep.subr.mxu0 0.0
          %2131 = vmatpush1.msra.mxu0 0.0
          %2132 = vmatprep.subr.mxu0 0.0
          %2133 = vmatpush1.msra.mxu0 0.0
          %2134 = vmatprep.subr.mxu0 0.0
          %2135 = vmatpush1.msra.mxu0 0.0
          %2136 = vmatprep.subr.mxu0 0.0
          %2137 = vmatpush1.msra.mxu0 0.0
          %2138 = vmatprep.subr.mxu0 0.0
          %2139 = vmatpush1.msra.mxu0 0.0
          %2140 = vmatprep.subr.mxu0 0.0
          %2141 = vmatpush1.msra.mxu0 0.0
          %2142 = vmatprep.subr.mxu0 0.0
          %2143 = vmatpush1.msra.mxu0 0.0
          %2144 = vmatprep.subr.mxu0 0.0
          %2145 = vmatpush1.msra.mxu0 0.0
          %2146 = vmatprep.subr.mxu0 0.0
          %2147 = vmatpush1.msra.mxu0 0.0
          %2148 = vmatprep.subr.mxu0 0.0
          %2149 = vmatpush1.msra.mxu0 0.0
          %2150 = vmatprep.subr.mxu0 0.0
          %2151 = vmatpush1.msra.mxu0 0.0
          %2152 = vmatprep.subr.mxu0 0.0
          %2153 = vmatpush1.msra.mxu0 0.0
          %2154 = vmatprep.subr.mxu0 0.0
          %2155 = vmatpush1.msra.mxu0 0.0
          %2156 = vmatprep.subr.mxu0 0.0
          %2157 = vmatpush1.msra.mxu0 0.0
          %2158 = vmatprep.subr.mxu0 0.0
          %2159 = vmatpush1.msra.mxu0 0.0
          %2160 = vmatprep.subr.mxu0 0.0
          %2161 = vmatpush1.msra.mxu0 0.0
          %2162 = vmatprep.subr.mxu0 0.0
          %2163 = vmatpush1.msra.mxu0 0.0
          %2164 = vmatprep.subr.mxu0 0.0
          %2165 = vmatpush1.msra.mxu0 0.0
          %2166 = vmatprep.subr.mxu0 0.0
          %2167 = vmatpush1.msra.mxu0 0.0
          %2168 = vmatprep.subr.mxu0 0.0
          %2169 = vmatpush1.msra.mxu0 0.0
          %2170 = vmatprep.mubr.f32.mxu0 0.0
          %2171 = vmatmul.mubr.f32.gmra.mrb[0].mxu0 %v2104
          %v2172 = vpop.f32.mrb[0].mxu0
          %v2173 = vadd.f32 0.0, %v2172
          %v2174 = vpop.f32.mrb[0].mxu0
          %2175 = vdwg.mxu0
          %v2176 = vmul.f32 %v1934, %v2102
          %v2177 = vadd.f32 %v2176, %v2094
          %v2178 = vrot.slane %v1832, 1
          %v2179 = vsel %vm858, %v2178, 0
          %2181 = vmatprep.subr.mxu0 0.0
          %2182 = vmatpush1.msra.mxu0 %v2177
          %2183 = vmatprep.subr.mxu0 0.0
          %2184 = vmatpush1.msra.mxu0 0.0
          %2185 = vmatprep.subr.mxu0 0.0
          %2186 = vmatpush1.msra.mxu0 0.0
          %2187 = vmatprep.subr.mxu0 0.0
          %2188 = vmatpush1.msra.mxu0 0.0
          %2189 = vmatprep.subr.mxu0 0.0
          %2190 = vmatpush1.msra.mxu0 0.0
          %2191 = vmatprep.subr.mxu0 0.0
          %2192 = vmatpush1.msra.mxu0 0.0
          %2193 = vmatprep.subr.mxu0 0.0
          %2194 = vmatpush1.msra.mxu0 0.0
          %2195 = vmatprep.subr.mxu0 0.0
          %2196 = vmatpush1.msra.mxu0 0.0
          %2197 = vmatprep.subr.mxu0 0.0
          %2198 = vmatpush1.msra.mxu0 0.0
          %2199 = vmatprep.subr.mxu0 0.0
          %2200 = vmatpush1.msra.mxu0 0.0
          %2201 = vmatprep.subr.mxu0 0.0
          %2202 = vmatpush1.msra.mxu0 0.0
          %2203 = vmatprep.subr.mxu0 0.0
          %2204 = vmatpush1.msra.mxu0 0.0
          %2205 = vmatprep.subr.mxu0 0.0
          %2206 = vmatpush1.msra.mxu0 0.0
          %2207 = vmatprep.subr.mxu0 0.0
          %2208 = vmatpush1.msra.mxu0 0.0
          %2209 = vmatprep.subr.mxu0 0.0
          %2210 = vmatpush1.msra.mxu0 0.0
          %2211 = vmatprep.subr.mxu0 0.0
          %2212 = vmatpush1.msra.mxu0 0.0
          %2213 = vmatprep.subr.mxu0 0.0
          %2214 = vmatpush1.msra.mxu0 0.0
          %2215 = vmatprep.subr.mxu0 0.0
          %2216 = vmatpush1.msra.mxu0 0.0
          %2217 = vmatprep.subr.mxu0 0.0
          %2218 = vmatpush1.msra.mxu0 0.0
          %2219 = vmatprep.subr.mxu0 0.0
          %2220 = vmatpush1.msra.mxu0 0.0
          %2221 = vmatprep.subr.mxu0 0.0
          %2222 = vmatpush1.msra.mxu0 0.0
          %2223 = vmatprep.subr.mxu0 0.0
          %2224 = vmatpush1.msra.mxu0 0.0
          %2225 = vmatprep.subr.mxu0 0.0
          %2226 = vmatpush1.msra.mxu0 0.0
          %2227 = vmatprep.subr.mxu0 0.0
          %2228 = vmatpush1.msra.mxu0 0.0
          %2229 = vmatprep.subr.mxu0 0.0
          %2230 = vmatpush1.msra.mxu0 0.0
          %2231 = vmatprep.subr.mxu0 0.0
          %2232 = vmatpush1.msra.mxu0 0.0
          %2233 = vmatprep.subr.mxu0 0.0
          %2234 = vmatpush1.msra.mxu0 0.0
          %2235 = vmatprep.subr.mxu0 0.0
          %2236 = vmatpush1.msra.mxu0 0.0
          %2237 = vmatprep.subr.mxu0 0.0
          %2238 = vmatpush1.msra.mxu0 0.0
          %2239 = vmatprep.subr.mxu0 0.0
          %2240 = vmatpush1.msra.mxu0 0.0
          %2241 = vmatprep.subr.mxu0 0.0
          %2242 = vmatpush1.msra.mxu0 0.0
          %2243 = vmatprep.subr.mxu0 0.0
          %2244 = vmatpush1.msra.mxu0 0.0
          %2245 = vmatprep.mubr.f32.mxu0 0.0
          %2246 = vmatmul.mubr.f32.gmra.mrb[0].mxu0 %v2179
          %v2247 = vpop.f32.mrb[0].mxu0
          %v2248 = vadd.f32 0.0, %v2247
          %v2249 = vpop.f32.mrb[0].mxu0
          %2250 = vdwg.mxu0
          %v2251 = vmul.f32 %v1936, %v2177
          %v2252 = vadd.f32 %v2251, %v2095
          %v2253 = vrot.slane %v1832, 2
          %v2254 = vsel %vm858, %v2253, 0
          %2256 = vmatprep.subr.mxu0 0.0
          %2257 = vmatpush1.msra.mxu0 %v2252
          %2258 = vmatprep.subr.mxu0 0.0
          %2259 = vmatpush1.msra.mxu0 0.0
          %2260 = vmatprep.subr.mxu0 0.0
          %2261 = vmatpush1.msra.mxu0 0.0
          %2262 = vmatprep.subr.mxu0 0.0
          %2263 = vmatpush1.msra.mxu0 0.0
          %2264 = vmatprep.subr.mxu0 0.0
          %2265 = vmatpush1.msra.mxu0 0.0
          %2266 = vmatprep.subr.mxu0 0.0
          %2267 = vmatpush1.msra.mxu0 0.0
          %2268 = vmatprep.subr.mxu0 0.0
          %2269 = vmatpush1.msra.mxu0 0.0
          %2270 = vmatprep.subr.mxu0 0.0
          %2271 = vmatpush1.msra.mxu0 0.0
          %2272 = vmatprep.subr.mxu0 0.0
          %2273 = vmatpush1.msra.mxu0 0.0
          %2274 = vmatprep.subr.mxu0 0.0
          %2275 = vmatpush1.msra.mxu0 0.0
          %2276 = vmatprep.subr.mxu0 0.0
          %2277 = vmatpush1.msra.mxu0 0.0
          %2278 = vmatprep.subr.mxu0 0.0
          %2279 = vmatpush1.msra.mxu0 0.0
          %2280 = vmatprep.subr.mxu0 0.0
          %2281 = vmatpush1.msra.mxu0 0.0
          %2282 = vmatprep.subr.mxu0 0.0
          %2283 = vmatpush1.msra.mxu0 0.0
          %2284 = vmatprep.subr.mxu0 0.0
          %2285 = vmatpush1.msra.mxu0 0.0
          %2286 = vmatprep.subr.mxu0 0.0
          %2287 = vmatpush1.msra.mxu0 0.0
          %2288 = vmatprep.subr.mxu0 0.0
          %2289 = vmatpush1.msra.mxu0 0.0
          %2290 = vmatprep.subr.mxu0 0.0
          %2291 = vmatpush1.msra.mxu0 0.0
          %2292 = vmatprep.subr.mxu0 0.0
          %2293 = vmatpush1.msra.mxu0 0.0
          %2294 = vmatprep.subr.mxu0 0.0
          %2295 = vmatpush1.msra.mxu0 0.0
          %2296 = vmatprep.subr.mxu0 0.0
          %2297 = vmatpush1.msra.mxu0 0.0
          %2298 = vmatprep.subr.mxu0 0.0
          %2299 = vmatpush1.msra.mxu0 0.0
          %2300 = vmatprep.subr.mxu0 0.0
          %2301 = vmatpush1.msra.mxu0 0.0
          %2302 = vmatprep.subr.mxu0 0.0
          %2303 = vmatpush1.msra.mxu0 0.0
          %2304 = vmatprep.subr.mxu0 0.0
          %2305 = vmatpush1.msra.mxu0 0.0
          %2306 = vmatprep.subr.mxu0 0.0
          %2307 = vmatpush1.msra.mxu0 0.0
          %2308 = vmatprep.subr.mxu0 0.0
          %2309 = vmatpush1.msra.mxu0 0.0
          %2310 = vmatprep.subr.mxu0 0.0
          %2311 = vmatpush1.msra.mxu0 0.0
          %2312 = vmatprep.subr.mxu0 0.0
          %2313 = vmatpush1.msra.mxu0 0.0
          %2314 = vmatprep.subr.mxu0 0.0
          %2315 = vmatpush1.msra.mxu0 0.0
          %2316 = vmatprep.subr.mxu0 0.0
          %2317 = vmatpush1.msra.mxu0 0.0
          %2318 = vmatprep.subr.mxu0 0.0
          %2319 = vmatpush1.msra.mxu0 0.0
          %2320 = vmatprep.mubr.f32.mxu0 0.0
          %2321 = vmatmul.mubr.f32.gmra.mrb[0].mxu0 %v2254
          %v2322 = vpop.f32.mrb[0].mxu0
          %v2323 = vadd.f32 0.0, %v2322
          %v2324 = vpop.f32.mrb[0].mxu0
          %2325 = vdwg.mxu0
          %v2326 = vmul.f32 %v1938, %v2252
          %v2327 = vadd.f32 %v2326, %v2096
          %v2328 = vrot.slane %v1832, 3
          %v2329 = vsel %vm858, %v2328, 0
          %2331 = vmatprep.subr.mxu0 0.0
          %2332 = vmatpush1.msra.mxu0 %v2327
          %2333 = vmatprep.subr.mxu0 0.0
          %2334 = vmatpush1.msra.mxu0 0.0
          %2335 = vmatprep.subr.mxu0 0.0
          %2336 = vmatpush1.msra.mxu0 0.0
          %2337 = vmatprep.subr.mxu0 0.0
          %2338 = vmatpush1.msra.mxu0 0.0
          %2339 = vmatprep.subr.mxu0 0.0
          %2340 = vmatpush1.msra.mxu0 0.0
          %2341 = vmatprep.subr.mxu0 0.0
          %2342 = vmatpush1.msra.mxu0 0.0
          %2343 = vmatprep.subr.mxu0 0.0
          %2344 = vmatpush1.msra.mxu0 0.0
          %2345 = vmatprep.subr.mxu0 0.0
          %2346 = vmatpush1.msra.mxu0 0.0
          %2347 = vmatprep.subr.mxu0 0.0
          %2348 = vmatpush1.msra.mxu0 0.0
          %2349 = vmatprep.subr.mxu0 0.0
          %2350 = vmatpush1.msra.mxu0 0.0
          %2351 = vmatprep.subr.mxu0 0.0
          %2352 = vmatpush1.msra.mxu0 0.0
          %2353 = vmatprep.subr.mxu0 0.0
          %2354 = vmatpush1.msra.mxu0 0.0
          %2355 = vmatprep.subr.mxu0 0.0
          %2356 = vmatpush1.msra.mxu0 0.0
          %2357 = vmatprep.subr.mxu0 0.0
          %2358 = vmatpush1.msra.mxu0 0.0
          %2359 = vmatprep.subr.mxu0 0.0
          %2360 = vmatpush1.msra.mxu0 0.0
          %2361 = vmatprep.subr.mxu0 0.0
          %2362 = vmatpush1.msra.mxu0 0.0
          %2363 = vmatprep.subr.mxu0 0.0
          %2364 = vmatpush1.msra.mxu0 0.0
          %2365 = vmatprep.subr.mxu0 0.0
          %2366 = vmatpush1.msra.mxu0 0.0
          %2367 = vmatprep.subr.mxu0 0.0
          %2368 = vmatpush1.msra.mxu0 0.0
          %2369 = vmatprep.subr.mxu0 0.0
          %2370 = vmatpush1.msra.mxu0 0.0
          %2371 = vmatprep.subr.mxu0 0.0
          %2372 = vmatpush1.msra.mxu0 0.0
          %2373 = vmatprep.subr.mxu0 0.0
          %2374 = vmatpush1.msra.mxu0 0.0
          %2375 = vmatprep.subr.mxu0 0.0
          %2376 = vmatpush1.msra.mxu0 0.0
          %2377 = vmatprep.subr.mxu0 0.0
          %2378 = vmatpush1.msra.mxu0 0.0
          %2379 = vmatprep.subr.mxu0 0.0
          %2380 = vmatpush1.msra.mxu0 0.0
          %2381 = vmatprep.subr.mxu0 0.0
          %2382 = vmatpush1.msra.mxu0 0.0
          %2383 = vmatprep.subr.mxu0 0.0
          %2384 = vmatpush1.msra.mxu0 0.0
          %2385 = vmatprep.subr.mxu0 0.0
          %2386 = vmatpush1.msra.mxu0 0.0
          %2387 = vmatprep.subr.mxu0 0.0
          %2388 = vmatpush1.msra.mxu0 0.0
          %2389 = vmatprep.subr.mxu0 0.0
          %2390 = vmatpush1.msra.mxu0 0.0
          %2391 = vmatprep.subr.mxu0 0.0
          %2392 = vmatpush1.msra.mxu0 0.0
          %2393 = vmatprep.subr.mxu0 0.0
          %2394 = vmatpush1.msra.mxu0 0.0
          %2395 = vmatprep.mubr.f32.mxu0 0.0
          %2396 = vmatmul.mubr.f32.gmra.mrb[0].mxu0 %v2329
          %v2397 = vpop.f32.mrb[0].mxu0
          %v2398 = vadd.f32 0.0, %v2397
          %v2399 = vpop.f32.mrb[0].mxu0
          %2400 = vdwg.mxu0
          %v2401 = vmul.f32 %v1940, %v2327
          %v2402 = vadd.f32 %v2401, %v2097
          %v2403 = vrot.slane %v1832, 4
          %v2404 = vsel %vm858, %v2403, 0
          %2406 = vmatprep.subr.mxu0 0.0
          %2407 = vmatpush1.msra.mxu0 %v2402
          %2408 = vmatprep.subr.mxu0 0.0
          %2409 = vmatpush1.msra.mxu0 0.0
          %2410 = vmatprep.subr.mxu0 0.0
          %2411 = vmatpush1.msra.mxu0 0.0
          %2412 = vmatprep.subr.mxu0 0.0
          %2413 = vmatpush1.msra.mxu0 0.0
          %2414 = vmatprep.subr.mxu0 0.0
          %2415 = vmatpush1.msra.mxu0 0.0
          %2416 = vmatprep.subr.mxu0 0.0
          %2417 = vmatpush1.msra.mxu0 0.0
          %2418 = vmatprep.subr.mxu0 0.0
          %2419 = vmatpush1.msra.mxu0 0.0
          %2420 = vmatprep.subr.mxu0 0.0
          %2421 = vmatpush1.msra.mxu0 0.0
          %2422 = vmatprep.subr.mxu0 0.0
          %2423 = vmatpush1.msra.mxu0 0.0
          %2424 = vmatprep.subr.mxu0 0.0
          %2425 = vmatpush1.msra.mxu0 0.0
          %2426 = vmatprep.subr.mxu0 0.0
          %2427 = vmatpush1.msra.mxu0 0.0
          %2428 = vmatprep.subr.mxu0 0.0
          %2429 = vmatpush1.msra.mxu0 0.0
          %2430 = vmatprep.subr.mxu0 0.0
          %2431 = vmatpush1.msra.mxu0 0.0
          %2432 = vmatprep.subr.mxu0 0.0
          %2433 = vmatpush1.msra.mxu0 0.0
          %2434 = vmatprep.subr.mxu0 0.0
          %2435 = vmatpush1.msra.mxu0 0.0
          %2436 = vmatprep.subr.mxu0 0.0
          %2437 = vmatpush1.msra.mxu0 0.0
          %2438 = vmatprep.subr.mxu0 0.0
          %2439 = vmatpush1.msra.mxu0 0.0
          %2440 = vmatprep.subr.mxu0 0.0
          %2441 = vmatpush1.msra.mxu0 0.0
          %2442 = vmatprep.subr.mxu0 0.0
          %2443 = vmatpush1.msra.mxu0 0.0
          %2444 = vmatprep.subr.mxu0 0.0
          %2445 = vmatpush1.msra.mxu0 0.0
          %2446 = vmatprep.subr.mxu0 0.0
          %2447 = vmatpush1.msra.mxu0 0.0
          %2448 = vmatprep.subr.mxu0 0.0
          %2449 = vmatpush1.msra.mxu0 0.0
          %2450 = vmatprep.subr.mxu0 0.0
          %2451 = vmatpush1.msra.mxu0 0.0
          %2452 = vmatprep.subr.mxu0 0.0
          %2453 = vmatpush1.msra.mxu0 0.0
          %2454 = vmatprep.subr.mxu0 0.0
          %2455 = vmatpush1.msra.mxu0 0.0
          %2456 = vmatprep.subr.mxu0 0.0
          %2457 = vmatpush1.msra.mxu0 0.0
          %2458 = vmatprep.subr.mxu0 0.0
          %2459 = vmatpush1.msra.mxu0 0.0
          %2460 = vmatprep.subr.mxu0 0.0
          %2461 = vmatpush1.msra.mxu0 0.0
          %2462 = vmatprep.subr.mxu0 0.0
          %2463 = vmatpush1.msra.mxu0 0.0
          %2464 = vmatprep.subr.mxu0 0.0
          %2465 = vmatpush1.msra.mxu0 0.0
          %2466 = vmatprep.subr.mxu0 0.0
          %2467 = vmatpush1.msra.mxu0 0.0
          %2468 = vmatprep.subr.mxu0 0.0
          %2469 = vmatpush1.msra.mxu0 0.0
          %2470 = vmatprep.mubr.f32.mxu0 0.0
          %2471 = vmatmul.mubr.f32.gmra.mrb[0].mxu0 %v2404
          %v2472 = vpop.f32.mrb[0].mxu0
          %v2473 = vadd.f32 0.0, %v2472
          %v2474 = vpop.f32.mrb[0].mxu0
          %2475 = vdwg.mxu0
          %v2476 = vmul.f32 %v1942, %v2402
          %v2477 = vadd.f32 %v2476, %v2098
          %v2478 = vrot.slane %v1832, 5
          %v2479 = vsel %vm858, %v2478, 0
          %2481 = vmatprep.subr.mxu0 0.0
          %2482 = vmatpush1.msra.mxu0 %v2477
          %2483 = vmatprep.subr.mxu0 0.0
          %2484 = vmatpush1.msra.mxu0 0.0
          %2485 = vmatprep.subr.mxu0 0.0
          %2486 = vmatpush1.msra.mxu0 0.0
          %2487 = vmatprep.subr.mxu0 0.0
          %2488 = vmatpush1.msra.mxu0 0.0
          %2489 = vmatprep.subr.mxu0 0.0
          %2490 = vmatpush1.msra.mxu0 0.0
          %2491 = vmatprep.subr.mxu0 0.0
          %2492 = vmatpush1.msra.mxu0 0.0
          %2493 = vmatprep.subr.mxu0 0.0
          %2494 = vmatpush1.msra.mxu0 0.0
          %2495 = vmatprep.subr.mxu0 0.0
          %2496 = vmatpush1.msra.mxu0 0.0
          %2497 = vmatprep.subr.mxu0 0.0
          %2498 = vmatpush1.msra.mxu0 0.0
          %2499 = vmatprep.subr.mxu0 0.0
          %2500 = vmatpush1.msra.mxu0 0.0
          %2501 = vmatprep.subr.mxu0 0.0
          %2502 = vmatpush1.msra.mxu0 0.0
          %2503 = vmatprep.subr.mxu0 0.0
          %2504 = vmatpush1.msra.mxu0 0.0
          %2505 = vmatprep.subr.mxu0 0.0
          %2506 = vmatpush1.msra.mxu0 0.0
          %2507 = vmatprep.subr.mxu0 0.0
          %2508 = vmatpush1.msra.mxu0 0.0
          %2509 = vmatprep.subr.mxu0 0.0
          %2510 = vmatpush1.msra.mxu0 0.0
          %2511 = vmatprep.subr.mxu0 0.0
          %2512 = vmatpush1.msra.mxu0 0.0
          %2513 = vmatprep.subr.mxu0 0.0
          %2514 = vmatpush1.msra.mxu0 0.0
          %2515 = vmatprep.subr.mxu0 0.0
          %2516 = vmatpush1.msra.mxu0 0.0
          %2517 = vmatprep.subr.mxu0 0.0
          %2518 = vmatpush1.msra.mxu0 0.0
          %2519 = vmatprep.subr.mxu0 0.0
          %2520 = vmatpush1.msra.mxu0 0.0
          %2521 = vmatprep.subr.mxu0 0.0
          %2522 = vmatpush1.msra.mxu0 0.0
          %2523 = vmatprep.subr.mxu0 0.0
          %2524 = vmatpush1.msra.mxu0 0.0
          %2525 = vmatprep.subr.mxu0 0.0
          %2526 = vmatpush1.msra.mxu0 0.0
          %2527 = vmatprep.subr.mxu0 0.0
          %2528 = vmatpush1.msra.mxu0 0.0
          %2529 = vmatprep.subr.mxu0 0.0
          %2530 = vmatpush1.msra.mxu0 0.0
          %2531 = vmatprep.subr.mxu0 0.0
          %2532 = vmatpush1.msra.mxu0 0.0
          %2533 = vmatprep.subr.mxu0 0.0
          %2534 = vmatpush1.msra.mxu0 0.0
          %2535 = vmatprep.subr.mxu0 0.0
          %2536 = vmatpush1.msra.mxu0 0.0
          %2537 = vmatprep.subr.mxu0 0.0
          %2538 = vmatpush1.msra.mxu0 0.0
          %2539 = vmatprep.subr.mxu0 0.0
          %2540 = vmatpush1.msra.mxu0 0.0
          %2541 = vmatprep.subr.mxu0 0.0
          %2542 = vmatpush1.msra.mxu0 0.0
          %2543 = vmatprep.subr.mxu0 0.0
          %2544 = vmatpush1.msra.mxu0 0.0
          %2545 = vmatprep.mubr.f32.mxu0 0.0
          %2546 = vmatmul.mubr.f32.gmra.mrb[0].mxu0 %v2479
          %v2547 = vpop.f32.mrb[0].mxu0
          %v2548 = vadd.f32 0.0, %v2547
          %v2549 = vpop.f32.mrb[0].mxu0
          %2550 = vdwg.mxu0
          %v2551 = vmul.f32 %v1944, %v2477
          %v2552 = vadd.f32 %v2551, %v2099
          %v2553 = vrot.slane %v1832, 6
          %v2554 = vsel %vm858, %v2553, 0
          %2556 = vmatprep.subr.mxu0 0.0
          %2557 = vmatpush1.msra.mxu0 %v2552
          %2558 = vmatprep.subr.mxu0 0.0
          %2559 = vmatpush1.msra.mxu0 0.0
          %2560 = vmatprep.subr.mxu0 0.0
          %2561 = vmatpush1.msra.mxu0 0.0
          %2562 = vmatprep.subr.mxu0 0.0
          %2563 = vmatpush1.msra.mxu0 0.0
          %2564 = vmatprep.subr.mxu0 0.0
          %2565 = vmatpush1.msra.mxu0 0.0
          %2566 = vmatprep.subr.mxu0 0.0
          %2567 = vmatpush1.msra.mxu0 0.0
          %2568 = vmatprep.subr.mxu0 0.0
          %2569 = vmatpush1.msra.mxu0 0.0
          %2570 = vmatprep.subr.mxu0 0.0
          %2571 = vmatpush1.msra.mxu0 0.0
          %2572 = vmatprep.subr.mxu0 0.0
          %2573 = vmatpush1.msra.mxu0 0.0
          %2574 = vmatprep.subr.mxu0 0.0
          %2575 = vmatpush1.msra.mxu0 0.0
          %2576 = vmatprep.subr.mxu0 0.0
          %2577 = vmatpush1.msra.mxu0 0.0
          %2578 = vmatprep.subr.mxu0 0.0
          %2579 = vmatpush1.msra.mxu0 0.0
          %2580 = vmatprep.subr.mxu0 0.0
          %2581 = vmatpush1.msra.mxu0 0.0
          %2582 = vmatprep.subr.mxu0 0.0
          %2583 = vmatpush1.msra.mxu0 0.0
          %2584 = vmatprep.subr.mxu0 0.0
          %2585 = vmatpush1.msra.mxu0 0.0
          %2586 = vmatprep.subr.mxu0 0.0
          %2587 = vmatpush1.msra.mxu0 0.0
          %2588 = vmatprep.subr.mxu0 0.0
          %2589 = vmatpush1.msra.mxu0 0.0
          %2590 = vmatprep.subr.mxu0 0.0
          %2591 = vmatpush1.msra.mxu0 0.0
          %2592 = vmatprep.subr.mxu0 0.0
          %2593 = vmatpush1.msra.mxu0 0.0
          %2594 = vmatprep.subr.mxu0 0.0
          %2595 = vmatpush1.msra.mxu0 0.0
          %2596 = vmatprep.subr.mxu0 0.0
          %2597 = vmatpush1.msra.mxu0 0.0
          %2598 = vmatprep.subr.mxu0 0.0
          %2599 = vmatpush1.msra.mxu0 0.0
          %2600 = vmatprep.subr.mxu0 0.0
          %2601 = vmatpush1.msra.mxu0 0.0
          %2602 = vmatprep.subr.mxu0 0.0
          %2603 = vmatpush1.msra.mxu0 0.0
          %2604 = vmatprep.subr.mxu0 0.0
          %2605 = vmatpush1.msra.mxu0 0.0
          %2606 = vmatprep.subr.mxu0 0.0
          %2607 = vmatpush1.msra.mxu0 0.0
          %2608 = vmatprep.subr.mxu0 0.0
          %2609 = vmatpush1.msra.mxu0 0.0
          %2610 = vmatprep.subr.mxu0 0.0
          %2611 = vmatpush1.msra.mxu0 0.0
          %2612 = vmatprep.subr.mxu0 0.0
          %2613 = vmatpush1.msra.mxu0 0.0
          %2614 = vmatprep.subr.mxu0 0.0
          %2615 = vmatpush1.msra.mxu0 0.0
          %2616 = vmatprep.subr.mxu0 0.0
          %2617 = vmatpush1.msra.mxu0 0.0
          %2618 = vmatprep.subr.mxu0 0.0
          %2619 = vmatpush1.msra.mxu0 0.0
          %2620 = vmatprep.mubr.f32.mxu0 0.0
          %2621 = vmatmul.mubr.f32.gmra.mrb[0].mxu0 %v2554
          %v2622 = vpop.f32.mrb[0].mxu0
          %v2623 = vadd.f32 0.0, %v2622
          %v2624 = vpop.f32.mrb[0].mxu0
          %2625 = vdwg.mxu0
          %v2626 = vmul.f32 %v1946, %v2552
          %v2627 = vadd.f32 %v2626, %v2100
          %v2628 = vrot.slane %v1832, 7
          %v2629 = vsel %vm858, %v2628, 0
          %2631 = vmatprep.subr.mxu0 0.0
          %2632 = vmatpush1.msra.mxu0 %v2627
          %2633 = vmatprep.subr.mxu0 0.0
          %2634 = vmatpush1.msra.mxu0 0.0
          %2635 = vmatprep.subr.mxu0 0.0
          %2636 = vmatpush1.msra.mxu0 0.0
          %2637 = vmatprep.subr.mxu0 0.0
          %2638 = vmatpush1.msra.mxu0 0.0
          %2639 = vmatprep.subr.mxu0 0.0
          %2640 = vmatpush1.msra.mxu0 0.0
          %2641 = vmatprep.subr.mxu0 0.0
          %2642 = vmatpush1.msra.mxu0 0.0
          %2643 = vmatprep.subr.mxu0 0.0
          %2644 = vmatpush1.msra.mxu0 0.0
          %2645 = vmatprep.subr.mxu0 0.0
          %2646 = vmatpush1.msra.mxu0 0.0
          %2647 = vmatprep.subr.mxu0 0.0
          %2648 = vmatpush1.msra.mxu0 0.0
          %2649 = vmatprep.subr.mxu0 0.0
          %2650 = vmatpush1.msra.mxu0 0.0
          %2651 = vmatprep.subr.mxu0 0.0
          %2652 = vmatpush1.msra.mxu0 0.0
          %2653 = vmatprep.subr.mxu0 0.0
          %2654 = vmatpush1.msra.mxu0 0.0
          %2655 = vmatprep.subr.mxu0 0.0
          %2656 = vmatpush1.msra.mxu0 0.0
          %2657 = vmatprep.subr.mxu0 0.0
          %2658 = vmatpush1.msra.mxu0 0.0
          %2659 = vmatprep.subr.mxu0 0.0
          %2660 = vmatpush1.msra.mxu0 0.0
          %2661 = vmatprep.subr.mxu0 0.0
          %2662 = vmatpush1.msra.mxu0 0.0
          %2663 = vmatprep.subr.mxu0 0.0
          %2664 = vmatpush1.msra.mxu0 0.0
          %2665 = vmatprep.subr.mxu0 0.0
          %2666 = vmatpush1.msra.mxu0 0.0
          %2667 = vmatprep.subr.mxu0 0.0
          %2668 = vmatpush1.msra.mxu0 0.0
          %2669 = vmatprep.subr.mxu0 0.0
          %2670 = vmatpush1.msra.mxu0 0.0
          %2671 = vmatprep.subr.mxu0 0.0
          %2672 = vmatpush1.msra.mxu0 0.0
          %2673 = vmatprep.subr.mxu0 0.0
          %2674 = vmatpush1.msra.mxu0 0.0
          %2675 = vmatprep.subr.mxu0 0.0
          %2676 = vmatpush1.msra.mxu0 0.0
          %2677 = vmatprep.subr.mxu0 0.0
          %2678 = vmatpush1.msra.mxu0 0.0
          %2679 = vmatprep.subr.mxu0 0.0
          %2680 = vmatpush1.msra.mxu0 0.0
          %2681 = vmatprep.subr.mxu0 0.0
          %2682 = vmatpush1.msra.mxu0 0.0
          %2683 = vmatprep.subr.mxu0 0.0
          %2684 = vmatpush1.msra.mxu0 0.0
          %2685 = vmatprep.subr.mxu0 0.0
          %2686 = vmatpush1.msra.mxu0 0.0
          %2687 = vmatprep.subr.mxu0 0.0
          %2688 = vmatpush1.msra.mxu0 0.0
          %2689 = vmatprep.subr.mxu0 0.0
          %2690 = vmatpush1.msra.mxu0 0.0
          %2691 = vmatprep.subr.mxu0 0.0
          %2692 = vmatpush1.msra.mxu0 0.0
          %2693 = vmatprep.subr.mxu0 0.0
          %2694 = vmatpush1.msra.mxu0 0.0
          %2695 = vmatprep.mubr.f32.mxu0 0.0
          %2696 = vmatmul.mubr.f32.gmra.mrb[0].mxu0 %v2629
          %v2697 = vpop.f32.mrb[0].mxu0
          %v2698 = vadd.f32 0.0, %v2697
          %v2699 = vpop.f32.mrb[0].mxu0
          %2700 = vdwg.mxu0
          %v2702 = vrot.slane %v2248, 7
          %v2705 = vrot.slane %v2323, 6
          %v2708 = vrot.slane %v2398, 5
          %v2711 = vrot.slane %v2473, 4
          %v2714 = vrot.slane %v2548, 3
          %v2717 = vrot.slane %v2623, 2
          %v2720 = vrot.slane %v2698, 1
          %vm2722 = vcmask 1040384
          %v2723 = vsel %vm2722, %v2173, %v2702
          %v2724 = vsel %vm872, %v2723, %v2705
          %vm2725 = vcmask 1042432
          %v2726 = vsel %vm2725, %v2724, %v2708
          %vm2727 = vcmask 1043456
          %v2728 = vsel %vm2727, %v2726, %v2711
          %vm2729 = vcmask 1044480
          %v2730 = vsel %vm2729, %v2728, %v2714
          %vm2731 = vcmask 1045504
          %v2732 = vsel %vm2731, %v2730, %v2717
          %vm2733 = vcmask 1046528
          %v2734 = vsel %vm2733, %v2732, %v2720
          %s2735 = scalar_lea.vmem [#allocation6], %s1824
          %v2736 = vld [vmem:[%s2735] sm:$0xff]
          %v2737 = vlaneseq
          %v2738 = vshrl.u32 %v2737, 7
          %v2739 = vsub.s32 1, %v2738
          %v2740 = vrot.slane %v871, %v2739
          %v2741 = vmul.f32 %v2740, %v2734
          %v2742 = vadd.f32 %v2736, %v2741
          %2743 = vst [vmem:[%s2735] sm:$0xff] %v2742
        $region96: #{tpu_custom_call.1} parent=79 // loop_footer
          %s1822 = sadd.s32 1, %s1818
        $region97: #{tpu_custom_call.1} parent=79 // loop_footer_branch
          %1817 = sbr.rel target = $region93
        $region98: #{tpu_custom_call.1} parent=79 // loop_exit
          _
        %v2744 = vld [vmem:[#allocation6] sm:$0xff]
        %v2745 = vld [vmem:[#allocation6 + $0x8] sm:$0xff]
        %v2746 = vld [vmem:[%s11] sm:$0x1]
        %v2747 = vld [vmem:[%s12] sm:$0x1]
        %2748 = vadd.xlane.f32.xlu0 %v2744
        %v2749 = vpop.xlane.xlu0 %2748
        %2750 = vadd.xlane.f32.xlu0 %v2745
        %v2751 = vpop.xlane.xlu0 %2750
        %v2752 = vmul.f32 %v2749, %v522
        %v2753 = vmul.f32 %v2751, %v522
        %v2754 = vsub.f32 %v2744, %v2752
        %v2755 = vsub.f32 %v2745, %v2753
        %v2756 = vmul.f32 %v2754, %v2754
        %v2757 = vmul.f32 %v2755, %v2755
        %2758 = vadd.xlane.f32.xlu0 %v2756
        %v2759 = vpop.xlane.xlu0 %2758
        %2760 = vadd.xlane.f32.xlu0 %v2757
        %v2761 = vpop.xlane.xlu0 %2760
        %v2762 = vmul.f32 %v2759, %v522
        %v2763 = vmul.f32 %v2761, %v522
        %v2764 = vadd.f32 %v2762, 1e-05
        %v2765 = vadd.f32 %v2763, 1e-05
        %v2766 = vrsqrt.pop %v2764
        %v2767 = vrsqrt.pop %v2765
        %v2768 = vmul.f32 %v2754, %v2766
        %v2769 = vmul.f32 %v2755, %v2767
        %v2771 = vlaneseq
        %v2772 = vshrl.u32 %v2771, 7
        %v2773 = vsub.s32 0, %v2772
        %v2774 = vrot.slane %v2746, %v2773
        %v2776 = vmul.f32 %v2768, %v2774
        %v2777 = vmul.f32 %v2769, %v2774
        %v2779 = vlaneseq
        %v2780 = vshrl.u32 %v2779, 7
        %v2781 = vsub.s32 0, %v2780
        %v2782 = vrot.slane %v2747, %v2781
        %v2784 = vadd.f32 %v2776, %v2782
        %v2785 = vadd.f32 %v2777, %v2782
        %v2786 = vmul.f32 %v704, %v2784
        %v2787 = vmul.f32 %v705, %v2785
        %v2788 = vld [vmem:[%s13] sm:$0xff]
        %v2789 = vld [vmem:[%s13 + $0x8] sm:$0xff]
        %v2790 = vld [vmem:[%s13 + $0x10] sm:$0xff]
        %v2791 = vld [vmem:[%s13 + $0x18] sm:$0xff]
        %v2792 = vld [vmem:[%s13 + $0x20] sm:$0xff]
        %v2793 = vld [vmem:[%s13 + $0x28] sm:$0xff]
        %v2794 = vld [vmem:[%s13 + $0x30] sm:$0xff]
        %v2795 = vld [vmem:[%s13 + $0x38] sm:$0xff]
        %v2796 = vld [vmem:[%s13 + $0x40] sm:$0xff]
        %v2797 = vld [vmem:[%s13 + $0x48] sm:$0xff]
        %v2798 = vld [vmem:[%s13 + $0x50] sm:$0xff]
        %v2799 = vld [vmem:[%s13 + $0x58] sm:$0xff]
        %v2800 = vld [vmem:[%s13 + $0x60] sm:$0xff]
        %v2801 = vld [vmem:[%s13 + $0x68] sm:$0xff]
        %v2802 = vld [vmem:[%s13 + $0x70] sm:$0xff]
        %v2803 = vld [vmem:[%s13 + $0x78] sm:$0xff]
        %v2804 = vld [vmem:[%s14] sm:$0x1]
        %v2806 = vlaneseq
        %v2807 = vshrl.u32 %v2806, 7
        %v2808 = vsub.s32 0, %v2807
        %v2809 = vrot.slane %v2804, %v2808
        %2811 = vmatprep.subr.mxu0 0.0
        %2812 = vmatpush1.msra.mxu0 %v2788
        %2813 = vmatprep.subr.mxu0 0.0
        %2814 = vmatpush1.msra.mxu0 %v2789
        %2815 = vmatprep.subr.mxu0 0.0
        %2816 = vmatpush1.msra.mxu0 %v2790
        %2817 = vmatprep.subr.mxu0 0.0
        %2818 = vmatpush1.msra.mxu0 %v2791
        %2819 = vmatprep.subr.mxu0 0.0
        %2820 = vmatpush1.msra.mxu0 %v2792
        %2821 = vmatprep.subr.mxu0 0.0
        %2822 = vmatpush1.msra.mxu0 %v2793
        %2823 = vmatprep.subr.mxu0 0.0
        %2824 = vmatpush1.msra.mxu0 %v2794
        %2825 = vmatprep.subr.mxu0 0.0
        %2826 = vmatpush1.msra.mxu0 %v2795
        %2827 = vmatprep.subr.mxu0 0.0
        %2828 = vmatpush1.msra.mxu0 %v2796
        %2829 = vmatprep.subr.mxu0 0.0
        %2830 = vmatpush1.msra.mxu0 %v2797
        %2831 = vmatprep.subr.mxu0 0.0
        %2832 = vmatpush1.msra.mxu0 %v2798
        %2833 = vmatprep.subr.mxu0 0.0
        %2834 = vmatpush1.msra.mxu0 %v2799
        %2835 = vmatprep.subr.mxu0 0.0
        %2836 = vmatpush1.msra.mxu0 %v2800
        %2837 = vmatprep.subr.mxu0 0.0
        %2838 = vmatpush1.msra.mxu0 %v2801
        %2839 = vmatprep.subr.mxu0 0.0
        %2840 = vmatpush1.msra.mxu0 %v2802
        %2841 = vmatprep.subr.mxu0 0.0
        %2842 = vmatpush1.msra.mxu0 %v2803
        %2843 = vmatprep.subr.mxu0 0.0
        %2844 = vmatpush1.msra.mxu0 0.0
        %2845 = vmatprep.subr.mxu0 0.0
        %2846 = vmatpush1.msra.mxu0 0.0
        %2847 = vmatprep.subr.mxu0 0.0
        %2848 = vmatpush1.msra.mxu0 0.0
        %2849 = vmatprep.subr.mxu0 0.0
        %2850 = vmatpush1.msra.mxu0 0.0
        %2851 = vmatprep.subr.mxu0 0.0
        %2852 = vmatpush1.msra.mxu0 0.0
        %2853 = vmatprep.subr.mxu0 0.0
        %2854 = vmatpush1.msra.mxu0 0.0
        %2855 = vmatprep.subr.mxu0 0.0
        %2856 = vmatpush1.msra.mxu0 0.0
        %2857 = vmatprep.subr.mxu0 0.0
        %2858 = vmatpush1.msra.mxu0 0.0
        %2859 = vmatprep.subr.mxu0 0.0
        %2860 = vmatpush1.msra.mxu0 0.0
        %2861 = vmatprep.subr.mxu0 0.0
        %2862 = vmatpush1.msra.mxu0 0.0
        %2863 = vmatprep.subr.mxu0 0.0
        %2864 = vmatpush1.msra.mxu0 0.0
        %2865 = vmatprep.subr.mxu0 0.0
        %2866 = vmatpush1.msra.mxu0 0.0
        %2867 = vmatprep.subr.mxu0 0.0
        %2868 = vmatpush1.msra.mxu0 0.0
        %2869 = vmatprep.subr.mxu0 0.0
        %2870 = vmatpush1.msra.mxu0 0.0
        %2871 = vmatprep.subr.mxu0 0.0
        %2872 = vmatpush1.msra.mxu0 0.0
        %2873 = vmatprep.subr.mxu0 0.0
        %2874 = vmatpush1.msra.mxu0 0.0
        %2875 = vmatprep.mubr.f32.mxu0 0.0
        %2876 = vmatmul.mubr.f32.gmra.mrb[0].mxu0 %v2786
        %v2877 = vpop.f32.mrb[0].mxu0
        %v2878 = vadd.f32 %v2809, %v2877
        %v2879 = vpop.f32.mrb[0].mxu0
        %2880 = vmatprep.mubr.f32.mxu0 0.0
        %2881 = vmatmul.mubr.f32.gmra.mrb[0].mxu0 %v2787
        %v2882 = vpop.f32.mrb[0].mxu0
        %v2883 = vadd.f32 %v2809, %v2882
        %v2884 = vpop.f32.mrb[0].mxu0
        %2885 = vdwg.mxu0
        %v2886 = vld [vmem:[%s466] sm:$0xff]
        %v2887 = vld [vmem:[%s466 + $0x8] sm:$0xff]
        %v2888 = vadd.f32 %v2886, %v2878
        %v2889 = vadd.f32 %v2887, %v2883
        %2890 = vst [vmem:[%s512] sm:$0xff] %v2888
        %2891 = vst [vmem:[%s512 + $0x8] sm:$0xff] %v2889
        %s2892 = sand.u32 %s360, 1
        %s2893 = scalar_lea.sflag [#allocation9], %s2892
        %s2894 = sand.u32 %s360, 1
        %s2895 = smul.addr %s2894, 16
        %s2896 = scalar_lea.vmem [#allocation10], %s2895
        // Predicated region
        $region99: #{tpu_custom_call.1} parent=79 // pred_check
          %p2897 = pneg %p370
        $region100: #{tpu_custom_call.1} parent=79 // pred_check_branch
          %2899 = sbr.rel (%p2897) target = $region102
        $region101: #{tpu_custom_call.1} parent=79 // pred_region
          %s2901 = ssub.s32 256, 256
          %2902 = vsyncadd %s2893, %s2901
          %s2903 = smul.addr %s32, 2
          %s2904 = smul.addr %s2903, 128
          %s2905 = scalar_lea.hbm %s15, %s2904
          %s2906 = sshll.u32 %s2896, 4
          %s2907 = int_to_ptr.vmem [resolvable:$true] %s2906
          %2912 = dma.vmem_to_hbm [thread:$0]  %s2907, 256, %s2905, %s2893, 128, 128, 8
        $region102: #{tpu_custom_call.1} parent=79 // pred_fallthru
          _
      $region80: #{tpu_custom_call.1} parent=5 // pred_fallthru
        _
      %p2913 = scmp.le.s32.totalorder 2, %s27
      // Predicated region
      $region103: #{tpu_custom_call.1} parent=5 // pred_check
        %p2914 = pneg %p2913
      $region104: #{tpu_custom_call.1} parent=5 // pred_check_branch
        %2916 = sbr.rel (%p2914) target = $region106
      $region105: #{tpu_custom_call.1} parent=5 // pred_region
        %s2917 = ssub.s32 %s27, 2
        // Predicated region
        $region107: #{tpu_custom_call.1} parent=105 // pred_check
          %p2918 = pneg %p376
        $region108: #{tpu_custom_call.1} parent=105 // pred_check_branch
          %2920 = sbr.rel (%p2918) target = $region110
        $region109: #{tpu_custom_call.1} parent=105 // pred_region
          %s2921 = sand.u32 %s361, 1
          %s2922 = scalar_lea.sflag [#allocation9], %s2921
          %s2923 = sand.u32 %s361, 1
          %s2924 = smul.addr %s2923, 16
          %s2925 = scalar_lea.vmem [#allocation10], %s2924
          %2926 = dma.done %s2922, 256
        $region110: #{tpu_custom_call.1} parent=105 // pred_fallthru
          _
      $region106: #{tpu_custom_call.1} parent=5 // pred_fallthru
        _
    $region6: #{tpu_custom_call.1} parent=1 // loop_footer
      %s31 = sadd.s32 1, %s27
    $region7: #{tpu_custom_call.1} parent=1 // loop_footer_branch
      %26 = sbr.rel target = $region3
    $region8: #{tpu_custom_call.1} parent=1 // loop_exit
      _
    %2927 = vsyncpa [#allocation8], 1
    %s2928 = scalar_lea.sflag [#allocation8], 1
    %2929 = vsyncpa %s2928, 1
    %2930 = vsyncpa [#allocation9], 1
    %s2931 = scalar_lea.sflag [#allocation9], 1
    %2932 = vsyncpa %s2931, 1

</llo_original>
